<compile_context>
chip_gen: v7x
topology: tpu7x:2x2x1
jax: 0.10.0
libtpu: 0.0.40
codegen_flags: <defaults>
</compile_context>

<pallas_src>
from functools import partial

import jax
import jax.numpy as jnp
from jax.experimental import pallas as pl
from jax.experimental.pallas import tpu as pltpu

EPS = 1e-5
FEAT = 512      # backbone output features
HIDDEN = 1024   # head hidden dim
OUT = 128       # embedding dim


# ----------------------------- tile selection --------------------------------

def _pick_batch_block(batch):
    """Batch rows per grid step; must be a multiple of 8 or equal the full batch."""
    if batch % 8 == 0:
        return 8
    return batch


def _pick_spatial_tile(hw, c, bb, target_bytes=1 << 20):
    """Largest multiple-of-128 tile dividing HW with ~target_bytes x payload/step."""
    if hw % 128 != 0:
        return hw                                   # full-extent block (always legal)
    cap = (target_bytes // (bb * c * 4)) // 128 * 128
    cap = max(128, min(hw, cap))
    for t in range(cap, 0, -128):
        if hw % t == 0:
            return t
    return hw


def _pick_chunk(t):
    """In-kernel matmul chunk along T; bounds the (FEAT, TC) f32 intermediate."""
    for tc in (512, 256, 128):
        if t % tc == 0:
            return tc
    return t


# ----------------------------- backbone kernel --------------------------------

def backbone_kernel(x_ref, wc_ref, feat_ref, acc_ref, *, bb, tc, inv_hw):
    """1x1 conv (bf16 MXU) + ReLU + global-average-pool over one (Bb, C, T) tile."""
    k = pl.program_id(1)
    nc = x_ref.shape[2] // tc                       # static chunk count

    # Zero the per-batch-block accumulator at the start of its k sweep.  The
    # accumulator never carries state across batch blocks, so the batch grid
    # axis is safely "parallel" (megacore-friendly).
    @pl.when(k == 0)
    def _init():
        acc_ref[...] = jnp.zeros_like(acc_ref)

    wcv = wc_ref[...]                               # (FEAT, C) bf16, resident

    for i in range(bb):                             # static row loop over batch rows
        @pl.loop(0, nc)
        def _chunk(c, _i=i):
            off = pl.multiple_of(c * tc, tc)
            xt = x_ref[_i, :, pl.ds(off, tc)].astype(jnp.bfloat16)       # (C, TC)
            h = jnp.dot(wcv, xt, preferred_element_type=jnp.float32)     # (FEAT, TC)
            h = jnp.maximum(h, 0.0)                                       # ReLU
            acc_ref[:, _i:_i + 1] += jnp.sum(h, axis=1, keepdims=True)    # partial GAP

    # One writeback per batch block: scale by 1/HW and lay out batch-major so the
    # features intermediate is (B, FEAT) with FEAT lane-dense.
    @pl.when(k == pl.num_programs(1) - 1)
    def _finalize():
        yt = acc_ref[...].T                          # (128, FEAT) well-tiled transpose
        feat_ref[...] = yt[:bb, :] * inv_hw


# ------------------------------- heads kernel ---------------------------------

def heads_kernel(y_ref, w1_ref, g1_ref, be1_ref, w2_ref, b2_ref,
                 w3_ref, g3_ref, be3_ref, w4_ref, b4_ref, p_ref):
    """Projection + prediction heads, batch-major (lane-dense), f32 throughout."""
    y = y_ref[...]                                                        # (B, FEAT)

    # projection head: Linear(no bias) -> BN(train) -> ReLU -> Linear
    z1 = jnp.dot(y, w1_ref[...], preferred_element_type=jnp.float32)     # (B, H)
    mu1 = jnp.mean(z1, axis=0, keepdims=True)
    var1 = jnp.mean((z1 - mu1) ** 2, axis=0, keepdims=True)              # biased var
    z1 = (z1 - mu1) * jax.lax.rsqrt(var1 + EPS) * g1_ref[...] + be1_ref[...]
    z1 = jnp.maximum(z1, 0.0)
    z = jnp.dot(z1, w2_ref[...], preferred_element_type=jnp.float32) + b2_ref[...]  # (B, OUT)

    # prediction head: Linear(no bias) -> BN(train) -> ReLU -> Linear
    h3 = jnp.dot(z, w3_ref[...], preferred_element_type=jnp.float32)     # (B, H)
    mu3 = jnp.mean(h3, axis=0, keepdims=True)
    var3 = jnp.mean((h3 - mu3) ** 2, axis=0, keepdims=True)
    h3 = (h3 - mu3) * jax.lax.rsqrt(var3 + EPS) * g3_ref[...] + be3_ref[...]
    h3 = jnp.maximum(h3, 0.0)
    p = jnp.dot(h3, w4_ref[...], preferred_element_type=jnp.float32) + b4_ref[...]  # (B, OUT)

    p_ref[...] = p.astype(p_ref.dtype)


# --------------------------------- wrapper -------------------------------------

def init_params(key, c_in):
    ks = jax.random.split(key, 5)

    def lin(k, fi, fo):
        # (in_features, out_features) layout for batch-major matmuls, fan-in scaled
        return jax.random.normal(k, (fi, fo), jnp.float32) / jnp.sqrt(jnp.float32(fi))

    return dict(
        wc=jax.random.normal(ks[0], (FEAT, c_in), jnp.float32)
           / jnp.sqrt(jnp.float32(c_in)),            # backbone 1x1 conv weight (FEAT, C)
        w1=lin(ks[1], FEAT, HIDDEN),                  # proj Linear 1 (no bias, BN follows)
        g1=jnp.ones((1, HIDDEN), jnp.float32),        # proj BN gamma
        be1=jnp.zeros((1, HIDDEN), jnp.float32),      # proj BN beta
        w2=lin(ks[2], HIDDEN, OUT),                   # proj Linear 2
        b2=jnp.zeros((1, OUT), jnp.float32),
        w3=lin(ks[3], OUT, HIDDEN),                   # pred Linear 1 (no bias, BN follows)
        g3=jnp.ones((1, HIDDEN), jnp.float32),
        be3=jnp.zeros((1, HIDDEN), jnp.float32),
        w4=lin(ks[4], HIDDEN, OUT),                   # pred Linear 2
        b4=jnp.zeros((1, OUT), jnp.float32),
    )


def byol_forward(x_nchw, params):
    B, C, H, W = x_nchw.shape
    HW = H * W
    Bb = _pick_batch_block(B)
    T = _pick_spatial_tile(HW, C, Bb)
    TC = _pick_chunk(T)
    acc_cols = max(128, ((Bb + 127) // 128) * 128)    # lane-padded accumulator width

    x3 = x_nchw.reshape(B, C, HW)                     # free reshape, no transpose
    wc_bf16 = params["wc"].astype(jnp.bfloat16)       # MXU-native weight dtype (4 KiB)

    # ---- call 1: backbone (batch axis parallel, spatial axis reduced) ----------
    feats = pl.pallas_call(
        partial(backbone_kernel, bb=Bb, tc=TC, inv_hw=1.0 / HW),
        out_shape=jax.ShapeDtypeStruct((B, FEAT), jnp.float32),
        grid=(B // Bb, HW // T),
        in_specs=[
            pl.BlockSpec((Bb, C, T), lambda b, k: (b, 0, k)),   # big, lane-dense x tile
            pl.BlockSpec((FEAT, C), lambda b, k: (0, 0)),       # resident conv weight
        ],
        out_specs=pl.BlockSpec((Bb, FEAT), lambda b, k: (b, 0)),  # revisited across k
        scratch_shapes=[pltpu.VMEM((FEAT, acc_cols), jnp.float32)],
        compiler_params=pltpu.CompilerParams(
            dimension_semantics=("parallel", "arbitrary"),
            vmem_limit_bytes=48 * 1024 * 1024,
        ),
    )(x3, wc_bf16)

    # ---- call 2: projection + prediction heads (tiny, single invocation) -------
    head_inputs = [feats,
                   params["w1"], params["g1"], params["be1"],
                   params["w2"], params["b2"],
                   params["w3"], params["g3"], params["be3"],
                   params["w4"], params["b4"]]

    def _full(a):
        nd = a.ndim
        return pl.BlockSpec(a.shape, lambda i, _nd=nd: (0,) * _nd)

    p = pl.pallas_call(
        heads_kernel,
        out_shape=jax.ShapeDtypeStruct((B, OUT), jnp.float32),
        grid=(1,),
        in_specs=[_full(a) for a in head_inputs],
        out_specs=pl.BlockSpec((B, OUT), lambda i: (0, 0)),      # lane-dense output
        compiler_params=pltpu.CompilerParams(
            dimension_semantics=("arbitrary",),
            vmem_limit_bytes=32 * 1024 * 1024,
        ),
    )(*head_inputs)

    return p                                          # (B, OUT), no wrapper transpose


if __name__ == "__main__":
    key = jax.random.PRNGKey(0)
    k_x, k_p = jax.random.split(key)

    B, C, H, W = 2, 4, 16, 16
    x = jax.random.normal(k_x, (B, C, H, W), jnp.float32)
    params = init_params(k_p, c_in=C)

    p = jax.jit(byol_forward)(x, params)
    p = jax.block_until_ready(p)

    assert p.shape == (B, OUT) and p.dtype == jnp.float32
    assert bool(jnp.all(jnp.isfinite(p)))
    print("KERNEL_OK")
</pallas_src>

<mosaic_0001>
module attributes {stable_mosaic.version = 11 : i64} {
  func.func @backbone_kernel(%arg0: i32, %arg1: i32, %arg2: memref<2x4x256xf32, #tpu.memory_space<vmem>>, %arg3: memref<512x4xbf16, #tpu.memory_space<vmem>>, %arg4: memref<2x512xf32, #tpu.memory_space<vmem>>, %arg5: memref<512x128xf32, #tpu.memory_space<vmem>>) attributes {dimension_semantics = [#tpu.dimension_semantics<parallel>, #tpu.dimension_semantics<arbitrary>], iteration_bounds = array<i64: 1, 1>, scalar_prefetch = 0 : i64, scratch_operands = 1 : i64, tpu.core_type = #tpu.core_type<tc>, window_params = [{transform_indices = @transform_0, window_bounds = array<i64: 2, 4, 256>}, {pipeline_mode = #tpu.pipeline_mode<synchronous>, transform_indices = @transform_1, window_bounds = array<i64: 512, 4>}, {transform_indices = @transform_2, window_bounds = array<i64: 2, 512>}]} {
    %c0_i32 = arith.constant 0 : i32
    %0 = arith.cmpi eq, %arg1, %c0_i32 : i32
    %1 = arith.extui %0 : i1 to i32
    %c0_i32_0 = arith.constant 0 : i32
    %2 = arith.cmpi ne, %1, %c0_i32_0 : i32
    scf.if %2 {
      %cst_28 = arith.constant 0.000000e+00 : f32
      %39 = vector.broadcast %cst_28 : f32 to vector<512x128xf32>
      %c0_29 = arith.constant 0 : index
      %c0_30 = arith.constant 0 : index
      %40 = vector.load %arg5[%c0_29, %c0_30] : memref<512x128xf32, #tpu.memory_space<vmem>>, vector<512x128xf32>
      tpu.vector_store %arg5[%c0_29, %c0_30], %39 {strides = array<i32>} : memref<512x128xf32, #tpu.memory_space<vmem>>, vector<512x128xf32>,
    } else {
    }
    %c0 = arith.constant 0 : index
    %c0_1 = arith.constant 0 : index
    %3 = vector.load %arg3[%c0, %c0_1] : memref<512x4xbf16, #tpu.memory_space<vmem>>, vector<512x4xbf16>
    %c0_i32_2 = arith.constant 0 : i32
    %c1_i32 = arith.constant 1 : i32
    %4 = arith.muli %c0_i32_2, %c1_i32 : i32
    %c0_i32_3 = arith.constant 0 : i32
    %5 = arith.addi %c0_i32_3, %4 : i32
    %c256_i32 = arith.constant 256 : i32
    %6 = arith.muli %5, %c256_i32 : i32
    %7 = tpu.assume_multiple %6, 256 : i32
    %c0_4 = arith.constant 0 : index
    %c0_5 = arith.constant 0 : index
    %8 = arith.index_cast %7 : i32 to index
    %9 = vector.load %arg2[%c0_4, %c0_5, %8] : memref<2x4x256xf32, #tpu.memory_space<vmem>>, vector<1x4x256xf32>
    %10 = vector.shape_cast %9 : vector<1x4x256xf32> to vector<4x256xf32>
    %11 = arith.truncf %10 : vector<4x256xf32> to vector<4x256xbf16>
    %cst = arith.constant dense<0.000000e+00> : vector<512x256xf32>
    %12 = tpu.matmul %3, %11, %cst {dimension_numbers = #tpu.dot_dimension_numbers<[1], [0], [0], [1], [0, 0, 1, 1], [], []>} : vector<512x4xbf16>, vector<4x256xbf16>, vector<512x256xf32> -> vector<512x256xf32>
    %cst_6 = arith.constant 0.000000e+00 : f32
    %13 = vector.broadcast %cst_6 : f32 to vector<512x256xf32>
    %14 = arith.maximumf %12, %13 : vector<512x256xf32>
    %c0_7 = arith.constant 0 : index
    %c0_8 = arith.constant 0 : index
    %15 = vector.load %arg5[%c0_7, %c0_8] : memref<512x128xf32, #tpu.memory_space<vmem>>, vector<512x1xf32>
    %cst_9 = arith.constant dense<0.000000e+00> : vector<512xf32>
    %16 = vector.multi_reduction <add>, %14, %cst_9 [1] : vector<512x256xf32> to vector<512xf32>
    %17 = vector.shape_cast %16 : vector<512xf32> to vector<512x1xf32>
    %18 = arith.addf %15, %17 : vector<512x1xf32>
    %c0_10 = arith.constant 0 : index
    %c0_11 = arith.constant 0 : index
    %19 = vector.load %arg5[%c0_10, %c0_11] : memref<512x128xf32, #tpu.memory_space<vmem>>, vector<512x1xf32>
    tpu.vector_store %arg5[%c0_10, %c0_11], %18 {strides = array<i32>} : memref<512x128xf32, #tpu.memory_space<vmem>>, vector<512x1xf32>,
    %c1_i32_12 = arith.constant 1 : i32
    %c0_i32_13 = arith.constant 0 : i32
    %c1_i32_14 = arith.constant 1 : i32
    %20 = arith.muli %c0_i32_13, %c1_i32_14 : i32
    %c0_i32_15 = arith.constant 0 : i32
    %21 = arith.addi %c0_i32_15, %20 : i32
    %c256_i32_16 = arith.constant 256 : i32
    %22 = arith.muli %21, %c256_i32_16 : i32
    %23 = tpu.assume_multiple %22, 256 : i32
    %c1 = arith.constant 1 : index
    %c0_17 = arith.constant 0 : index
    %24 = arith.index_cast %23 : i32 to index
    %25 = vector.load %arg2[%c1, %c0_17, %24] : memref<2x4x256xf32, #tpu.memory_space<vmem>>, vector<1x4x256xf32>
    %26 = vector.shape_cast %25 : vector<1x4x256xf32> to vector<4x256xf32>
    %27 = arith.truncf %26 : vector<4x256xf32> to vector<4x256xbf16>
    %cst_18 = arith.constant dense<0.000000e+00> : vector<512x256xf32>
    %28 = tpu.matmul %3, %27, %cst_18 {dimension_numbers = #tpu.dot_dimension_numbers<[1], [0], [0], [1], [0, 0, 1, 1], [], []>} : vector<512x4xbf16>, vector<4x256xbf16>, vector<512x256xf32> -> vector<512x256xf32>
    %cst_19 = arith.constant 0.000000e+00 : f32
    %29 = vector.broadcast %cst_19 : f32 to vector<512x256xf32>
    %30 = arith.maximumf %28, %29 : vector<512x256xf32>
    %c0_20 = arith.constant 0 : index
    %c1_21 = arith.constant 1 : index
    %31 = vector.load %arg5[%c0_20, %c1_21] : memref<512x128xf32, #tpu.memory_space<vmem>>, vector<512x1xf32>
    %cst_22 = arith.constant dense<0.000000e+00> : vector<512xf32>
    %32 = vector.multi_reduction <add>, %30, %cst_22 [1] : vector<512x256xf32> to vector<512xf32>
    %33 = vector.shape_cast %32 : vector<512xf32> to vector<512x1xf32>
    %34 = arith.addf %31, %33 : vector<512x1xf32>
    %c0_23 = arith.constant 0 : index
    %c1_24 = arith.constant 1 : index
    %35 = vector.load %arg5[%c0_23, %c1_24] : memref<512x128xf32, #tpu.memory_space<vmem>>, vector<512x1xf32>
    tpu.vector_store %arg5[%c0_23, %c1_24], %34 {strides = array<i32>} : memref<512x128xf32, #tpu.memory_space<vmem>>, vector<512x1xf32>,
    %c1_i32_25 = arith.constant 1 : i32
    %c0_i32_26 = arith.constant 0 : i32
    %36 = arith.cmpi eq, %arg1, %c0_i32_26 : i32
    %37 = arith.extui %36 : i1 to i32
    %c0_i32_27 = arith.constant 0 : i32
    %38 = arith.cmpi ne, %37, %c0_i32_27 : i32
    scf.if %38 {
      %c0_28 = arith.constant 0 : index
      %c0_29 = arith.constant 0 : index
      %39 = vector.load %arg5[%c0_28, %c0_29] : memref<512x128xf32, #tpu.memory_space<vmem>>, vector<512x128xf32>
      %40 = tpu.transpose %39, [1, 0] : vector<512x128xf32> -> vector<128x512xf32>
      %41 = vector.extract_strided_slice %40 {offsets = [0, 0], sizes = [2, 512], strides = [1, 1]} : vector<128x512xf32> to vector<2x512xf32>
      %cst_30 = arith.constant 3.906250e-03 : f32
      %42 = vector.broadcast %cst_30 : f32 to vector<2x512xf32>
      %43 = arith.mulf %41, %42 : vector<2x512xf32>
      %c0_31 = arith.constant 0 : index
      %c0_32 = arith.constant 0 : index
      %44 = vector.load %arg4[%c0_31, %c0_32] : memref<2x512xf32, #tpu.memory_space<vmem>>, vector<2x512xf32>
      tpu.vector_store %arg4[%c0_31, %c0_32], %43 {strides = array<i32>} : memref<2x512xf32, #tpu.memory_space<vmem>>, vector<2x512xf32>,
    } else {
    }
    return
  }
  func.func @transform_0(%arg0: i32, %arg1: i32) -> (i32, i32, i32) {
    %c0_i32 = arith.constant 0 : i32
    %c0_i32_0 = arith.constant 0 : i32
    return %arg0, %c0_i32, %arg1 : i32, i32, i32
  }
  func.func @transform_1(%arg0: i32, %arg1: i32) -> (i32, i32) {
    %c0_i32 = arith.constant 0 : i32
    %c0_i32_0 = arith.constant 0 : i32
    %c0_i32_1 = arith.constant 0 : i32
    return %c0_i32, %c0_i32_0 : i32, i32
  }
  func.func @transform_2(%arg0: i32, %arg1: i32) -> (i32, i32) {
    %c0_i32 = arith.constant 0 : i32
    %c0_i32_0 = arith.constant 0 : i32
    return %arg0, %c0_i32 : i32, i32
  }
}

module attributes {stable_mosaic.version = 11 : i64} {
  func.func @heads_kernel(%arg0: i32, %arg1: memref<2x512xf32, #tpu.memory_space<vmem>>, %arg2: memref<512x1024xf32, #tpu.memory_space<vmem>>, %arg3: memref<1x1024xf32, #tpu.memory_space<vmem>>, %arg4: memref<1x1024xf32, #tpu.memory_space<vmem>>, %arg5: memref<1024x128xf32, #tpu.memory_space<vmem>>, %arg6: memref<1x128xf32, #tpu.memory_space<vmem>>, %arg7: memref<128x1024xf32, #tpu.memory_space<vmem>>, %arg8: memref<1x1024xf32, #tpu.memory_space<vmem>>, %arg9: memref<1x1024xf32, #tpu.memory_space<vmem>>, %arg10: memref<1024x128xf32, #tpu.memory_space<vmem>>, %arg11: memref<1x128xf32, #tpu.memory_space<vmem>>, %arg12: memref<2x128xf32, #tpu.memory_space<vmem>>) attributes {dimension_semantics = [#tpu.dimension_semantics<arbitrary>], iteration_bounds = array<i64: 1>, scalar_prefetch = 0 : i64, scratch_operands = 0 : i64, tpu.core_type = #tpu.core_type<tc>, window_params = [{pipeline_mode = #tpu.pipeline_mode<synchronous>, transform_indices = @transform_0, window_bounds = array<i64: 2, 512>}, {pipeline_mode = #tpu.pipeline_mode<synchronous>, transform_indices = @transform_1, window_bounds = array<i64: 512, 1024>}, {pipeline_mode = #tpu.pipeline_mode<synchronous>, transform_indices = @transform_2, window_bounds = array<i64: 1, 1024>}, {pipeline_mode = #tpu.pipeline_mode<synchronous>, transform_indices = @transform_3, window_bounds = array<i64: 1, 1024>}, {pipeline_mode = #tpu.pipeline_mode<synchronous>, transform_indices = @transform_4, window_bounds = array<i64: 1024, 128>}, {pipeline_mode = #tpu.pipeline_mode<synchronous>, transform_indices = @transform_5, window_bounds = array<i64: 1, 128>}, {pipeline_mode = #tpu.pipeline_mode<synchronous>, transform_indices = @transform_6, window_bounds = array<i64: 128, 1024>}, {pipeline_mode = #tpu.pipeline_mode<synchronous>, transform_indices = @transform_7, window_bounds = array<i64: 1, 1024>}, {pipeline_mode = #tpu.pipeline_mode<synchronous>, transform_indices = @transform_8, window_bounds = array<i64: 1, 1024>}, {pipeline_mode = #tpu.pipeline_mode<synchronous>, transform_indices = @transform_9, window_bounds = array<i64: 1024, 128>}, {pipeline_mode = #tpu.pipeline_mode<synchronous>, transform_indices = @transform_10, window_bounds = array<i64: 1, 128>}, {pipeline_mode = #tpu.pipeline_mode<synchronous>, transform_indices = @transform_11, window_bounds = array<i64: 2, 128>}]} {
    %c0 = arith.constant 0 : index
    %c0_0 = arith.constant 0 : index
    %0 = vector.load %arg1[%c0, %c0_0] : memref<2x512xf32, #tpu.memory_space<vmem>>, vector<2x512xf32>
    %c0_1 = arith.constant 0 : index
    %c0_2 = arith.constant 0 : index
    %1 = vector.load %arg2[%c0_1, %c0_2] : memref<512x1024xf32, #tpu.memory_space<vmem>>, vector<512x1024xf32>
    %cst = arith.constant dense<0.000000e+00> : vector<2x1024xf32>
    %2 = tpu.matmul %0, %1, %cst {dimension_numbers = #tpu.dot_dimension_numbers<[1], [0], [0], [1], [0, 0, 1, 1], [], []>} : vector<2x512xf32>, vector<512x1024xf32>, vector<2x1024xf32> -> vector<2x1024xf32>
    %cst_3 = arith.constant dense<0.000000e+00> : vector<1024xf32>
    %3 = vector.multi_reduction <add>, %2, %cst_3 [0] : vector<2x1024xf32> to vector<1024xf32>
    %4 = vector.shape_cast %3 : vector<1024xf32> to vector<1x1024xf32>
    %cst_4 = arith.constant 2.000000e+00 : f32
    %5 = vector.broadcast %cst_4 : f32 to vector<1x1024xf32>
    %6 = arith.divf %4, %5 : vector<1x1024xf32>
    %7 = vector.broadcast %6 : vector<1x1024xf32> to vector<2x1024xf32>
    %8 = arith.subf %2, %7 : vector<2x1024xf32>
    %9 = arith.mulf %8, %8 : vector<2x1024xf32>
    %cst_5 = arith.constant dense<0.000000e+00> : vector<1024xf32>
    %10 = vector.multi_reduction <add>, %9, %cst_5 [0] : vector<2x1024xf32> to vector<1024xf32>
    %11 = vector.shape_cast %10 : vector<1024xf32> to vector<1x1024xf32>
    %cst_6 = arith.constant 2.000000e+00 : f32
    %12 = vector.broadcast %cst_6 : f32 to vector<1x1024xf32>
    %13 = arith.divf %11, %12 : vector<1x1024xf32>
    %14 = vector.broadcast %6 : vector<1x1024xf32> to vector<2x1024xf32>
    %15 = arith.subf %2, %14 : vector<2x1024xf32>
    %cst_7 = arith.constant 9.99999974E-6 : f32
    %16 = vector.broadcast %cst_7 : f32 to vector<1x1024xf32>
    %17 = arith.addf %13, %16 : vector<1x1024xf32>
    %18 = math.rsqrt %17 : vector<1x1024xf32>
    %19 = vector.broadcast %18 : vector<1x1024xf32> to vector<2x1024xf32>
    %20 = arith.mulf %15, %19 : vector<2x1024xf32>
    %c0_8 = arith.constant 0 : index
    %c0_9 = arith.constant 0 : index
    %21 = vector.load %arg3[%c0_8, %c0_9] : memref<1x1024xf32, #tpu.memory_space<vmem>>, vector<1x1024xf32>
    %22 = vector.broadcast %21 : vector<1x1024xf32> to vector<2x1024xf32>
    %23 = arith.mulf %20, %22 : vector<2x1024xf32>
    %c0_10 = arith.constant 0 : index
    %c0_11 = arith.constant 0 : index
    %24 = vector.load %arg4[%c0_10, %c0_11] : memref<1x1024xf32, #tpu.memory_space<vmem>>, vector<1x1024xf32>
    %25 = vector.broadcast %24 : vector<1x1024xf32> to vector<2x1024xf32>
    %26 = arith.addf %23, %25 : vector<2x1024xf32>
    %cst_12 = arith.constant 0.000000e+00 : f32
    %27 = vector.broadcast %cst_12 : f32 to vector<2x1024xf32>
    %28 = arith.maximumf %26, %27 : vector<2x1024xf32>
    %c0_13 = arith.constant 0 : index
    %c0_14 = arith.constant 0 : index
    %29 = vector.load %arg5[%c0_13, %c0_14] : memref<1024x128xf32, #tpu.memory_space<vmem>>, vector<1024x128xf32>
    %cst_15 = arith.constant dense<0.000000e+00> : vector<2x128xf32>
    %30 = tpu.matmul %28, %29, %cst_15 {dimension_numbers = #tpu.dot_dimension_numbers<[1], [0], [0], [1], [0, 0, 1, 1], [], []>} : vector<2x1024xf32>, vector<1024x128xf32>, vector<2x128xf32> -> vector<2x128xf32>
    %c0_16 = arith.constant 0 : index
    %c0_17 = arith.constant 0 : index
    %31 = vector.load %arg6[%c0_16, %c0_17] : memref<1x128xf32, #tpu.memory_space<vmem>>, vector<1x128xf32>
    %32 = vector.broadcast %31 : vector<1x128xf32> to vector<2x128xf32>
    %33 = arith.addf %30, %32 : vector<2x128xf32>
    %c0_18 = arith.constant 0 : index
    %c0_19 = arith.constant 0 : index
    %34 = vector.load %arg7[%c0_18, %c0_19] : memref<128x1024xf32, #tpu.memory_space<vmem>>, vector<128x1024xf32>
    %cst_20 = arith.constant dense<0.000000e+00> : vector<2x1024xf32>
    %35 = tpu.matmul %33, %34, %cst_20 {dimension_numbers = #tpu.dot_dimension_numbers<[1], [0], [0], [1], [0, 0, 1, 1], [], []>} : vector<2x128xf32>, vector<128x1024xf32>, vector<2x1024xf32> -> vector<2x1024xf32>
    %cst_21 = arith.constant dense<0.000000e+00> : vector<1024xf32>
    %36 = vector.multi_reduction <add>, %35, %cst_21 [0] : vector<2x1024xf32> to vector<1024xf32>
    %37 = vector.shape_cast %36 : vector<1024xf32> to vector<1x1024xf32>
    %cst_22 = arith.constant 2.000000e+00 : f32
    %38 = vector.broadcast %cst_22 : f32 to vector<1x1024xf32>
    %39 = arith.divf %37, %38 : vector<1x1024xf32>
    %40 = vector.broadcast %39 : vector<1x1024xf32> to vector<2x1024xf32>
    %41 = arith.subf %35, %40 : vector<2x1024xf32>
    %42 = arith.mulf %41, %41 : vector<2x1024xf32>
    %cst_23 = arith.constant dense<0.000000e+00> : vector<1024xf32>
    %43 = vector.multi_reduction <add>, %42, %cst_23 [0] : vector<2x1024xf32> to vector<1024xf32>
    %44 = vector.shape_cast %43 : vector<1024xf32> to vector<1x1024xf32>
    %cst_24 = arith.constant 2.000000e+00 : f32
    %45 = vector.broadcast %cst_24 : f32 to vector<1x1024xf32>
    %46 = arith.divf %44, %45 : vector<1x1024xf32>
    %47 = vector.broadcast %39 : vector<1x1024xf32> to vector<2x1024xf32>
    %48 = arith.subf %35, %47 : vector<2x1024xf32>
    %cst_25 = arith.constant 9.99999974E-6 : f32
    %49 = vector.broadcast %cst_25 : f32 to vector<1x1024xf32>
    %50 = arith.addf %46, %49 : vector<1x1024xf32>
    %51 = math.rsqrt %50 : vector<1x1024xf32>
    %52 = vector.broadcast %51 : vector<1x1024xf32> to vector<2x1024xf32>
    %53 = arith.mulf %48, %52 : vector<2x1024xf32>
    %c0_26 = arith.constant 0 : index
    %c0_27 = arith.constant 0 : index
    %54 = vector.load %arg8[%c0_26, %c0_27] : memref<1x1024xf32, #tpu.memory_space<vmem>>, vector<1x1024xf32>
    %55 = vector.broadcast %54 : vector<1x1024xf32> to vector<2x1024xf32>
    %56 = arith.mulf %53, %55 : vector<2x1024xf32>
    %c0_28 = arith.constant 0 : index
    %c0_29 = arith.constant 0 : index
    %57 = vector.load %arg9[%c0_28, %c0_29] : memref<1x1024xf32, #tpu.memory_space<vmem>>, vector<1x1024xf32>
    %58 = vector.broadcast %57 : vector<1x1024xf32> to vector<2x1024xf32>
    %59 = arith.addf %56, %58 : vector<2x1024xf32>
    %cst_30 = arith.constant 0.000000e+00 : f32
    %60 = vector.broadcast %cst_30 : f32 to vector<2x1024xf32>
    %61 = arith.maximumf %59, %60 : vector<2x1024xf32>
    %c0_31 = arith.constant 0 : index
    %c0_32 = arith.constant 0 : index
    %62 = vector.load %arg10[%c0_31, %c0_32] : memref<1024x128xf32, #tpu.memory_space<vmem>>, vector<1024x128xf32>
    %cst_33 = arith.constant dense<0.000000e+00> : vector<2x128xf32>
    %63 = tpu.matmul %61, %62, %cst_33 {dimension_numbers = #tpu.dot_dimension_numbers<[1], [0], [0], [1], [0, 0, 1, 1], [], []>} : vector<2x1024xf32>, vector<1024x128xf32>, vector<2x128xf32> -> vector<2x128xf32>
    %c0_34 = arith.constant 0 : index
    %c0_35 = arith.constant 0 : index
    %64 = vector.load %arg11[%c0_34, %c0_35] : memref<1x128xf32, #tpu.memory_space<vmem>>, vector<1x128xf32>
    %65 = vector.broadcast %64 : vector<1x128xf32> to vector<2x128xf32>
    %66 = arith.addf %63, %65 : vector<2x128xf32>
    %c0_36 = arith.constant 0 : index
    %c0_37 = arith.constant 0 : index
    %67 = vector.load %arg12[%c0_36, %c0_37] : memref<2x128xf32, #tpu.memory_space<vmem>>, vector<2x128xf32>
    tpu.vector_store %arg12[%c0_36, %c0_37], %66 {strides = array<i32>} : memref<2x128xf32, #tpu.memory_space<vmem>>, vector<2x128xf32>,
    return
  }
  func.func @transform_0(%arg0: i32) -> (i32, i32) {
    %c0_i32 = arith.constant 0 : i32
    %c0_i32_0 = arith.constant 0 : i32
    %c0_i32_1 = arith.constant 0 : i32
    return %c0_i32, %c0_i32_0 : i32, i32
  }
  func.func @transform_1(%arg0: i32) -> (i32, i32) {
    %c0_i32 = arith.constant 0 : i32
    %c0_i32_0 = arith.constant 0 : i32
    %c0_i32_1 = arith.constant 0 : i32
    return %c0_i32, %c0_i32_0 : i32, i32
  }
  func.func @transform_2(%arg0: i32) -> (i32, i32) {
    %c0_i32 = arith.constant 0 : i32
    %c0_i32_0 = arith.constant 0 : i32
    %c0_i32_1 = arith.constant 0 : i32
    return %c0_i32, %c0_i32_0 : i32, i32
  }
  func.func @transform_3(%arg0: i32) -> (i32, i32) {
    %c0_i32 = arith.constant 0 : i32
    %c0_i32_0 = arith.constant 0 : i32
    %c0_i32_1 = arith.constant 0 : i32
    return %c0_i32, %c0_i32_0 : i32, i32
  }
  func.func @transform_4(%arg0: i32) -> (i32, i32) {
    %c0_i32 = arith.constant 0 : i32
    %c0_i32_0 = arith.constant 0 : i32
    %c0_i32_1 = arith.constant 0 : i32
    return %c0_i32, %c0_i32_0 : i32, i32
  }
  func.func @transform_5(%arg0: i32) -> (i32, i32) {
    %c0_i32 = arith.constant 0 : i32
    %c0_i32_0 = arith.constant 0 : i32
    %c0_i32_1 = arith.constant 0 : i32
    return %c0_i32, %c0_i32_0 : i32, i32
  }
  func.func @transform_6(%arg0: i32) -> (i32, i32) {
    %c0_i32 = arith.constant 0 : i32
    %c0_i32_0 = arith.constant 0 : i32
    %c0_i32_1 = arith.constant 0 : i32
    return %c0_i32, %c0_i32_0 : i32, i32
  }
  func.func @transform_7(%arg0: i32) -> (i32, i32) {
    %c0_i32 = arith.constant 0 : i32
    %c0_i32_0 = arith.constant 0 : i32
    %c0_i32_1 = arith.constant 0 : i32
    return %c0_i32, %c0_i32_0 : i32, i32
  }
  func.func @transform_8(%arg0: i32) -> (i32, i32) {
    %c0_i32 = arith.constant 0 : i32
    %c0_i32_0 = arith.constant 0 : i32
    %c0_i32_1 = arith.constant 0 : i32
    return %c0_i32, %c0_i32_0 : i32, i32
  }
  func.func @transform_9(%arg0: i32) -> (i32, i32) {
    %c0_i32 = arith.constant 0 : i32
    %c0_i32_0 = arith.constant 0 : i32
    %c0_i32_1 = arith.constant 0 : i32
    return %c0_i32, %c0_i32_0 : i32, i32
  }
  func.func @transform_10(%arg0: i32) -> (i32, i32) {
    %c0_i32 = arith.constant 0 : i32
    %c0_i32_0 = arith.constant 0 : i32
    %c0_i32_1 = arith.constant 0 : i32
    return %c0_i32, %c0_i32_0 : i32, i32
  }
  func.func @transform_11(%arg0: i32) -> (i32, i32) {
    %c0_i32 = arith.constant 0 : i32
    %c0_i32_0 = arith.constant 0 : i32
    %c0_i32_1 = arith.constant 0 : i32
    return %c0_i32, %c0_i32_0 : i32, i32
  }
}

</mosaic_0001>

<llo_original>
// kernel: byol_forward.2
$region0: #{byol_forward.2}
  #allocation0 [shape = 'u32[]', space=smem, size = 0x4, offset = 0x4, fixed_abs, tag = 'smem constant byte address 0x4 - core index']
  #allocation1 [shape = 'u32[144,128]{1,0:T(1,128)}', space=vmem, size = 0x12000, scoped, tag = 'internal scratch']
  #allocation2 [shape = 'f32[512,128]{1,0:T(8,128)}', space=vmem, size = 0x40000, scoped, tag = 'scratch operand']
  %s0 = inlined_call_operand.vmem [shape: f32[2,4,256], index: 0, kind: input, shape index: {}]
  %s1 = inlined_call_operand.vmem [shape: bf16[512,4], index: 1, kind: input, shape index: {}]
  %s2 = inlined_call_operand.vmem [shape: f32[2,512], index: 2, kind: output, shape index: {}]
  %s3 = sld [smem:[#allocation0]]
  $region26: #{byol_forward.2} parent=0
    _
  %s5 = ssub.s32 1, %s3
  %s6 = scalar_select 0, %s5, %s3
  // Predicated region
  $region2: #{byol_forward.2} parent=0 // pred_check
    _
  $region3: #{byol_forward.2} parent=0 // pred_check_branch
    %8 = sbr.rel (0) target = $region5
  $region4: #{byol_forward.2} parent=0 // pred_region
    _
  $region5: #{byol_forward.2} parent=0 // pred_fallthru
    _
  // Predicated region
  $region6: #{byol_forward.2} parent=0 // pred_check
    _
  $region7: #{byol_forward.2} parent=0 // pred_check_branch
    %10 = sbr.rel (0) target = $region9
  $region8: #{byol_forward.2} parent=0 // pred_region
    _
  $region9: #{byol_forward.2} parent=0 // pred_fallthru
    _
  %p12 = scmp.eq.s32.totalorder 0, 0
  // Predicated region
  $region10: #{byol_forward.2} parent=0 // pred_check
    %p13 = pneg %p12
  $region11: #{byol_forward.2} parent=0 // pred_check_branch
    %15 = sbr.rel (%p13) target = $region13
  $region12: #{byol_forward.2} parent=0 // pred_region
    %16 = vst [vmem:[#allocation2] sm:$0xff] 0.0
    %17 = vst [vmem:[#allocation2 + $0x8] sm:$0xff] 0.0
    %18 = vst [vmem:[#allocation2 + $0x10] sm:$0xff] 0.0
    %19 = vst [vmem:[#allocation2 + $0x18] sm:$0xff] 0.0
    %20 = vst [vmem:[#allocation2 + $0x20] sm:$0xff] 0.0
    %21 = vst [vmem:[#allocation2 + $0x28] sm:$0xff] 0.0
    %22 = vst [vmem:[#allocation2 + $0x30] sm:$0xff] 0.0
    %23 = vst [vmem:[#allocation2 + $0x38] sm:$0xff] 0.0
    %24 = vst [vmem:[#allocation2 + $0x40] sm:$0xff] 0.0
    %25 = vst [vmem:[#allocation2 + $0x48] sm:$0xff] 0.0
    %26 = vst [vmem:[#allocation2 + $0x50] sm:$0xff] 0.0
    %27 = vst [vmem:[#allocation2 + $0x58] sm:$0xff] 0.0
    %28 = vst [vmem:[#allocation2 + $0x60] sm:$0xff] 0.0
    %29 = vst [vmem:[#allocation2 + $0x68] sm:$0xff] 0.0
    %30 = vst [vmem:[#allocation2 + $0x70] sm:$0xff] 0.0
    %31 = vst [vmem:[#allocation2 + $0x78] sm:$0xff] 0.0
    %32 = vst [vmem:[#allocation2 + $0x80] sm:$0xff] 0.0
    %33 = vst [vmem:[#allocation2 + $0x88] sm:$0xff] 0.0
    %34 = vst [vmem:[#allocation2 + $0x90] sm:$0xff] 0.0
    %35 = vst [vmem:[#allocation2 + $0x98] sm:$0xff] 0.0
    %36 = vst [vmem:[#allocation2 + $0xa0] sm:$0xff] 0.0
    %37 = vst [vmem:[#allocation2 + $0xa8] sm:$0xff] 0.0
    %38 = vst [vmem:[#allocation2 + $0xb0] sm:$0xff] 0.0
    %39 = vst [vmem:[#allocation2 + $0xb8] sm:$0xff] 0.0
    %40 = vst [vmem:[#allocation2 + $0xc0] sm:$0xff] 0.0
    %41 = vst [vmem:[#allocation2 + $0xc8] sm:$0xff] 0.0
    %42 = vst [vmem:[#allocation2 + $0xd0] sm:$0xff] 0.0
    %43 = vst [vmem:[#allocation2 + $0xd8] sm:$0xff] 0.0
    %44 = vst [vmem:[#allocation2 + $0xe0] sm:$0xff] 0.0
    %45 = vst [vmem:[#allocation2 + $0xe8] sm:$0xff] 0.0
    %46 = vst [vmem:[#allocation2 + $0xf0] sm:$0xff] 0.0
    %47 = vst [vmem:[#allocation2 + $0xf8] sm:$0xff] 0.0
    %48 = vst [vmem:[#allocation2 + $0x100] sm:$0xff] 0.0
    %49 = vst [vmem:[#allocation2 + $0x108] sm:$0xff] 0.0
    %50 = vst [vmem:[#allocation2 + $0x110] sm:$0xff] 0.0
    %51 = vst [vmem:[#allocation2 + $0x118] sm:$0xff] 0.0
    %52 = vst [vmem:[#allocation2 + $0x120] sm:$0xff] 0.0
    %53 = vst [vmem:[#allocation2 + $0x128] sm:$0xff] 0.0
    %54 = vst [vmem:[#allocation2 + $0x130] sm:$0xff] 0.0
    %55 = vst [vmem:[#allocation2 + $0x138] sm:$0xff] 0.0
    %56 = vst [vmem:[#allocation2 + $0x140] sm:$0xff] 0.0
    %57 = vst [vmem:[#allocation2 + $0x148] sm:$0xff] 0.0
    %58 = vst [vmem:[#allocation2 + $0x150] sm:$0xff] 0.0
    %59 = vst [vmem:[#allocation2 + $0x158] sm:$0xff] 0.0
    %60 = vst [vmem:[#allocation2 + $0x160] sm:$0xff] 0.0
    %61 = vst [vmem:[#allocation2 + $0x168] sm:$0xff] 0.0
    %62 = vst [vmem:[#allocation2 + $0x170] sm:$0xff] 0.0
    %63 = vst [vmem:[#allocation2 + $0x178] sm:$0xff] 0.0
    %64 = vst [vmem:[#allocation2 + $0x180] sm:$0xff] 0.0
    %65 = vst [vmem:[#allocation2 + $0x188] sm:$0xff] 0.0
    %66 = vst [vmem:[#allocation2 + $0x190] sm:$0xff] 0.0
    %67 = vst [vmem:[#allocation2 + $0x198] sm:$0xff] 0.0
    %68 = vst [vmem:[#allocation2 + $0x1a0] sm:$0xff] 0.0
    %69 = vst [vmem:[#allocation2 + $0x1a8] sm:$0xff] 0.0
    %70 = vst [vmem:[#allocation2 + $0x1b0] sm:$0xff] 0.0
    %71 = vst [vmem:[#allocation2 + $0x1b8] sm:$0xff] 0.0
    %72 = vst [vmem:[#allocation2 + $0x1c0] sm:$0xff] 0.0
    %73 = vst [vmem:[#allocation2 + $0x1c8] sm:$0xff] 0.0
    %74 = vst [vmem:[#allocation2 + $0x1d0] sm:$0xff] 0.0
    %75 = vst [vmem:[#allocation2 + $0x1d8] sm:$0xff] 0.0
    %76 = vst [vmem:[#allocation2 + $0x1e0] sm:$0xff] 0.0
    %77 = vst [vmem:[#allocation2 + $0x1e8] sm:$0xff] 0.0
    %78 = vst [vmem:[#allocation2 + $0x1f0] sm:$0xff] 0.0
    %79 = vst [vmem:[#allocation2 + $0x1f8] sm:$0xff] 0.0
  $region13: #{byol_forward.2} parent=0 // pred_fallthru
    _
  %v80 = vld [vmem:[%s1] sm:$0xf]
  %v81 = vld [vmem:[%s1 + $0x4] sm:$0xf]
  %v82 = vld [vmem:[%s1 + $0x8] sm:$0xf]
  %v83 = vld [vmem:[%s1 + $0xc] sm:$0xf]
  %v84 = vld [vmem:[%s1 + $0x10] sm:$0xf]
  %v85 = vld [vmem:[%s1 + $0x14] sm:$0xf]
  %v86 = vld [vmem:[%s1 + $0x18] sm:$0xf]
  %v87 = vld [vmem:[%s1 + $0x1c] sm:$0xf]
  %v88 = vld [vmem:[%s1 + $0x20] sm:$0xf]
  %v89 = vld [vmem:[%s1 + $0x24] sm:$0xf]
  %v90 = vld [vmem:[%s1 + $0x28] sm:$0xf]
  %v91 = vld [vmem:[%s1 + $0x2c] sm:$0xf]
  %v92 = vld [vmem:[%s1 + $0x30] sm:$0xf]
  %v93 = vld [vmem:[%s1 + $0x34] sm:$0xf]
  %v94 = vld [vmem:[%s1 + $0x38] sm:$0xf]
  %v95 = vld [vmem:[%s1 + $0x3c] sm:$0xf]
  %v96 = vld [vmem:[%s1 + $0x40] sm:$0xf]
  %v97 = vld [vmem:[%s1 + $0x44] sm:$0xf]
  %v98 = vld [vmem:[%s1 + $0x48] sm:$0xf]
  %v99 = vld [vmem:[%s1 + $0x4c] sm:$0xf]
  %v100 = vld [vmem:[%s1 + $0x50] sm:$0xf]
  %v101 = vld [vmem:[%s1 + $0x54] sm:$0xf]
  %v102 = vld [vmem:[%s1 + $0x58] sm:$0xf]
  %v103 = vld [vmem:[%s1 + $0x5c] sm:$0xf]
  %v104 = vld [vmem:[%s1 + $0x60] sm:$0xf]
  %v105 = vld [vmem:[%s1 + $0x64] sm:$0xf]
  %v106 = vld [vmem:[%s1 + $0x68] sm:$0xf]
  %v107 = vld [vmem:[%s1 + $0x6c] sm:$0xf]
  %v108 = vld [vmem:[%s1 + $0x70] sm:$0xf]
  %v109 = vld [vmem:[%s1 + $0x74] sm:$0xf]
  %v110 = vld [vmem:[%s1 + $0x78] sm:$0xf]
  %v111 = vld [vmem:[%s1 + $0x7c] sm:$0xf]
  %v112 = vld [vmem:[%s1 + $0x80] sm:$0xf]
  %v113 = vld [vmem:[%s1 + $0x84] sm:$0xf]
  %v114 = vld [vmem:[%s1 + $0x88] sm:$0xf]
  %v115 = vld [vmem:[%s1 + $0x8c] sm:$0xf]
  %v116 = vld [vmem:[%s1 + $0x90] sm:$0xf]
  %v117 = vld [vmem:[%s1 + $0x94] sm:$0xf]
  %v118 = vld [vmem:[%s1 + $0x98] sm:$0xf]
  %v119 = vld [vmem:[%s1 + $0x9c] sm:$0xf]
  %v120 = vld [vmem:[%s1 + $0xa0] sm:$0xf]
  %v121 = vld [vmem:[%s1 + $0xa4] sm:$0xf]
  %v122 = vld [vmem:[%s1 + $0xa8] sm:$0xf]
  %v123 = vld [vmem:[%s1 + $0xac] sm:$0xf]
  %v124 = vld [vmem:[%s1 + $0xb0] sm:$0xf]
  %v125 = vld [vmem:[%s1 + $0xb4] sm:$0xf]
  %v126 = vld [vmem:[%s1 + $0xb8] sm:$0xf]
  %v127 = vld [vmem:[%s1 + $0xbc] sm:$0xf]
  %v128 = vld [vmem:[%s1 + $0xc0] sm:$0xf]
  %v129 = vld [vmem:[%s1 + $0xc4] sm:$0xf]
  %v130 = vld [vmem:[%s1 + $0xc8] sm:$0xf]
  %v131 = vld [vmem:[%s1 + $0xcc] sm:$0xf]
  %v132 = vld [vmem:[%s1 + $0xd0] sm:$0xf]
  %v133 = vld [vmem:[%s1 + $0xd4] sm:$0xf]
  %v134 = vld [vmem:[%s1 + $0xd8] sm:$0xf]
  %v135 = vld [vmem:[%s1 + $0xdc] sm:$0xf]
  %v136 = vld [vmem:[%s1 + $0xe0] sm:$0xf]
  %v137 = vld [vmem:[%s1 + $0xe4] sm:$0xf]
  %v138 = vld [vmem:[%s1 + $0xe8] sm:$0xf]
  %v139 = vld [vmem:[%s1 + $0xec] sm:$0xf]
  %v140 = vld [vmem:[%s1 + $0xf0] sm:$0xf]
  %v141 = vld [vmem:[%s1 + $0xf4] sm:$0xf]
  %v142 = vld [vmem:[%s1 + $0xf8] sm:$0xf]
  %v143 = vld [vmem:[%s1 + $0xfc] sm:$0xf]
  %v144 = vld [vmem:[%s0] sm:$0xff]
  %v146 = vcombine.high %v144, %v144
  %v148 = vpack.c.bf16 %v144, %v144
  %v149 = vpack.c.bf16 %v146, %v146
  %v214 = vunpack.c.l.b16 %v80
  %v215 = vunpack.c.l.b16 %v81
  %v216 = vunpack.c.l.b16 %v82
  %v217 = vunpack.c.l.b16 %v83
  %v218 = vunpack.c.l.b16 %v84
  %v219 = vunpack.c.l.b16 %v85
  %v220 = vunpack.c.l.b16 %v86
  %v221 = vunpack.c.l.b16 %v87
  %v222 = vunpack.c.l.b16 %v88
  %v223 = vunpack.c.l.b16 %v89
  %v224 = vunpack.c.l.b16 %v90
  %v225 = vunpack.c.l.b16 %v91
  %v226 = vunpack.c.l.b16 %v92
  %v227 = vunpack.c.l.b16 %v93
  %v228 = vunpack.c.l.b16 %v94
  %v229 = vunpack.c.l.b16 %v95
  %v230 = vunpack.c.l.b16 %v96
  %v231 = vunpack.c.l.b16 %v97
  %v232 = vunpack.c.l.b16 %v98
  %v233 = vunpack.c.l.b16 %v99
  %v234 = vunpack.c.l.b16 %v100
  %v235 = vunpack.c.l.b16 %v101
  %v236 = vunpack.c.l.b16 %v102
  %v237 = vunpack.c.l.b16 %v103
  %v238 = vunpack.c.l.b16 %v104
  %v239 = vunpack.c.l.b16 %v105
  %v240 = vunpack.c.l.b16 %v106
  %v241 = vunpack.c.l.b16 %v107
  %v242 = vunpack.c.l.b16 %v108
  %v243 = vunpack.c.l.b16 %v109
  %v244 = vunpack.c.l.b16 %v110
  %v245 = vunpack.c.l.b16 %v111
  %v246 = vunpack.c.l.b16 %v112
  %v247 = vunpack.c.l.b16 %v113
  %v248 = vunpack.c.l.b16 %v114
  %v249 = vunpack.c.l.b16 %v115
  %v250 = vunpack.c.l.b16 %v116
  %v251 = vunpack.c.l.b16 %v117
  %v252 = vunpack.c.l.b16 %v118
  %v253 = vunpack.c.l.b16 %v119
  %v254 = vunpack.c.l.b16 %v120
  %v255 = vunpack.c.l.b16 %v121
  %v256 = vunpack.c.l.b16 %v122
  %v257 = vunpack.c.l.b16 %v123
  %v258 = vunpack.c.l.b16 %v124
  %v259 = vunpack.c.l.b16 %v125
  %v260 = vunpack.c.l.b16 %v126
  %v261 = vunpack.c.l.b16 %v127
  %v262 = vunpack.c.l.b16 %v128
  %v263 = vunpack.c.l.b16 %v129
  %v264 = vunpack.c.l.b16 %v130
  %v265 = vunpack.c.l.b16 %v131
  %v266 = vunpack.c.l.b16 %v132
  %v267 = vunpack.c.l.b16 %v133
  %v268 = vunpack.c.l.b16 %v134
  %v269 = vunpack.c.l.b16 %v135
  %v270 = vunpack.c.l.b16 %v136
  %v271 = vunpack.c.l.b16 %v137
  %v272 = vunpack.c.l.b16 %v138
  %v273 = vunpack.c.l.b16 %v139
  %v274 = vunpack.c.l.b16 %v140
  %v275 = vunpack.c.l.b16 %v141
  %v276 = vunpack.c.l.b16 %v142
  %v277 = vunpack.c.l.b16 %v143
  %v278 = vpack.c.b16 %v215, %v214
  %v279 = vpack.c.b16 %v217, %v216
  %v280 = vpack.c.b16 %v219, %v218
  %v281 = vpack.c.b16 %v221, %v220
  %v282 = vpack.c.b16 %v223, %v222
  %v283 = vpack.c.b16 %v225, %v224
  %v284 = vpack.c.b16 %v227, %v226
  %v285 = vpack.c.b16 %v229, %v228
  %v286 = vpack.c.b16 %v231, %v230
  %v287 = vpack.c.b16 %v233, %v232
  %v288 = vpack.c.b16 %v235, %v234
  %v289 = vpack.c.b16 %v237, %v236
  %v290 = vpack.c.b16 %v239, %v238
  %v291 = vpack.c.b16 %v241, %v240
  %v292 = vpack.c.b16 %v243, %v242
  %v293 = vpack.c.b16 %v245, %v244
  %v294 = vpack.c.b16 %v247, %v246
  %v295 = vpack.c.b16 %v249, %v248
  %v296 = vpack.c.b16 %v251, %v250
  %v297 = vpack.c.b16 %v253, %v252
  %v298 = vpack.c.b16 %v255, %v254
  %v299 = vpack.c.b16 %v257, %v256
  %v300 = vpack.c.b16 %v259, %v258
  %v301 = vpack.c.b16 %v261, %v260
  %v302 = vpack.c.b16 %v263, %v262
  %v303 = vpack.c.b16 %v265, %v264
  %v304 = vpack.c.b16 %v267, %v266
  %v305 = vpack.c.b16 %v269, %v268
  %v306 = vpack.c.b16 %v271, %v270
  %v307 = vpack.c.b16 %v273, %v272
  %v308 = vpack.c.b16 %v275, %v274
  %v309 = vpack.c.b16 %v277, %v276
  %vm310 = vcmask 31744
  %v312 = vsel %vm310, %v278, 0
  %v315 = vsel %vm310, %v279, 0
  %v318 = vsel %vm310, %v280, 0
  %v321 = vsel %vm310, %v281, 0
  %v324 = vsel %vm310, %v282, 0
  %v327 = vsel %vm310, %v283, 0
  %v330 = vsel %vm310, %v284, 0
  %v333 = vsel %vm310, %v285, 0
  %v336 = vsel %vm310, %v286, 0
  %v339 = vsel %vm310, %v287, 0
  %v342 = vsel %vm310, %v288, 0
  %v345 = vsel %vm310, %v289, 0
  %v348 = vsel %vm310, %v290, 0
  %v351 = vsel %vm310, %v291, 0
  %v354 = vsel %vm310, %v292, 0
  %v357 = vsel %vm310, %v293, 0
  %v360 = vsel %vm310, %v294, 0
  %v363 = vsel %vm310, %v295, 0
  %v366 = vsel %vm310, %v296, 0
  %v369 = vsel %vm310, %v297, 0
  %v372 = vsel %vm310, %v298, 0
  %v375 = vsel %vm310, %v299, 0
  %v378 = vsel %vm310, %v300, 0
  %v381 = vsel %vm310, %v301, 0
  %v384 = vsel %vm310, %v302, 0
  %v387 = vsel %vm310, %v303, 0
  %v390 = vsel %vm310, %v304, 0
  %v393 = vsel %vm310, %v305, 0
  %v396 = vsel %vm310, %v306, 0
  %v399 = vsel %vm310, %v307, 0
  %v402 = vsel %vm310, %v308, 0
  %v405 = vsel %vm310, %v309, 0
  %vm407 = vcmask 1041408
  %v409 = vsel %vm407, %v148, 0
  %v412 = vsel %vm407, %v149, 0
  %414 = vmatprep.subr.bf16.mxu0 %v412
  %415 = vmatpush1.bf16.msra.mxu0 %v409
  %416 = vmatprep.subr.bf16.mxu0 0
  %417 = vmatpush1.bf16.msra.mxu0 0
  %418 = vmatprep.subr.bf16.mxu0 0
  %419 = vmatpush1.bf16.msra.mxu0 0
  %420 = vmatprep.subr.bf16.mxu0 0
  %421 = vmatpush1.bf16.msra.mxu0 0
  %422 = vmatprep.subr.bf16.mxu0 0
  %423 = vmatpush1.bf16.msra.mxu0 0
  %424 = vmatprep.subr.bf16.mxu0 0
  %425 = vmatpush1.bf16.msra.mxu0 0
  %426 = vmatprep.subr.bf16.mxu0 0
  %427 = vmatpush1.bf16.msra.mxu0 0
  %428 = vmatprep.subr.bf16.mxu0 0
  %429 = vmatpush1.bf16.msra.mxu0 0
  %430 = vmatprep.subr.bf16.mxu0 0
  %431 = vmatpush1.bf16.msra.mxu0 0
  %432 = vmatprep.subr.bf16.mxu0 0
  %433 = vmatpush1.bf16.msra.mxu0 0
  %434 = vmatprep.subr.bf16.mxu0 0
  %435 = vmatpush1.bf16.msra.mxu0 0
  %436 = vmatprep.subr.bf16.mxu0 0
  %437 = vmatpush1.bf16.msra.mxu0 0
  %438 = vmatprep.subr.bf16.mxu0 0
  %439 = vmatpush1.bf16.msra.mxu0 0
  %440 = vmatprep.subr.bf16.mxu0 0
  %441 = vmatpush1.bf16.msra.mxu0 0
  %442 = vmatprep.subr.bf16.mxu0 0
  %443 = vmatpush1.bf16.msra.mxu0 0
  %444 = vmatprep.subr.bf16.mxu0 0
  %445 = vmatpush1.bf16.msra.mxu0 0
  %446 = vmatprep.mubr.bf16.mxu0 0
  %447 = vmatmul.mubr.bf16.gmra.mrb[0].mxu0 %v312
  %v448 = vpop.f32.mrb[0].mxu0
  %v449 = vadd.f32 0.0, %v448
  %v450 = vpop.f32.mrb[0].mxu0
  %v451 = vadd.f32 0.0, %v450
  %v452 = vpop.f32.mrb[0].mxu0
  %v453 = vadd.f32 0.0, %v452
  %v454 = vpop.f32.mrb[0].mxu0
  %v455 = vadd.f32 0.0, %v454
  %456 = vmatprep.mubr.bf16.mxu0 0
  %457 = vmatmul.mubr.bf16.gmra.mrb[0].mxu0 %v315
  %v458 = vpop.f32.mrb[0].mxu0
  %v459 = vadd.f32 0.0, %v458
  %v460 = vpop.f32.mrb[0].mxu0
  %v461 = vadd.f32 0.0, %v460
  %v462 = vpop.f32.mrb[0].mxu0
  %v463 = vadd.f32 0.0, %v462
  %v464 = vpop.f32.mrb[0].mxu0
  %v465 = vadd.f32 0.0, %v464
  %466 = vmatprep.mubr.bf16.mxu0 0
  %467 = vmatmul.mubr.bf16.gmra.mrb[0].mxu0 %v318
  %v468 = vpop.f32.mrb[0].mxu0
  %v469 = vadd.f32 0.0, %v468
  %v470 = vpop.f32.mrb[0].mxu0
  %v471 = vadd.f32 0.0, %v470
  %v472 = vpop.f32.mrb[0].mxu0
  %v473 = vadd.f32 0.0, %v472
  %v474 = vpop.f32.mrb[0].mxu0
  %v475 = vadd.f32 0.0, %v474
  %476 = vmatprep.mubr.bf16.mxu0 0
  %477 = vmatmul.mubr.bf16.gmra.mrb[0].mxu0 %v321
  %v478 = vpop.f32.mrb[0].mxu0
  %v479 = vadd.f32 0.0, %v478
  %v480 = vpop.f32.mrb[0].mxu0
  %v481 = vadd.f32 0.0, %v480
  %v482 = vpop.f32.mrb[0].mxu0
  %v483 = vadd.f32 0.0, %v482
  %v484 = vpop.f32.mrb[0].mxu0
  %v485 = vadd.f32 0.0, %v484
  %486 = vmatprep.mubr.bf16.mxu0 0
  %487 = vmatmul.mubr.bf16.gmra.mrb[0].mxu0 %v324
  %v488 = vpop.f32.mrb[0].mxu0
  %v489 = vadd.f32 0.0, %v488
  %v490 = vpop.f32.mrb[0].mxu0
  %v491 = vadd.f32 0.0, %v490
  %v492 = vpop.f32.mrb[0].mxu0
  %v493 = vadd.f32 0.0, %v492
  %v494 = vpop.f32.mrb[0].mxu0
  %v495 = vadd.f32 0.0, %v494
  %496 = vmatprep.mubr.bf16.mxu0 0
  %497 = vmatmul.mubr.bf16.gmra.mrb[0].mxu0 %v327
  %v498 = vpop.f32.mrb[0].mxu0
  %v499 = vadd.f32 0.0, %v498
  %v500 = vpop.f32.mrb[0].mxu0
  %v501 = vadd.f32 0.0, %v500
  %v502 = vpop.f32.mrb[0].mxu0
  %v503 = vadd.f32 0.0, %v502
  %v504 = vpop.f32.mrb[0].mxu0
  %v505 = vadd.f32 0.0, %v504
  %506 = vmatprep.mubr.bf16.mxu0 0
  %507 = vmatmul.mubr.bf16.gmra.mrb[0].mxu0 %v330
  %v508 = vpop.f32.mrb[0].mxu0
  %v509 = vadd.f32 0.0, %v508
  %v510 = vpop.f32.mrb[0].mxu0
  %v511 = vadd.f32 0.0, %v510
  %v512 = vpop.f32.mrb[0].mxu0
  %v513 = vadd.f32 0.0, %v512
  %v514 = vpop.f32.mrb[0].mxu0
  %v515 = vadd.f32 0.0, %v514
  %516 = vmatprep.mubr.bf16.mxu0 0
  %517 = vmatmul.mubr.bf16.gmra.mrb[0].mxu0 %v333
  %v518 = vpop.f32.mrb[0].mxu0
  %v519 = vadd.f32 0.0, %v518
  %v520 = vpop.f32.mrb[0].mxu0
  %v521 = vadd.f32 0.0, %v520
  %v522 = vpop.f32.mrb[0].mxu0
  %v523 = vadd.f32 0.0, %v522
  %v524 = vpop.f32.mrb[0].mxu0
  %v525 = vadd.f32 0.0, %v524
  %526 = vmatprep.mubr.bf16.mxu0 0
  %527 = vmatmul.mubr.bf16.gmra.mrb[0].mxu0 %v336
  %v528 = vpop.f32.mrb[0].mxu0
  %v529 = vadd.f32 0.0, %v528
  %v530 = vpop.f32.mrb[0].mxu0
  %v531 = vadd.f32 0.0, %v530
  %v532 = vpop.f32.mrb[0].mxu0
  %v533 = vadd.f32 0.0, %v532
  %v534 = vpop.f32.mrb[0].mxu0
  %v535 = vadd.f32 0.0, %v534
  %536 = vmatprep.mubr.bf16.mxu0 0
  %537 = vmatmul.mubr.bf16.gmra.mrb[0].mxu0 %v339
  %v538 = vpop.f32.mrb[0].mxu0
  %v539 = vadd.f32 0.0, %v538
  %v540 = vpop.f32.mrb[0].mxu0
  %v541 = vadd.f32 0.0, %v540
  %v542 = vpop.f32.mrb[0].mxu0
  %v543 = vadd.f32 0.0, %v542
  %v544 = vpop.f32.mrb[0].mxu0
  %v545 = vadd.f32 0.0, %v544
  %546 = vmatprep.mubr.bf16.mxu0 0
  %547 = vmatmul.mubr.bf16.gmra.mrb[0].mxu0 %v342
  %v548 = vpop.f32.mrb[0].mxu0
  %v549 = vadd.f32 0.0, %v548
  %v550 = vpop.f32.mrb[0].mxu0
  %v551 = vadd.f32 0.0, %v550
  %v552 = vpop.f32.mrb[0].mxu0
  %v553 = vadd.f32 0.0, %v552
  %v554 = vpop.f32.mrb[0].mxu0
  %v555 = vadd.f32 0.0, %v554
  %556 = vmatprep.mubr.bf16.mxu0 0
  %557 = vmatmul.mubr.bf16.gmra.mrb[0].mxu0 %v345
  %v558 = vpop.f32.mrb[0].mxu0
  %v559 = vadd.f32 0.0, %v558
  %v560 = vpop.f32.mrb[0].mxu0
  %v561 = vadd.f32 0.0, %v560
  %v562 = vpop.f32.mrb[0].mxu0
  %v563 = vadd.f32 0.0, %v562
  %v564 = vpop.f32.mrb[0].mxu0
  %v565 = vadd.f32 0.0, %v564
  %566 = vmatprep.mubr.bf16.mxu0 0
  %567 = vmatmul.mubr.bf16.gmra.mrb[0].mxu0 %v348
  %v568 = vpop.f32.mrb[0].mxu0
  %v569 = vadd.f32 0.0, %v568
  %v570 = vpop.f32.mrb[0].mxu0
  %v571 = vadd.f32 0.0, %v570
  %v572 = vpop.f32.mrb[0].mxu0
  %v573 = vadd.f32 0.0, %v572
  %v574 = vpop.f32.mrb[0].mxu0
  %v575 = vadd.f32 0.0, %v574
  %576 = vmatprep.mubr.bf16.mxu0 0
  %577 = vmatmul.mubr.bf16.gmra.mrb[0].mxu0 %v351
  %v578 = vpop.f32.mrb[0].mxu0
  %v579 = vadd.f32 0.0, %v578
  %v580 = vpop.f32.mrb[0].mxu0
  %v581 = vadd.f32 0.0, %v580
  %v582 = vpop.f32.mrb[0].mxu0
  %v583 = vadd.f32 0.0, %v582
  %v584 = vpop.f32.mrb[0].mxu0
  %v585 = vadd.f32 0.0, %v584
  %586 = vmatprep.mubr.bf16.mxu0 0
  %587 = vmatmul.mubr.bf16.gmra.mrb[0].mxu0 %v354
  %v588 = vpop.f32.mrb[0].mxu0
  %v589 = vadd.f32 0.0, %v588
  %v590 = vpop.f32.mrb[0].mxu0
  %v591 = vadd.f32 0.0, %v590
  %v592 = vpop.f32.mrb[0].mxu0
  %v593 = vadd.f32 0.0, %v592
  %v594 = vpop.f32.mrb[0].mxu0
  %v595 = vadd.f32 0.0, %v594
  %596 = vmatprep.mubr.bf16.mxu0 0
  %597 = vmatmul.mubr.bf16.gmra.mrb[0].mxu0 %v357
  %v598 = vpop.f32.mrb[0].mxu0
  %v599 = vadd.f32 0.0, %v598
  %v600 = vpop.f32.mrb[0].mxu0
  %v601 = vadd.f32 0.0, %v600
  %v602 = vpop.f32.mrb[0].mxu0
  %v603 = vadd.f32 0.0, %v602
  %v604 = vpop.f32.mrb[0].mxu0
  %v605 = vadd.f32 0.0, %v604
  %606 = vmatprep.mubr.bf16.mxu0 0
  %607 = vmatmul.mubr.bf16.gmra.mrb[0].mxu0 %v360
  %v608 = vpop.f32.mrb[0].mxu0
  %v609 = vadd.f32 0.0, %v608
  %v610 = vpop.f32.mrb[0].mxu0
  %v611 = vadd.f32 0.0, %v610
  %v612 = vpop.f32.mrb[0].mxu0
  %v613 = vadd.f32 0.0, %v612
  %v614 = vpop.f32.mrb[0].mxu0
  %v615 = vadd.f32 0.0, %v614
  %616 = vmatprep.mubr.bf16.mxu0 0
  %617 = vmatmul.mubr.bf16.gmra.mrb[0].mxu0 %v363
  %v618 = vpop.f32.mrb[0].mxu0
  %v619 = vadd.f32 0.0, %v618
  %v620 = vpop.f32.mrb[0].mxu0
  %v621 = vadd.f32 0.0, %v620
  %v622 = vpop.f32.mrb[0].mxu0
  %v623 = vadd.f32 0.0, %v622
  %v624 = vpop.f32.mrb[0].mxu0
  %v625 = vadd.f32 0.0, %v624
  %626 = vmatprep.mubr.bf16.mxu0 0
  %627 = vmatmul.mubr.bf16.gmra.mrb[0].mxu0 %v366
  %v628 = vpop.f32.mrb[0].mxu0
  %v629 = vadd.f32 0.0, %v628
  %v630 = vpop.f32.mrb[0].mxu0
  %v631 = vadd.f32 0.0, %v630
  %v632 = vpop.f32.mrb[0].mxu0
  %v633 = vadd.f32 0.0, %v632
  %v634 = vpop.f32.mrb[0].mxu0
  %v635 = vadd.f32 0.0, %v634
  %636 = vmatprep.mubr.bf16.mxu0 0
  %637 = vmatmul.mubr.bf16.gmra.mrb[0].mxu0 %v369
  %v638 = vpop.f32.mrb[0].mxu0
  %v639 = vadd.f32 0.0, %v638
  %v640 = vpop.f32.mrb[0].mxu0
  %v641 = vadd.f32 0.0, %v640
  %v642 = vpop.f32.mrb[0].mxu0
  %v643 = vadd.f32 0.0, %v642
  %v644 = vpop.f32.mrb[0].mxu0
  %v645 = vadd.f32 0.0, %v644
  %646 = vmatprep.mubr.bf16.mxu0 0
  %647 = vmatmul.mubr.bf16.gmra.mrb[0].mxu0 %v372
  %v648 = vpop.f32.mrb[0].mxu0
  %v649 = vadd.f32 0.0, %v648
  %v650 = vpop.f32.mrb[0].mxu0
  %v651 = vadd.f32 0.0, %v650
  %v652 = vpop.f32.mrb[0].mxu0
  %v653 = vadd.f32 0.0, %v652
  %v654 = vpop.f32.mrb[0].mxu0
  %v655 = vadd.f32 0.0, %v654
  %656 = vmatprep.mubr.bf16.mxu0 0
  %657 = vmatmul.mubr.bf16.gmra.mrb[0].mxu0 %v375
  %v658 = vpop.f32.mrb[0].mxu0
  %v659 = vadd.f32 0.0, %v658
  %v660 = vpop.f32.mrb[0].mxu0
  %v661 = vadd.f32 0.0, %v660
  %v662 = vpop.f32.mrb[0].mxu0
  %v663 = vadd.f32 0.0, %v662
  %v664 = vpop.f32.mrb[0].mxu0
  %v665 = vadd.f32 0.0, %v664
  %666 = vmatprep.mubr.bf16.mxu0 0
  %667 = vmatmul.mubr.bf16.gmra.mrb[0].mxu0 %v378
  %v668 = vpop.f32.mrb[0].mxu0
  %v669 = vadd.f32 0.0, %v668
  %v670 = vpop.f32.mrb[0].mxu0
  %v671 = vadd.f32 0.0, %v670
  %v672 = vpop.f32.mrb[0].mxu0
  %v673 = vadd.f32 0.0, %v672
  %v674 = vpop.f32.mrb[0].mxu0
  %v675 = vadd.f32 0.0, %v674
  %676 = vmatprep.mubr.bf16.mxu0 0
  %677 = vmatmul.mubr.bf16.gmra.mrb[0].mxu0 %v381
  %v678 = vpop.f32.mrb[0].mxu0
  %v679 = vadd.f32 0.0, %v678
  %v680 = vpop.f32.mrb[0].mxu0
  %v681 = vadd.f32 0.0, %v680
  %v682 = vpop.f32.mrb[0].mxu0
  %v683 = vadd.f32 0.0, %v682
  %v684 = vpop.f32.mrb[0].mxu0
  %v685 = vadd.f32 0.0, %v684
  %686 = vmatprep.mubr.bf16.mxu0 0
  %687 = vmatmul.mubr.bf16.gmra.mrb[0].mxu0 %v384
  %v688 = vpop.f32.mrb[0].mxu0
  %v689 = vadd.f32 0.0, %v688
  %v690 = vpop.f32.mrb[0].mxu0
  %v691 = vadd.f32 0.0, %v690
  %v692 = vpop.f32.mrb[0].mxu0
  %v693 = vadd.f32 0.0, %v692
  %v694 = vpop.f32.mrb[0].mxu0
  %v695 = vadd.f32 0.0, %v694
  %696 = vmatprep.mubr.bf16.mxu0 0
  %697 = vmatmul.mubr.bf16.gmra.mrb[0].mxu0 %v387
  %v698 = vpop.f32.mrb[0].mxu0
  %v699 = vadd.f32 0.0, %v698
  %v700 = vpop.f32.mrb[0].mxu0
  %v701 = vadd.f32 0.0, %v700
  %v702 = vpop.f32.mrb[0].mxu0
  %v703 = vadd.f32 0.0, %v702
  %v704 = vpop.f32.mrb[0].mxu0
  %v705 = vadd.f32 0.0, %v704
  %706 = vmatprep.mubr.bf16.mxu0 0
  %707 = vmatmul.mubr.bf16.gmra.mrb[0].mxu0 %v390
  %v708 = vpop.f32.mrb[0].mxu0
  %v709 = vadd.f32 0.0, %v708
  %v710 = vpop.f32.mrb[0].mxu0
  %v711 = vadd.f32 0.0, %v710
  %v712 = vpop.f32.mrb[0].mxu0
  %v713 = vadd.f32 0.0, %v712
  %v714 = vpop.f32.mrb[0].mxu0
  %v715 = vadd.f32 0.0, %v714
  %716 = vmatprep.mubr.bf16.mxu0 0
  %717 = vmatmul.mubr.bf16.gmra.mrb[0].mxu0 %v393
  %v718 = vpop.f32.mrb[0].mxu0
  %v719 = vadd.f32 0.0, %v718
  %v720 = vpop.f32.mrb[0].mxu0
  %v721 = vadd.f32 0.0, %v720
  %v722 = vpop.f32.mrb[0].mxu0
  %v723 = vadd.f32 0.0, %v722
  %v724 = vpop.f32.mrb[0].mxu0
  %v725 = vadd.f32 0.0, %v724
  %726 = vmatprep.mubr.bf16.mxu0 0
  %727 = vmatmul.mubr.bf16.gmra.mrb[0].mxu0 %v396
  %v728 = vpop.f32.mrb[0].mxu0
  %v729 = vadd.f32 0.0, %v728
  %v730 = vpop.f32.mrb[0].mxu0
  %v731 = vadd.f32 0.0, %v730
  %v732 = vpop.f32.mrb[0].mxu0
  %v733 = vadd.f32 0.0, %v732
  %v734 = vpop.f32.mrb[0].mxu0
  %v735 = vadd.f32 0.0, %v734
  %736 = vmatprep.mubr.bf16.mxu0 0
  %737 = vmatmul.mubr.bf16.gmra.mrb[0].mxu0 %v399
  %v738 = vpop.f32.mrb[0].mxu0
  %v739 = vadd.f32 0.0, %v738
  %v740 = vpop.f32.mrb[0].mxu0
  %v741 = vadd.f32 0.0, %v740
  %v742 = vpop.f32.mrb[0].mxu0
  %v743 = vadd.f32 0.0, %v742
  %v744 = vpop.f32.mrb[0].mxu0
  %v745 = vadd.f32 0.0, %v744
  %746 = vmatprep.mubr.bf16.mxu0 0
  %747 = vmatmul.mubr.bf16.gmra.mrb[0].mxu0 %v402
  %v748 = vpop.f32.mrb[0].mxu0
  %v749 = vadd.f32 0.0, %v748
  %v750 = vpop.f32.mrb[0].mxu0
  %v751 = vadd.f32 0.0, %v750
  %v752 = vpop.f32.mrb[0].mxu0
  %v753 = vadd.f32 0.0, %v752
  %v754 = vpop.f32.mrb[0].mxu0
  %v755 = vadd.f32 0.0, %v754
  %756 = vmatprep.mubr.bf16.mxu0 0
  %757 = vmatmul.mubr.bf16.gmra.mrb[0].mxu0 %v405
  %v758 = vpop.f32.mrb[0].mxu0
  %v759 = vadd.f32 0.0, %v758
  %v760 = vpop.f32.mrb[0].mxu0
  %v761 = vadd.f32 0.0, %v760
  %v762 = vpop.f32.mrb[0].mxu0
  %v763 = vadd.f32 0.0, %v762
  %v764 = vpop.f32.mrb[0].mxu0
  %v765 = vadd.f32 0.0, %v764
  %766 = vdwg.mxu0
  %v767 = vmax.f32 %v449, 0.0
  %v768 = vmax.f32 %v451, 0.0
  %v769 = vmax.f32 %v453, 0.0
  %v770 = vmax.f32 %v455, 0.0
  %v771 = vmax.f32 %v459, 0.0
  %v772 = vmax.f32 %v461, 0.0
  %v773 = vmax.f32 %v463, 0.0
  %v774 = vmax.f32 %v465, 0.0
  %v775 = vmax.f32 %v469, 0.0
  %v776 = vmax.f32 %v471, 0.0
  %v777 = vmax.f32 %v473, 0.0
  %v778 = vmax.f32 %v475, 0.0
  %v779 = vmax.f32 %v479, 0.0
  %v780 = vmax.f32 %v481, 0.0
  %v781 = vmax.f32 %v483, 0.0
  %v782 = vmax.f32 %v485, 0.0
  %v783 = vmax.f32 %v489, 0.0
  %v784 = vmax.f32 %v491, 0.0
  %v785 = vmax.f32 %v493, 0.0
  %v786 = vmax.f32 %v495, 0.0
  %v787 = vmax.f32 %v499, 0.0
  %v788 = vmax.f32 %v501, 0.0
  %v789 = vmax.f32 %v503, 0.0
  %v790 = vmax.f32 %v505, 0.0
  %v791 = vmax.f32 %v509, 0.0
  %v792 = vmax.f32 %v511, 0.0
  %v793 = vmax.f32 %v513, 0.0
  %v794 = vmax.f32 %v515, 0.0
  %v795 = vmax.f32 %v519, 0.0
  %v796 = vmax.f32 %v521, 0.0
  %v797 = vmax.f32 %v523, 0.0
  %v798 = vmax.f32 %v525, 0.0
  %v799 = vmax.f32 %v529, 0.0
  %v800 = vmax.f32 %v531, 0.0
  %v801 = vmax.f32 %v533, 0.0
  %v802 = vmax.f32 %v535, 0.0
  %v803 = vmax.f32 %v539, 0.0
  %v804 = vmax.f32 %v541, 0.0
  %v805 = vmax.f32 %v543, 0.0
  %v806 = vmax.f32 %v545, 0.0
  %v807 = vmax.f32 %v549, 0.0
  %v808 = vmax.f32 %v551, 0.0
  %v809 = vmax.f32 %v553, 0.0
  %v810 = vmax.f32 %v555, 0.0
  %v811 = vmax.f32 %v559, 0.0
  %v812 = vmax.f32 %v561, 0.0
  %v813 = vmax.f32 %v563, 0.0
  %v814 = vmax.f32 %v565, 0.0
  %v815 = vmax.f32 %v569, 0.0
  %v816 = vmax.f32 %v571, 0.0
  %v817 = vmax.f32 %v573, 0.0
  %v818 = vmax.f32 %v575, 0.0
  %v819 = vmax.f32 %v579, 0.0
  %v820 = vmax.f32 %v581, 0.0
  %v821 = vmax.f32 %v583, 0.0
  %v822 = vmax.f32 %v585, 0.0
  %v823 = vmax.f32 %v589, 0.0
  %v824 = vmax.f32 %v591, 0.0
  %v825 = vmax.f32 %v593, 0.0
  %v826 = vmax.f32 %v595, 0.0
  %v827 = vmax.f32 %v599, 0.0
  %v828 = vmax.f32 %v601, 0.0
  %v829 = vmax.f32 %v603, 0.0
  %v830 = vmax.f32 %v605, 0.0
  %v831 = vmax.f32 %v609, 0.0
  %v832 = vmax.f32 %v611, 0.0
  %v833 = vmax.f32 %v613, 0.0
  %v834 = vmax.f32 %v615, 0.0
  %v835 = vmax.f32 %v619, 0.0
  %v836 = vmax.f32 %v621, 0.0
  %v837 = vmax.f32 %v623, 0.0
  %v838 = vmax.f32 %v625, 0.0
  %v839 = vmax.f32 %v629, 0.0
  %v840 = vmax.f32 %v631, 0.0
  %v841 = vmax.f32 %v633, 0.0
  %v842 = vmax.f32 %v635, 0.0
  %v843 = vmax.f32 %v639, 0.0
  %v844 = vmax.f32 %v641, 0.0
  %v845 = vmax.f32 %v643, 0.0
  %v846 = vmax.f32 %v645, 0.0
  %v847 = vmax.f32 %v649, 0.0
  %v848 = vmax.f32 %v651, 0.0
  %v849 = vmax.f32 %v653, 0.0
  %v850 = vmax.f32 %v655, 0.0
  %v851 = vmax.f32 %v659, 0.0
  %v852 = vmax.f32 %v661, 0.0
  %v853 = vmax.f32 %v663, 0.0
  %v854 = vmax.f32 %v665, 0.0
  %v855 = vmax.f32 %v669, 0.0
  %v856 = vmax.f32 %v671, 0.0
  %v857 = vmax.f32 %v673, 0.0
  %v858 = vmax.f32 %v675, 0.0
  %v859 = vmax.f32 %v679, 0.0
  %v860 = vmax.f32 %v681, 0.0
  %v861 = vmax.f32 %v683, 0.0
  %v862 = vmax.f32 %v685, 0.0
  %v863 = vmax.f32 %v689, 0.0
  %v864 = vmax.f32 %v691, 0.0
  %v865 = vmax.f32 %v693, 0.0
  %v866 = vmax.f32 %v695, 0.0
  %v867 = vmax.f32 %v699, 0.0
  %v868 = vmax.f32 %v701, 0.0
  %v869 = vmax.f32 %v703, 0.0
  %v870 = vmax.f32 %v705, 0.0
  %v871 = vmax.f32 %v709, 0.0
  %v872 = vmax.f32 %v711, 0.0
  %v873 = vmax.f32 %v713, 0.0
  %v874 = vmax.f32 %v715, 0.0
  %v875 = vmax.f32 %v719, 0.0
  %v876 = vmax.f32 %v721, 0.0
  %v877 = vmax.f32 %v723, 0.0
  %v878 = vmax.f32 %v725, 0.0
  %v879 = vmax.f32 %v729, 0.0
  %v880 = vmax.f32 %v731, 0.0
  %v881 = vmax.f32 %v733, 0.0
  %v882 = vmax.f32 %v735, 0.0
  %v883 = vmax.f32 %v739, 0.0
  %v884 = vmax.f32 %v741, 0.0
  %v885 = vmax.f32 %v743, 0.0
  %v886 = vmax.f32 %v745, 0.0
  %v887 = vmax.f32 %v749, 0.0
  %v888 = vmax.f32 %v751, 0.0
  %v889 = vmax.f32 %v753, 0.0
  %v890 = vmax.f32 %v755, 0.0
  %v891 = vmax.f32 %v759, 0.0
  %v892 = vmax.f32 %v761, 0.0
  %v893 = vmax.f32 %v763, 0.0
  %v894 = vmax.f32 %v765, 0.0
  %v895 = vld [vmem:[#allocation2] sm:$0xff]
  %v896 = vld [vmem:[#allocation2 + $0x8] sm:$0xff]
  %v897 = vld [vmem:[#allocation2 + $0x10] sm:$0xff]
  %v898 = vld [vmem:[#allocation2 + $0x18] sm:$0xff]
  %v899 = vld [vmem:[#allocation2 + $0x20] sm:$0xff]
  %v900 = vld [vmem:[#allocation2 + $0x28] sm:$0xff]
  %v901 = vld [vmem:[#allocation2 + $0x30] sm:$0xff]
  %v902 = vld [vmem:[#allocation2 + $0x38] sm:$0xff]
  %v903 = vld [vmem:[#allocation2 + $0x40] sm:$0xff]
  %v904 = vld [vmem:[#allocation2 + $0x48] sm:$0xff]
  %v905 = vld [vmem:[#allocation2 + $0x50] sm:$0xff]
  %v906 = vld [vmem:[#allocation2 + $0x58] sm:$0xff]
  %v907 = vld [vmem:[#allocation2 + $0x60] sm:$0xff]
  %v908 = vld [vmem:[#allocation2 + $0x68] sm:$0xff]
  %v909 = vld [vmem:[#allocation2 + $0x70] sm:$0xff]
  %v910 = vld [vmem:[#allocation2 + $0x78] sm:$0xff]
  %v911 = vld [vmem:[#allocation2 + $0x80] sm:$0xff]
  %v912 = vld [vmem:[#allocation2 + $0x88] sm:$0xff]
  %v913 = vld [vmem:[#allocation2 + $0x90] sm:$0xff]
  %v914 = vld [vmem:[#allocation2 + $0x98] sm:$0xff]
  %v915 = vld [vmem:[#allocation2 + $0xa0] sm:$0xff]
  %v916 = vld [vmem:[#allocation2 + $0xa8] sm:$0xff]
  %v917 = vld [vmem:[#allocation2 + $0xb0] sm:$0xff]
  %v918 = vld [vmem:[#allocation2 + $0xb8] sm:$0xff]
  %v919 = vld [vmem:[#allocation2 + $0xc0] sm:$0xff]
  %v920 = vld [vmem:[#allocation2 + $0xc8] sm:$0xff]
  %v921 = vld [vmem:[#allocation2 + $0xd0] sm:$0xff]
  %v922 = vld [vmem:[#allocation2 + $0xd8] sm:$0xff]
  %v923 = vld [vmem:[#allocation2 + $0xe0] sm:$0xff]
  %v924 = vld [vmem:[#allocation2 + $0xe8] sm:$0xff]
  %v925 = vld [vmem:[#allocation2 + $0xf0] sm:$0xff]
  %v926 = vld [vmem:[#allocation2 + $0xf8] sm:$0xff]
  %v927 = vld [vmem:[#allocation2 + $0x100] sm:$0xff]
  %v928 = vld [vmem:[#allocation2 + $0x108] sm:$0xff]
  %v929 = vld [vmem:[#allocation2 + $0x110] sm:$0xff]
  %v930 = vld [vmem:[#allocation2 + $0x118] sm:$0xff]
  %v931 = vld [vmem:[#allocation2 + $0x120] sm:$0xff]
  %v932 = vld [vmem:[#allocation2 + $0x128] sm:$0xff]
  %v933 = vld [vmem:[#allocation2 + $0x130] sm:$0xff]
  %v934 = vld [vmem:[#allocation2 + $0x138] sm:$0xff]
  %v935 = vld [vmem:[#allocation2 + $0x140] sm:$0xff]
  %v936 = vld [vmem:[#allocation2 + $0x148] sm:$0xff]
  %v937 = vld [vmem:[#allocation2 + $0x150] sm:$0xff]
  %v938 = vld [vmem:[#allocation2 + $0x158] sm:$0xff]
  %v939 = vld [vmem:[#allocation2 + $0x160] sm:$0xff]
  %v940 = vld [vmem:[#allocation2 + $0x168] sm:$0xff]
  %v941 = vld [vmem:[#allocation2 + $0x170] sm:$0xff]
  %v942 = vld [vmem:[#allocation2 + $0x178] sm:$0xff]
  %v943 = vld [vmem:[#allocation2 + $0x180] sm:$0xff]
  %v944 = vld [vmem:[#allocation2 + $0x188] sm:$0xff]
  %v945 = vld [vmem:[#allocation2 + $0x190] sm:$0xff]
  %v946 = vld [vmem:[#allocation2 + $0x198] sm:$0xff]
  %v947 = vld [vmem:[#allocation2 + $0x1a0] sm:$0xff]
  %v948 = vld [vmem:[#allocation2 + $0x1a8] sm:$0xff]
  %v949 = vld [vmem:[#allocation2 + $0x1b0] sm:$0xff]
  %v950 = vld [vmem:[#allocation2 + $0x1b8] sm:$0xff]
  %v951 = vld [vmem:[#allocation2 + $0x1c0] sm:$0xff]
  %v952 = vld [vmem:[#allocation2 + $0x1c8] sm:$0xff]
  %v953 = vld [vmem:[#allocation2 + $0x1d0] sm:$0xff]
  %v954 = vld [vmem:[#allocation2 + $0x1d8] sm:$0xff]
  %v955 = vld [vmem:[#allocation2 + $0x1e0] sm:$0xff]
  %v956 = vld [vmem:[#allocation2 + $0x1e8] sm:$0xff]
  %v957 = vld [vmem:[#allocation2 + $0x1f0] sm:$0xff]
  %v958 = vld [vmem:[#allocation2 + $0x1f8] sm:$0xff]
  %v959 = vadd.f32 %v767, %v768
  %960 = vadd.xlane.f32.xlu0 %v959
  %v961 = vpop.xlane.xlu0 %960
  %v962 = vadd.f32 %v769, %v770
  %963 = vadd.xlane.f32.xlu0 %v962
  %v964 = vpop.xlane.xlu0 %963
  %v965 = vadd.f32 %v771, %v772
  %966 = vadd.xlane.f32.xlu0 %v965
  %v967 = vpop.xlane.xlu0 %966
  %v968 = vadd.f32 %v773, %v774
  %969 = vadd.xlane.f32.xlu0 %v968
  %v970 = vpop.xlane.xlu0 %969
  %v971 = vadd.f32 %v775, %v776
  %972 = vadd.xlane.f32.xlu0 %v971
  %v973 = vpop.xlane.xlu0 %972
  %v974 = vadd.f32 %v777, %v778
  %975 = vadd.xlane.f32.xlu0 %v974
  %v976 = vpop.xlane.xlu0 %975
  %v977 = vadd.f32 %v779, %v780
  %978 = vadd.xlane.f32.xlu0 %v977
  %v979 = vpop.xlane.xlu0 %978
  %v980 = vadd.f32 %v781, %v782
  %981 = vadd.xlane.f32.xlu0 %v980
  %v982 = vpop.xlane.xlu0 %981
  %v983 = vadd.f32 %v783, %v784
  %984 = vadd.xlane.f32.xlu0 %v983
  %v985 = vpop.xlane.xlu0 %984
  %v986 = vadd.f32 %v785, %v786
  %987 = vadd.xlane.f32.xlu0 %v986
  %v988 = vpop.xlane.xlu0 %987
  %v989 = vadd.f32 %v787, %v788
  %990 = vadd.xlane.f32.xlu0 %v989
  %v991 = vpop.xlane.xlu0 %990
  %v992 = vadd.f32 %v789, %v790
  %993 = vadd.xlane.f32.xlu0 %v992
  %v994 = vpop.xlane.xlu0 %993
  %v995 = vadd.f32 %v791, %v792
  %996 = vadd.xlane.f32.xlu0 %v995
  %v997 = vpop.xlane.xlu0 %996
  %v998 = vadd.f32 %v793, %v794
  %999 = vadd.xlane.f32.xlu0 %v998
  %v1000 = vpop.xlane.xlu0 %999
  %v1001 = vadd.f32 %v795, %v796
  %1002 = vadd.xlane.f32.xlu0 %v1001
  %v1003 = vpop.xlane.xlu0 %1002
  %v1004 = vadd.f32 %v797, %v798
  %1005 = vadd.xlane.f32.xlu0 %v1004
  %v1006 = vpop.xlane.xlu0 %1005
  %v1007 = vadd.f32 %v799, %v800
  %1008 = vadd.xlane.f32.xlu0 %v1007
  %v1009 = vpop.xlane.xlu0 %1008
  %v1010 = vadd.f32 %v801, %v802
  %1011 = vadd.xlane.f32.xlu0 %v1010
  %v1012 = vpop.xlane.xlu0 %1011
  %v1013 = vadd.f32 %v803, %v804
  %1014 = vadd.xlane.f32.xlu0 %v1013
  %v1015 = vpop.xlane.xlu0 %1014
  %v1016 = vadd.f32 %v805, %v806
  %1017 = vadd.xlane.f32.xlu0 %v1016
  %v1018 = vpop.xlane.xlu0 %1017
  %v1019 = vadd.f32 %v807, %v808
  %1020 = vadd.xlane.f32.xlu0 %v1019
  %v1021 = vpop.xlane.xlu0 %1020
  %v1022 = vadd.f32 %v809, %v810
  %1023 = vadd.xlane.f32.xlu0 %v1022
  %v1024 = vpop.xlane.xlu0 %1023
  %v1025 = vadd.f32 %v811, %v812
  %1026 = vadd.xlane.f32.xlu0 %v1025
  %v1027 = vpop.xlane.xlu0 %1026
  %v1028 = vadd.f32 %v813, %v814
  %1029 = vadd.xlane.f32.xlu0 %v1028
  %v1030 = vpop.xlane.xlu0 %1029
  %v1031 = vadd.f32 %v815, %v816
  %1032 = vadd.xlane.f32.xlu0 %v1031
  %v1033 = vpop.xlane.xlu0 %1032
  %v1034 = vadd.f32 %v817, %v818
  %1035 = vadd.xlane.f32.xlu0 %v1034
  %v1036 = vpop.xlane.xlu0 %1035
  %v1037 = vadd.f32 %v819, %v820
  %1038 = vadd.xlane.f32.xlu0 %v1037
  %v1039 = vpop.xlane.xlu0 %1038
  %v1040 = vadd.f32 %v821, %v822
  %1041 = vadd.xlane.f32.xlu0 %v1040
  %v1042 = vpop.xlane.xlu0 %1041
  %v1043 = vadd.f32 %v823, %v824
  %1044 = vadd.xlane.f32.xlu0 %v1043
  %v1045 = vpop.xlane.xlu0 %1044
  %v1046 = vadd.f32 %v825, %v826
  %1047 = vadd.xlane.f32.xlu0 %v1046
  %v1048 = vpop.xlane.xlu0 %1047
  %v1049 = vadd.f32 %v827, %v828
  %1050 = vadd.xlane.f32.xlu0 %v1049
  %v1051 = vpop.xlane.xlu0 %1050
  %v1052 = vadd.f32 %v829, %v830
  %1053 = vadd.xlane.f32.xlu0 %v1052
  %v1054 = vpop.xlane.xlu0 %1053
  %v1055 = vadd.f32 %v831, %v832
  %1056 = vadd.xlane.f32.xlu0 %v1055
  %v1057 = vpop.xlane.xlu0 %1056
  %v1058 = vadd.f32 %v833, %v834
  %1059 = vadd.xlane.f32.xlu0 %v1058
  %v1060 = vpop.xlane.xlu0 %1059
  %v1061 = vadd.f32 %v835, %v836
  %1062 = vadd.xlane.f32.xlu0 %v1061
  %v1063 = vpop.xlane.xlu0 %1062
  %v1064 = vadd.f32 %v837, %v838
  %1065 = vadd.xlane.f32.xlu0 %v1064
  %v1066 = vpop.xlane.xlu0 %1065
  %v1067 = vadd.f32 %v839, %v840
  %1068 = vadd.xlane.f32.xlu0 %v1067
  %v1069 = vpop.xlane.xlu0 %1068
  %v1070 = vadd.f32 %v841, %v842
  %1071 = vadd.xlane.f32.xlu0 %v1070
  %v1072 = vpop.xlane.xlu0 %1071
  %v1073 = vadd.f32 %v843, %v844
  %1074 = vadd.xlane.f32.xlu0 %v1073
  %v1075 = vpop.xlane.xlu0 %1074
  %v1076 = vadd.f32 %v845, %v846
  %1077 = vadd.xlane.f32.xlu0 %v1076
  %v1078 = vpop.xlane.xlu0 %1077
  %v1079 = vadd.f32 %v847, %v848
  %1080 = vadd.xlane.f32.xlu0 %v1079
  %v1081 = vpop.xlane.xlu0 %1080
  %v1082 = vadd.f32 %v849, %v850
  %1083 = vadd.xlane.f32.xlu0 %v1082
  %v1084 = vpop.xlane.xlu0 %1083
  %v1085 = vadd.f32 %v851, %v852
  %1086 = vadd.xlane.f32.xlu0 %v1085
  %v1087 = vpop.xlane.xlu0 %1086
  %v1088 = vadd.f32 %v853, %v854
  %1089 = vadd.xlane.f32.xlu0 %v1088
  %v1090 = vpop.xlane.xlu0 %1089
  %v1091 = vadd.f32 %v855, %v856
  %1092 = vadd.xlane.f32.xlu0 %v1091
  %v1093 = vpop.xlane.xlu0 %1092
  %v1094 = vadd.f32 %v857, %v858
  %1095 = vadd.xlane.f32.xlu0 %v1094
  %v1096 = vpop.xlane.xlu0 %1095
  %v1097 = vadd.f32 %v859, %v860
  %1098 = vadd.xlane.f32.xlu0 %v1097
  %v1099 = vpop.xlane.xlu0 %1098
  %v1100 = vadd.f32 %v861, %v862
  %1101 = vadd.xlane.f32.xlu0 %v1100
  %v1102 = vpop.xlane.xlu0 %1101
  %v1103 = vadd.f32 %v863, %v864
  %1104 = vadd.xlane.f32.xlu0 %v1103
  %v1105 = vpop.xlane.xlu0 %1104
  %v1106 = vadd.f32 %v865, %v866
  %1107 = vadd.xlane.f32.xlu0 %v1106
  %v1108 = vpop.xlane.xlu0 %1107
  %v1109 = vadd.f32 %v867, %v868
  %1110 = vadd.xlane.f32.xlu0 %v1109
  %v1111 = vpop.xlane.xlu0 %1110
  %v1112 = vadd.f32 %v869, %v870
  %1113 = vadd.xlane.f32.xlu0 %v1112
  %v1114 = vpop.xlane.xlu0 %1113
  %v1115 = vadd.f32 %v871, %v872
  %1116 = vadd.xlane.f32.xlu0 %v1115
  %v1117 = vpop.xlane.xlu0 %1116
  %v1118 = vadd.f32 %v873, %v874
  %1119 = vadd.xlane.f32.xlu0 %v1118
  %v1120 = vpop.xlane.xlu0 %1119
  %v1121 = vadd.f32 %v875, %v876
  %1122 = vadd.xlane.f32.xlu0 %v1121
  %v1123 = vpop.xlane.xlu0 %1122
  %v1124 = vadd.f32 %v877, %v878
  %1125 = vadd.xlane.f32.xlu0 %v1124
  %v1126 = vpop.xlane.xlu0 %1125
  %v1127 = vadd.f32 %v879, %v880
  %1128 = vadd.xlane.f32.xlu0 %v1127
  %v1129 = vpop.xlane.xlu0 %1128
  %v1130 = vadd.f32 %v881, %v882
  %1131 = vadd.xlane.f32.xlu0 %v1130
  %v1132 = vpop.xlane.xlu0 %1131
  %v1133 = vadd.f32 %v883, %v884
  %1134 = vadd.xlane.f32.xlu0 %v1133
  %v1135 = vpop.xlane.xlu0 %1134
  %v1136 = vadd.f32 %v885, %v886
  %1137 = vadd.xlane.f32.xlu0 %v1136
  %v1138 = vpop.xlane.xlu0 %1137
  %v1139 = vadd.f32 %v887, %v888
  %1140 = vadd.xlane.f32.xlu0 %v1139
  %v1141 = vpop.xlane.xlu0 %1140
  %v1142 = vadd.f32 %v889, %v890
  %1143 = vadd.xlane.f32.xlu0 %v1142
  %v1144 = vpop.xlane.xlu0 %1143
  %v1145 = vadd.f32 %v891, %v892
  %1146 = vadd.xlane.f32.xlu0 %v1145
  %v1147 = vpop.xlane.xlu0 %1146
  %v1148 = vadd.f32 %v893, %v894
  %1149 = vadd.xlane.f32.xlu0 %v1148
  %v1150 = vpop.xlane.xlu0 %1149
  %v1151 = vadd.f32 %v895, %v961
  %v1152 = vadd.f32 %v896, %v964
  %v1153 = vadd.f32 %v897, %v967
  %v1154 = vadd.f32 %v898, %v970
  %v1155 = vadd.f32 %v899, %v973
  %v1156 = vadd.f32 %v900, %v976
  %v1157 = vadd.f32 %v901, %v979
  %v1158 = vadd.f32 %v902, %v982
  %v1159 = vadd.f32 %v903, %v985
  %v1160 = vadd.f32 %v904, %v988
  %v1161 = vadd.f32 %v905, %v991
  %v1162 = vadd.f32 %v906, %v994
  %v1163 = vadd.f32 %v907, %v997
  %v1164 = vadd.f32 %v908, %v1000
  %v1165 = vadd.f32 %v909, %v1003
  %v1166 = vadd.f32 %v910, %v1006
  %v1167 = vadd.f32 %v911, %v1009
  %v1168 = vadd.f32 %v912, %v1012
  %v1169 = vadd.f32 %v913, %v1015
  %v1170 = vadd.f32 %v914, %v1018
  %v1171 = vadd.f32 %v915, %v1021
  %v1172 = vadd.f32 %v916, %v1024
  %v1173 = vadd.f32 %v917, %v1027
  %v1174 = vadd.f32 %v918, %v1030
  %v1175 = vadd.f32 %v919, %v1033
  %v1176 = vadd.f32 %v920, %v1036
  %v1177 = vadd.f32 %v921, %v1039
  %v1178 = vadd.f32 %v922, %v1042
  %v1179 = vadd.f32 %v923, %v1045
  %v1180 = vadd.f32 %v924, %v1048
  %v1181 = vadd.f32 %v925, %v1051
  %v1182 = vadd.f32 %v926, %v1054
  %v1183 = vadd.f32 %v927, %v1057
  %v1184 = vadd.f32 %v928, %v1060
  %v1185 = vadd.f32 %v929, %v1063
  %v1186 = vadd.f32 %v930, %v1066
  %v1187 = vadd.f32 %v931, %v1069
  %v1188 = vadd.f32 %v932, %v1072
  %v1189 = vadd.f32 %v933, %v1075
  %v1190 = vadd.f32 %v934, %v1078
  %v1191 = vadd.f32 %v935, %v1081
  %v1192 = vadd.f32 %v936, %v1084
  %v1193 = vadd.f32 %v937, %v1087
  %v1194 = vadd.f32 %v938, %v1090
  %v1195 = vadd.f32 %v939, %v1093
  %v1196 = vadd.f32 %v940, %v1096
  %v1197 = vadd.f32 %v941, %v1099
  %v1198 = vadd.f32 %v942, %v1102
  %v1199 = vadd.f32 %v943, %v1105
  %v1200 = vadd.f32 %v944, %v1108
  %v1201 = vadd.f32 %v945, %v1111
  %v1202 = vadd.f32 %v946, %v1114
  %v1203 = vadd.f32 %v947, %v1117
  %v1204 = vadd.f32 %v948, %v1120
  %v1205 = vadd.f32 %v949, %v1123
  %v1206 = vadd.f32 %v950, %v1126
  %v1207 = vadd.f32 %v951, %v1129
  %v1208 = vadd.f32 %v952, %v1132
  %v1209 = vadd.f32 %v953, %v1135
  %v1210 = vadd.f32 %v954, %v1138
  %v1211 = vadd.f32 %v955, %v1141
  %v1212 = vadd.f32 %v956, %v1144
  %v1213 = vadd.f32 %v957, %v1147
  %v1214 = vadd.f32 %v958, %v1150
  %vm1215 = vcmask 7168
  %1216 = vst.msk [vmem:[#allocation2] sm:$0xff] %vm1215, %v1151
  %1217 = vst.msk [vmem:[#allocation2 + $0x8] sm:$0xff] %vm1215, %v1152
  %1218 = vst.msk [vmem:[#allocation2 + $0x10] sm:$0xff] %vm1215, %v1153
  %1219 = vst.msk [vmem:[#allocation2 + $0x18] sm:$0xff] %vm1215, %v1154
  %1220 = vst.msk [vmem:[#allocation2 + $0x20] sm:$0xff] %vm1215, %v1155
  %1221 = vst.msk [vmem:[#allocation2 + $0x28] sm:$0xff] %vm1215, %v1156
  %1222 = vst.msk [vmem:[#allocation2 + $0x30] sm:$0xff] %vm1215, %v1157
  %1223 = vst.msk [vmem:[#allocation2 + $0x38] sm:$0xff] %vm1215, %v1158
  %1224 = vst.msk [vmem:[#allocation2 + $0x40] sm:$0xff] %vm1215, %v1159
  %1225 = vst.msk [vmem:[#allocation2 + $0x48] sm:$0xff] %vm1215, %v1160
  %1226 = vst.msk [vmem:[#allocation2 + $0x50] sm:$0xff] %vm1215, %v1161
  %1227 = vst.msk [vmem:[#allocation2 + $0x58] sm:$0xff] %vm1215, %v1162
  %1228 = vst.msk [vmem:[#allocation2 + $0x60] sm:$0xff] %vm1215, %v1163
  %1229 = vst.msk [vmem:[#allocation2 + $0x68] sm:$0xff] %vm1215, %v1164
  %1230 = vst.msk [vmem:[#allocation2 + $0x70] sm:$0xff] %vm1215, %v1165
  %1231 = vst.msk [vmem:[#allocation2 + $0x78] sm:$0xff] %vm1215, %v1166
  %1232 = vst.msk [vmem:[#allocation2 + $0x80] sm:$0xff] %vm1215, %v1167
  %1233 = vst.msk [vmem:[#allocation2 + $0x88] sm:$0xff] %vm1215, %v1168
  %1234 = vst.msk [vmem:[#allocation2 + $0x90] sm:$0xff] %vm1215, %v1169
  %1235 = vst.msk [vmem:[#allocation2 + $0x98] sm:$0xff] %vm1215, %v1170
  %1236 = vst.msk [vmem:[#allocation2 + $0xa0] sm:$0xff] %vm1215, %v1171
  %1237 = vst.msk [vmem:[#allocation2 + $0xa8] sm:$0xff] %vm1215, %v1172
  %1238 = vst.msk [vmem:[#allocation2 + $0xb0] sm:$0xff] %vm1215, %v1173
  %1239 = vst.msk [vmem:[#allocation2 + $0xb8] sm:$0xff] %vm1215, %v1174
  %1240 = vst.msk [vmem:[#allocation2 + $0xc0] sm:$0xff] %vm1215, %v1175
  %1241 = vst.msk [vmem:[#allocation2 + $0xc8] sm:$0xff] %vm1215, %v1176
  %1242 = vst.msk [vmem:[#allocation2 + $0xd0] sm:$0xff] %vm1215, %v1177
  %1243 = vst.msk [vmem:[#allocation2 + $0xd8] sm:$0xff] %vm1215, %v1178
  %1244 = vst.msk [vmem:[#allocation2 + $0xe0] sm:$0xff] %vm1215, %v1179
  %1245 = vst.msk [vmem:[#allocation2 + $0xe8] sm:$0xff] %vm1215, %v1180
  %1246 = vst.msk [vmem:[#allocation2 + $0xf0] sm:$0xff] %vm1215, %v1181
  %1247 = vst.msk [vmem:[#allocation2 + $0xf8] sm:$0xff] %vm1215, %v1182
  %1248 = vst.msk [vmem:[#allocation2 + $0x100] sm:$0xff] %vm1215, %v1183
  %1249 = vst.msk [vmem:[#allocation2 + $0x108] sm:$0xff] %vm1215, %v1184
  %1250 = vst.msk [vmem:[#allocation2 + $0x110] sm:$0xff] %vm1215, %v1185
  %1251 = vst.msk [vmem:[#allocation2 + $0x118] sm:$0xff] %vm1215, %v1186
  %1252 = vst.msk [vmem:[#allocation2 + $0x120] sm:$0xff] %vm1215, %v1187
  %1253 = vst.msk [vmem:[#allocation2 + $0x128] sm:$0xff] %vm1215, %v1188
  %1254 = vst.msk [vmem:[#allocation2 + $0x130] sm:$0xff] %vm1215, %v1189
  %1255 = vst.msk [vmem:[#allocation2 + $0x138] sm:$0xff] %vm1215, %v1190
  %1256 = vst.msk [vmem:[#allocation2 + $0x140] sm:$0xff] %vm1215, %v1191
  %1257 = vst.msk [vmem:[#allocation2 + $0x148] sm:$0xff] %vm1215, %v1192
  %1258 = vst.msk [vmem:[#allocation2 + $0x150] sm:$0xff] %vm1215, %v1193
  %1259 = vst.msk [vmem:[#allocation2 + $0x158] sm:$0xff] %vm1215, %v1194
  %1260 = vst.msk [vmem:[#allocation2 + $0x160] sm:$0xff] %vm1215, %v1195
  %1261 = vst.msk [vmem:[#allocation2 + $0x168] sm:$0xff] %vm1215, %v1196
  %1262 = vst.msk [vmem:[#allocation2 + $0x170] sm:$0xff] %vm1215, %v1197
  %1263 = vst.msk [vmem:[#allocation2 + $0x178] sm:$0xff] %vm1215, %v1198
  %1264 = vst.msk [vmem:[#allocation2 + $0x180] sm:$0xff] %vm1215, %v1199
  %1265 = vst.msk [vmem:[#allocation2 + $0x188] sm:$0xff] %vm1215, %v1200
  %1266 = vst.msk [vmem:[#allocation2 + $0x190] sm:$0xff] %vm1215, %v1201
  %1267 = vst.msk [vmem:[#allocation2 + $0x198] sm:$0xff] %vm1215, %v1202
  %1268 = vst.msk [vmem:[#allocation2 + $0x1a0] sm:$0xff] %vm1215, %v1203
  %1269 = vst.msk [vmem:[#allocation2 + $0x1a8] sm:$0xff] %vm1215, %v1204
  %1270 = vst.msk [vmem:[#allocation2 + $0x1b0] sm:$0xff] %vm1215, %v1205
  %1271 = vst.msk [vmem:[#allocation2 + $0x1b8] sm:$0xff] %vm1215, %v1206
  %1272 = vst.msk [vmem:[#allocation2 + $0x1c0] sm:$0xff] %vm1215, %v1207
  %1273 = vst.msk [vmem:[#allocation2 + $0x1c8] sm:$0xff] %vm1215, %v1208
  %1274 = vst.msk [vmem:[#allocation2 + $0x1d0] sm:$0xff] %vm1215, %v1209
  %1275 = vst.msk [vmem:[#allocation2 + $0x1d8] sm:$0xff] %vm1215, %v1210
  %1276 = vst.msk [vmem:[#allocation2 + $0x1e0] sm:$0xff] %vm1215, %v1211
  %1277 = vst.msk [vmem:[#allocation2 + $0x1e8] sm:$0xff] %vm1215, %v1212
  %1278 = vst.msk [vmem:[#allocation2 + $0x1f0] sm:$0xff] %vm1215, %v1213
  %1279 = vst.msk [vmem:[#allocation2 + $0x1f8] sm:$0xff] %vm1215, %v1214
  %s1280 = sadd.s32 0, 2
  %s1281 = smul.addr %s1280, 4
  %s1282 = scalar_lea.vmem %s0, %s1281
  %v1283 = vld [vmem:[%s1282] sm:$0xff]
  %v1285 = vcombine.high %v1283, %v1283
  %v1287 = vpack.c.bf16 %v1283, %v1283
  %v1288 = vpack.c.bf16 %v1285, %v1285
  %v1290 = vsel %vm407, %v1287, 0
  %v1293 = vsel %vm407, %v1288, 0
  %1295 = vmatprep.subr.bf16.mxu0 %v1293
  %1296 = vmatpush1.bf16.msra.mxu0 %v1290
  %1297 = vmatprep.subr.bf16.mxu0 0
  %1298 = vmatpush1.bf16.msra.mxu0 0
  %1299 = vmatprep.subr.bf16.mxu0 0
  %1300 = vmatpush1.bf16.msra.mxu0 0
  %1301 = vmatprep.subr.bf16.mxu0 0
  %1302 = vmatpush1.bf16.msra.mxu0 0
  %1303 = vmatprep.subr.bf16.mxu0 0
  %1304 = vmatpush1.bf16.msra.mxu0 0
  %1305 = vmatprep.subr.bf16.mxu0 0
  %1306 = vmatpush1.bf16.msra.mxu0 0
  %1307 = vmatprep.subr.bf16.mxu0 0
  %1308 = vmatpush1.bf16.msra.mxu0 0
  %1309 = vmatprep.subr.bf16.mxu0 0
  %1310 = vmatpush1.bf16.msra.mxu0 0
  %1311 = vmatprep.subr.bf16.mxu0 0
  %1312 = vmatpush1.bf16.msra.mxu0 0
  %1313 = vmatprep.subr.bf16.mxu0 0
  %1314 = vmatpush1.bf16.msra.mxu0 0
  %1315 = vmatprep.subr.bf16.mxu0 0
  %1316 = vmatpush1.bf16.msra.mxu0 0
  %1317 = vmatprep.subr.bf16.mxu0 0
  %1318 = vmatpush1.bf16.msra.mxu0 0
  %1319 = vmatprep.subr.bf16.mxu0 0
  %1320 = vmatpush1.bf16.msra.mxu0 0
  %1321 = vmatprep.subr.bf16.mxu0 0
  %1322 = vmatpush1.bf16.msra.mxu0 0
  %1323 = vmatprep.subr.bf16.mxu0 0
  %1324 = vmatpush1.bf16.msra.mxu0 0
  %1325 = vmatprep.subr.bf16.mxu0 0
  %1326 = vmatpush1.bf16.msra.mxu0 0
  %1327 = vmatprep.mubr.bf16.mxu0 0
  %1328 = vmatmul.mubr.bf16.gmra.mrb[0].mxu0 %v312
  %v1329 = vpop.f32.mrb[0].mxu0
  %v1330 = vadd.f32 0.0, %v1329
  %v1331 = vpop.f32.mrb[0].mxu0
  %v1332 = vadd.f32 0.0, %v1331
  %v1333 = vpop.f32.mrb[0].mxu0
  %v1334 = vadd.f32 0.0, %v1333
  %v1335 = vpop.f32.mrb[0].mxu0
  %v1336 = vadd.f32 0.0, %v1335
  %1337 = vmatprep.mubr.bf16.mxu0 0
  %1338 = vmatmul.mubr.bf16.gmra.mrb[0].mxu0 %v315
  %v1339 = vpop.f32.mrb[0].mxu0
  %v1340 = vadd.f32 0.0, %v1339
  %v1341 = vpop.f32.mrb[0].mxu0
  %v1342 = vadd.f32 0.0, %v1341
  %v1343 = vpop.f32.mrb[0].mxu0
  %v1344 = vadd.f32 0.0, %v1343
  %v1345 = vpop.f32.mrb[0].mxu0
  %v1346 = vadd.f32 0.0, %v1345
  %1347 = vmatprep.mubr.bf16.mxu0 0
  %1348 = vmatmul.mubr.bf16.gmra.mrb[0].mxu0 %v318
  %v1349 = vpop.f32.mrb[0].mxu0
  %v1350 = vadd.f32 0.0, %v1349
  %v1351 = vpop.f32.mrb[0].mxu0
  %v1352 = vadd.f32 0.0, %v1351
  %v1353 = vpop.f32.mrb[0].mxu0
  %v1354 = vadd.f32 0.0, %v1353
  %v1355 = vpop.f32.mrb[0].mxu0
  %v1356 = vadd.f32 0.0, %v1355
  %1357 = vmatprep.mubr.bf16.mxu0 0
  %1358 = vmatmul.mubr.bf16.gmra.mrb[0].mxu0 %v321
  %v1359 = vpop.f32.mrb[0].mxu0
  %v1360 = vadd.f32 0.0, %v1359
  %v1361 = vpop.f32.mrb[0].mxu0
  %v1362 = vadd.f32 0.0, %v1361
  %v1363 = vpop.f32.mrb[0].mxu0
  %v1364 = vadd.f32 0.0, %v1363
  %v1365 = vpop.f32.mrb[0].mxu0
  %v1366 = vadd.f32 0.0, %v1365
  %1367 = vmatprep.mubr.bf16.mxu0 0
  %1368 = vmatmul.mubr.bf16.gmra.mrb[0].mxu0 %v324
  %v1369 = vpop.f32.mrb[0].mxu0
  %v1370 = vadd.f32 0.0, %v1369
  %v1371 = vpop.f32.mrb[0].mxu0
  %v1372 = vadd.f32 0.0, %v1371
  %v1373 = vpop.f32.mrb[0].mxu0
  %v1374 = vadd.f32 0.0, %v1373
  %v1375 = vpop.f32.mrb[0].mxu0
  %v1376 = vadd.f32 0.0, %v1375
  %1377 = vmatprep.mubr.bf16.mxu0 0
  %1378 = vmatmul.mubr.bf16.gmra.mrb[0].mxu0 %v327
  %v1379 = vpop.f32.mrb[0].mxu0
  %v1380 = vadd.f32 0.0, %v1379
  %v1381 = vpop.f32.mrb[0].mxu0
  %v1382 = vadd.f32 0.0, %v1381
  %v1383 = vpop.f32.mrb[0].mxu0
  %v1384 = vadd.f32 0.0, %v1383
  %v1385 = vpop.f32.mrb[0].mxu0
  %v1386 = vadd.f32 0.0, %v1385
  %1387 = vmatprep.mubr.bf16.mxu0 0
  %1388 = vmatmul.mubr.bf16.gmra.mrb[0].mxu0 %v330
  %v1389 = vpop.f32.mrb[0].mxu0
  %v1390 = vadd.f32 0.0, %v1389
  %v1391 = vpop.f32.mrb[0].mxu0
  %v1392 = vadd.f32 0.0, %v1391
  %v1393 = vpop.f32.mrb[0].mxu0
  %v1394 = vadd.f32 0.0, %v1393
  %v1395 = vpop.f32.mrb[0].mxu0
  %v1396 = vadd.f32 0.0, %v1395
  %1397 = vmatprep.mubr.bf16.mxu0 0
  %1398 = vmatmul.mubr.bf16.gmra.mrb[0].mxu0 %v333
  %v1399 = vpop.f32.mrb[0].mxu0
  %v1400 = vadd.f32 0.0, %v1399
  %v1401 = vpop.f32.mrb[0].mxu0
  %v1402 = vadd.f32 0.0, %v1401
  %v1403 = vpop.f32.mrb[0].mxu0
  %v1404 = vadd.f32 0.0, %v1403
  %v1405 = vpop.f32.mrb[0].mxu0
  %v1406 = vadd.f32 0.0, %v1405
  %1407 = vmatprep.mubr.bf16.mxu0 0
  %1408 = vmatmul.mubr.bf16.gmra.mrb[0].mxu0 %v336
  %v1409 = vpop.f32.mrb[0].mxu0
  %v1410 = vadd.f32 0.0, %v1409
  %v1411 = vpop.f32.mrb[0].mxu0
  %v1412 = vadd.f32 0.0, %v1411
  %v1413 = vpop.f32.mrb[0].mxu0
  %v1414 = vadd.f32 0.0, %v1413
  %v1415 = vpop.f32.mrb[0].mxu0
  %v1416 = vadd.f32 0.0, %v1415
  %1417 = vmatprep.mubr.bf16.mxu0 0
  %1418 = vmatmul.mubr.bf16.gmra.mrb[0].mxu0 %v339
  %v1419 = vpop.f32.mrb[0].mxu0
  %v1420 = vadd.f32 0.0, %v1419
  %v1421 = vpop.f32.mrb[0].mxu0
  %v1422 = vadd.f32 0.0, %v1421
  %v1423 = vpop.f32.mrb[0].mxu0
  %v1424 = vadd.f32 0.0, %v1423
  %v1425 = vpop.f32.mrb[0].mxu0
  %v1426 = vadd.f32 0.0, %v1425
  %1427 = vmatprep.mubr.bf16.mxu0 0
  %1428 = vmatmul.mubr.bf16.gmra.mrb[0].mxu0 %v342
  %v1429 = vpop.f32.mrb[0].mxu0
  %v1430 = vadd.f32 0.0, %v1429
  %v1431 = vpop.f32.mrb[0].mxu0
  %v1432 = vadd.f32 0.0, %v1431
  %v1433 = vpop.f32.mrb[0].mxu0
  %v1434 = vadd.f32 0.0, %v1433
  %v1435 = vpop.f32.mrb[0].mxu0
  %v1436 = vadd.f32 0.0, %v1435
  %1437 = vmatprep.mubr.bf16.mxu0 0
  %1438 = vmatmul.mubr.bf16.gmra.mrb[0].mxu0 %v345
  %v1439 = vpop.f32.mrb[0].mxu0
  %v1440 = vadd.f32 0.0, %v1439
  %v1441 = vpop.f32.mrb[0].mxu0
  %v1442 = vadd.f32 0.0, %v1441
  %v1443 = vpop.f32.mrb[0].mxu0
  %v1444 = vadd.f32 0.0, %v1443
  %v1445 = vpop.f32.mrb[0].mxu0
  %v1446 = vadd.f32 0.0, %v1445
  %1447 = vmatprep.mubr.bf16.mxu0 0
  %1448 = vmatmul.mubr.bf16.gmra.mrb[0].mxu0 %v348
  %v1449 = vpop.f32.mrb[0].mxu0
  %v1450 = vadd.f32 0.0, %v1449
  %v1451 = vpop.f32.mrb[0].mxu0
  %v1452 = vadd.f32 0.0, %v1451
  %v1453 = vpop.f32.mrb[0].mxu0
  %v1454 = vadd.f32 0.0, %v1453
  %v1455 = vpop.f32.mrb[0].mxu0
  %v1456 = vadd.f32 0.0, %v1455
  %1457 = vmatprep.mubr.bf16.mxu0 0
  %1458 = vmatmul.mubr.bf16.gmra.mrb[0].mxu0 %v351
  %v1459 = vpop.f32.mrb[0].mxu0
  %v1460 = vadd.f32 0.0, %v1459
  %v1461 = vpop.f32.mrb[0].mxu0
  %v1462 = vadd.f32 0.0, %v1461
  %v1463 = vpop.f32.mrb[0].mxu0
  %v1464 = vadd.f32 0.0, %v1463
  %v1465 = vpop.f32.mrb[0].mxu0
  %v1466 = vadd.f32 0.0, %v1465
  %1467 = vmatprep.mubr.bf16.mxu0 0
  %1468 = vmatmul.mubr.bf16.gmra.mrb[0].mxu0 %v354
  %v1469 = vpop.f32.mrb[0].mxu0
  %v1470 = vadd.f32 0.0, %v1469
  %v1471 = vpop.f32.mrb[0].mxu0
  %v1472 = vadd.f32 0.0, %v1471
  %v1473 = vpop.f32.mrb[0].mxu0
  %v1474 = vadd.f32 0.0, %v1473
  %v1475 = vpop.f32.mrb[0].mxu0
  %v1476 = vadd.f32 0.0, %v1475
  %1477 = vmatprep.mubr.bf16.mxu0 0
  %1478 = vmatmul.mubr.bf16.gmra.mrb[0].mxu0 %v357
  %v1479 = vpop.f32.mrb[0].mxu0
  %v1480 = vadd.f32 0.0, %v1479
  %v1481 = vpop.f32.mrb[0].mxu0
  %v1482 = vadd.f32 0.0, %v1481
  %v1483 = vpop.f32.mrb[0].mxu0
  %v1484 = vadd.f32 0.0, %v1483
  %v1485 = vpop.f32.mrb[0].mxu0
  %v1486 = vadd.f32 0.0, %v1485
  %1487 = vmatprep.mubr.bf16.mxu0 0
  %1488 = vmatmul.mubr.bf16.gmra.mrb[0].mxu0 %v360
  %v1489 = vpop.f32.mrb[0].mxu0
  %v1490 = vadd.f32 0.0, %v1489
  %v1491 = vpop.f32.mrb[0].mxu0
  %v1492 = vadd.f32 0.0, %v1491
  %v1493 = vpop.f32.mrb[0].mxu0
  %v1494 = vadd.f32 0.0, %v1493
  %v1495 = vpop.f32.mrb[0].mxu0
  %v1496 = vadd.f32 0.0, %v1495
  %1497 = vmatprep.mubr.bf16.mxu0 0
  %1498 = vmatmul.mubr.bf16.gmra.mrb[0].mxu0 %v363
  %v1499 = vpop.f32.mrb[0].mxu0
  %v1500 = vadd.f32 0.0, %v1499
  %v1501 = vpop.f32.mrb[0].mxu0
  %v1502 = vadd.f32 0.0, %v1501
  %v1503 = vpop.f32.mrb[0].mxu0
  %v1504 = vadd.f32 0.0, %v1503
  %v1505 = vpop.f32.mrb[0].mxu0
  %v1506 = vadd.f32 0.0, %v1505
  %1507 = vmatprep.mubr.bf16.mxu0 0
  %1508 = vmatmul.mubr.bf16.gmra.mrb[0].mxu0 %v366
  %v1509 = vpop.f32.mrb[0].mxu0
  %v1510 = vadd.f32 0.0, %v1509
  %v1511 = vpop.f32.mrb[0].mxu0
  %v1512 = vadd.f32 0.0, %v1511
  %v1513 = vpop.f32.mrb[0].mxu0
  %v1514 = vadd.f32 0.0, %v1513
  %v1515 = vpop.f32.mrb[0].mxu0
  %v1516 = vadd.f32 0.0, %v1515
  %1517 = vmatprep.mubr.bf16.mxu0 0
  %1518 = vmatmul.mubr.bf16.gmra.mrb[0].mxu0 %v369
  %v1519 = vpop.f32.mrb[0].mxu0
  %v1520 = vadd.f32 0.0, %v1519
  %v1521 = vpop.f32.mrb[0].mxu0
  %v1522 = vadd.f32 0.0, %v1521
  %v1523 = vpop.f32.mrb[0].mxu0
  %v1524 = vadd.f32 0.0, %v1523
  %v1525 = vpop.f32.mrb[0].mxu0
  %v1526 = vadd.f32 0.0, %v1525
  %1527 = vmatprep.mubr.bf16.mxu0 0
  %1528 = vmatmul.mubr.bf16.gmra.mrb[0].mxu0 %v372
  %v1529 = vpop.f32.mrb[0].mxu0
  %v1530 = vadd.f32 0.0, %v1529
  %v1531 = vpop.f32.mrb[0].mxu0
  %v1532 = vadd.f32 0.0, %v1531
  %v1533 = vpop.f32.mrb[0].mxu0
  %v1534 = vadd.f32 0.0, %v1533
  %v1535 = vpop.f32.mrb[0].mxu0
  %v1536 = vadd.f32 0.0, %v1535
  %1537 = vmatprep.mubr.bf16.mxu0 0
  %1538 = vmatmul.mubr.bf16.gmra.mrb[0].mxu0 %v375
  %v1539 = vpop.f32.mrb[0].mxu0
  %v1540 = vadd.f32 0.0, %v1539
  %v1541 = vpop.f32.mrb[0].mxu0
  %v1542 = vadd.f32 0.0, %v1541
  %v1543 = vpop.f32.mrb[0].mxu0
  %v1544 = vadd.f32 0.0, %v1543
  %v1545 = vpop.f32.mrb[0].mxu0
  %v1546 = vadd.f32 0.0, %v1545
  %1547 = vmatprep.mubr.bf16.mxu0 0
  %1548 = vmatmul.mubr.bf16.gmra.mrb[0].mxu0 %v378
  %v1549 = vpop.f32.mrb[0].mxu0
  %v1550 = vadd.f32 0.0, %v1549
  %v1551 = vpop.f32.mrb[0].mxu0
  %v1552 = vadd.f32 0.0, %v1551
  %v1553 = vpop.f32.mrb[0].mxu0
  %v1554 = vadd.f32 0.0, %v1553
  %v1555 = vpop.f32.mrb[0].mxu0
  %v1556 = vadd.f32 0.0, %v1555
  %1557 = vmatprep.mubr.bf16.mxu0 0
  %1558 = vmatmul.mubr.bf16.gmra.mrb[0].mxu0 %v381
  %v1559 = vpop.f32.mrb[0].mxu0
  %v1560 = vadd.f32 0.0, %v1559
  %v1561 = vpop.f32.mrb[0].mxu0
  %v1562 = vadd.f32 0.0, %v1561
  %v1563 = vpop.f32.mrb[0].mxu0
  %v1564 = vadd.f32 0.0, %v1563
  %v1565 = vpop.f32.mrb[0].mxu0
  %v1566 = vadd.f32 0.0, %v1565
  %1567 = vmatprep.mubr.bf16.mxu0 0
  %1568 = vmatmul.mubr.bf16.gmra.mrb[0].mxu0 %v384
  %v1569 = vpop.f32.mrb[0].mxu0
  %v1570 = vadd.f32 0.0, %v1569
  %v1571 = vpop.f32.mrb[0].mxu0
  %v1572 = vadd.f32 0.0, %v1571
  %v1573 = vpop.f32.mrb[0].mxu0
  %v1574 = vadd.f32 0.0, %v1573
  %v1575 = vpop.f32.mrb[0].mxu0
  %v1576 = vadd.f32 0.0, %v1575
  %1577 = vmatprep.mubr.bf16.mxu0 0
  %1578 = vmatmul.mubr.bf16.gmra.mrb[0].mxu0 %v387
  %v1579 = vpop.f32.mrb[0].mxu0
  %v1580 = vadd.f32 0.0, %v1579
  %v1581 = vpop.f32.mrb[0].mxu0
  %v1582 = vadd.f32 0.0, %v1581
  %v1583 = vpop.f32.mrb[0].mxu0
  %v1584 = vadd.f32 0.0, %v1583
  %v1585 = vpop.f32.mrb[0].mxu0
  %v1586 = vadd.f32 0.0, %v1585
  %1587 = vmatprep.mubr.bf16.mxu0 0
  %1588 = vmatmul.mubr.bf16.gmra.mrb[0].mxu0 %v390
  %v1589 = vpop.f32.mrb[0].mxu0
  %v1590 = vadd.f32 0.0, %v1589
  %v1591 = vpop.f32.mrb[0].mxu0
  %v1592 = vadd.f32 0.0, %v1591
  %v1593 = vpop.f32.mrb[0].mxu0
  %v1594 = vadd.f32 0.0, %v1593
  %v1595 = vpop.f32.mrb[0].mxu0
  %v1596 = vadd.f32 0.0, %v1595
  %1597 = vmatprep.mubr.bf16.mxu0 0
  %1598 = vmatmul.mubr.bf16.gmra.mrb[0].mxu0 %v393
  %v1599 = vpop.f32.mrb[0].mxu0
  %v1600 = vadd.f32 0.0, %v1599
  %v1601 = vpop.f32.mrb[0].mxu0
  %v1602 = vadd.f32 0.0, %v1601
  %v1603 = vpop.f32.mrb[0].mxu0
  %v1604 = vadd.f32 0.0, %v1603
  %v1605 = vpop.f32.mrb[0].mxu0
  %v1606 = vadd.f32 0.0, %v1605
  %1607 = vmatprep.mubr.bf16.mxu0 0
  %1608 = vmatmul.mubr.bf16.gmra.mrb[0].mxu0 %v396
  %v1609 = vpop.f32.mrb[0].mxu0
  %v1610 = vadd.f32 0.0, %v1609
  %v1611 = vpop.f32.mrb[0].mxu0
  %v1612 = vadd.f32 0.0, %v1611
  %v1613 = vpop.f32.mrb[0].mxu0
  %v1614 = vadd.f32 0.0, %v1613
  %v1615 = vpop.f32.mrb[0].mxu0
  %v1616 = vadd.f32 0.0, %v1615
  %1617 = vmatprep.mubr.bf16.mxu0 0
  %1618 = vmatmul.mubr.bf16.gmra.mrb[0].mxu0 %v399
  %v1619 = vpop.f32.mrb[0].mxu0
  %v1620 = vadd.f32 0.0, %v1619
  %v1621 = vpop.f32.mrb[0].mxu0
  %v1622 = vadd.f32 0.0, %v1621
  %v1623 = vpop.f32.mrb[0].mxu0
  %v1624 = vadd.f32 0.0, %v1623
  %v1625 = vpop.f32.mrb[0].mxu0
  %v1626 = vadd.f32 0.0, %v1625
  %1627 = vmatprep.mubr.bf16.mxu0 0
  %1628 = vmatmul.mubr.bf16.gmra.mrb[0].mxu0 %v402
  %v1629 = vpop.f32.mrb[0].mxu0
  %v1630 = vadd.f32 0.0, %v1629
  %v1631 = vpop.f32.mrb[0].mxu0
  %v1632 = vadd.f32 0.0, %v1631
  %v1633 = vpop.f32.mrb[0].mxu0
  %v1634 = vadd.f32 0.0, %v1633
  %v1635 = vpop.f32.mrb[0].mxu0
  %v1636 = vadd.f32 0.0, %v1635
  %1637 = vmatprep.mubr.bf16.mxu0 0
  %1638 = vmatmul.mubr.bf16.gmra.mrb[0].mxu0 %v405
  %v1639 = vpop.f32.mrb[0].mxu0
  %v1640 = vadd.f32 0.0, %v1639
  %v1641 = vpop.f32.mrb[0].mxu0
  %v1642 = vadd.f32 0.0, %v1641
  %v1643 = vpop.f32.mrb[0].mxu0
  %v1644 = vadd.f32 0.0, %v1643
  %v1645 = vpop.f32.mrb[0].mxu0
  %v1646 = vadd.f32 0.0, %v1645
  %1647 = vdwg.mxu0
  %v1648 = vmax.f32 %v1330, 0.0
  %v1649 = vmax.f32 %v1332, 0.0
  %v1650 = vmax.f32 %v1334, 0.0
  %v1651 = vmax.f32 %v1336, 0.0
  %v1652 = vmax.f32 %v1340, 0.0
  %v1653 = vmax.f32 %v1342, 0.0
  %v1654 = vmax.f32 %v1344, 0.0
  %v1655 = vmax.f32 %v1346, 0.0
  %v1656 = vmax.f32 %v1350, 0.0
  %v1657 = vmax.f32 %v1352, 0.0
  %v1658 = vmax.f32 %v1354, 0.0
  %v1659 = vmax.f32 %v1356, 0.0
  %v1660 = vmax.f32 %v1360, 0.0
  %v1661 = vmax.f32 %v1362, 0.0
  %v1662 = vmax.f32 %v1364, 0.0
  %v1663 = vmax.f32 %v1366, 0.0
  %v1664 = vmax.f32 %v1370, 0.0
  %v1665 = vmax.f32 %v1372, 0.0
  %v1666 = vmax.f32 %v1374, 0.0
  %v1667 = vmax.f32 %v1376, 0.0
  %v1668 = vmax.f32 %v1380, 0.0
  %v1669 = vmax.f32 %v1382, 0.0
  %v1670 = vmax.f32 %v1384, 0.0
  %v1671 = vmax.f32 %v1386, 0.0
  %v1672 = vmax.f32 %v1390, 0.0
  %v1673 = vmax.f32 %v1392, 0.0
  %v1674 = vmax.f32 %v1394, 0.0
  %v1675 = vmax.f32 %v1396, 0.0
  %v1676 = vmax.f32 %v1400, 0.0
  %v1677 = vmax.f32 %v1402, 0.0
  %v1678 = vmax.f32 %v1404, 0.0
  %v1679 = vmax.f32 %v1406, 0.0
  %v1680 = vmax.f32 %v1410, 0.0
  %v1681 = vmax.f32 %v1412, 0.0
  %v1682 = vmax.f32 %v1414, 0.0
  %v1683 = vmax.f32 %v1416, 0.0
  %v1684 = vmax.f32 %v1420, 0.0
  %v1685 = vmax.f32 %v1422, 0.0
  %v1686 = vmax.f32 %v1424, 0.0
  %v1687 = vmax.f32 %v1426, 0.0
  %v1688 = vmax.f32 %v1430, 0.0
  %v1689 = vmax.f32 %v1432, 0.0
  %v1690 = vmax.f32 %v1434, 0.0
  %v1691 = vmax.f32 %v1436, 0.0
  %v1692 = vmax.f32 %v1440, 0.0
  %v1693 = vmax.f32 %v1442, 0.0
  %v1694 = vmax.f32 %v1444, 0.0
  %v1695 = vmax.f32 %v1446, 0.0
  %v1696 = vmax.f32 %v1450, 0.0
  %v1697 = vmax.f32 %v1452, 0.0
  %v1698 = vmax.f32 %v1454, 0.0
  %v1699 = vmax.f32 %v1456, 0.0
  %v1700 = vmax.f32 %v1460, 0.0
  %v1701 = vmax.f32 %v1462, 0.0
  %v1702 = vmax.f32 %v1464, 0.0
  %v1703 = vmax.f32 %v1466, 0.0
  %v1704 = vmax.f32 %v1470, 0.0
  %v1705 = vmax.f32 %v1472, 0.0
  %v1706 = vmax.f32 %v1474, 0.0
  %v1707 = vmax.f32 %v1476, 0.0
  %v1708 = vmax.f32 %v1480, 0.0
  %v1709 = vmax.f32 %v1482, 0.0
  %v1710 = vmax.f32 %v1484, 0.0
  %v1711 = vmax.f32 %v1486, 0.0
  %v1712 = vmax.f32 %v1490, 0.0
  %v1713 = vmax.f32 %v1492, 0.0
  %v1714 = vmax.f32 %v1494, 0.0
  %v1715 = vmax.f32 %v1496, 0.0
  %v1716 = vmax.f32 %v1500, 0.0
  %v1717 = vmax.f32 %v1502, 0.0
  %v1718 = vmax.f32 %v1504, 0.0
  %v1719 = vmax.f32 %v1506, 0.0
  %v1720 = vmax.f32 %v1510, 0.0
  %v1721 = vmax.f32 %v1512, 0.0
  %v1722 = vmax.f32 %v1514, 0.0
  %v1723 = vmax.f32 %v1516, 0.0
  %v1724 = vmax.f32 %v1520, 0.0
  %v1725 = vmax.f32 %v1522, 0.0
  %v1726 = vmax.f32 %v1524, 0.0
  %v1727 = vmax.f32 %v1526, 0.0
  %v1728 = vmax.f32 %v1530, 0.0
  %v1729 = vmax.f32 %v1532, 0.0
  %v1730 = vmax.f32 %v1534, 0.0
  %v1731 = vmax.f32 %v1536, 0.0
  %v1732 = vmax.f32 %v1540, 0.0
  %v1733 = vmax.f32 %v1542, 0.0
  %v1734 = vmax.f32 %v1544, 0.0
  %v1735 = vmax.f32 %v1546, 0.0
  %v1736 = vmax.f32 %v1550, 0.0
  %v1737 = vmax.f32 %v1552, 0.0
  %v1738 = vmax.f32 %v1554, 0.0
  %v1739 = vmax.f32 %v1556, 0.0
  %v1740 = vmax.f32 %v1560, 0.0
  %v1741 = vmax.f32 %v1562, 0.0
  %v1742 = vmax.f32 %v1564, 0.0
  %v1743 = vmax.f32 %v1566, 0.0
  %v1744 = vmax.f32 %v1570, 0.0
  %v1745 = vmax.f32 %v1572, 0.0
  %v1746 = vmax.f32 %v1574, 0.0
  %v1747 = vmax.f32 %v1576, 0.0
  %v1748 = vmax.f32 %v1580, 0.0
  %v1749 = vmax.f32 %v1582, 0.0
  %v1750 = vmax.f32 %v1584, 0.0
  %v1751 = vmax.f32 %v1586, 0.0
  %v1752 = vmax.f32 %v1590, 0.0
  %v1753 = vmax.f32 %v1592, 0.0
  %v1754 = vmax.f32 %v1594, 0.0
  %v1755 = vmax.f32 %v1596, 0.0
  %v1756 = vmax.f32 %v1600, 0.0
  %v1757 = vmax.f32 %v1602, 0.0
  %v1758 = vmax.f32 %v1604, 0.0
  %v1759 = vmax.f32 %v1606, 0.0
  %v1760 = vmax.f32 %v1610, 0.0
  %v1761 = vmax.f32 %v1612, 0.0
  %v1762 = vmax.f32 %v1614, 0.0
  %v1763 = vmax.f32 %v1616, 0.0
  %v1764 = vmax.f32 %v1620, 0.0
  %v1765 = vmax.f32 %v1622, 0.0
  %v1766 = vmax.f32 %v1624, 0.0
  %v1767 = vmax.f32 %v1626, 0.0
  %v1768 = vmax.f32 %v1630, 0.0
  %v1769 = vmax.f32 %v1632, 0.0
  %v1770 = vmax.f32 %v1634, 0.0
  %v1771 = vmax.f32 %v1636, 0.0
  %v1772 = vmax.f32 %v1640, 0.0
  %v1773 = vmax.f32 %v1642, 0.0
  %v1774 = vmax.f32 %v1644, 0.0
  %v1775 = vmax.f32 %v1646, 0.0
  %v1776 = vld [vmem:[#allocation2] sm:$0xff]
  %v1777 = vld [vmem:[#allocation2 + $0x8] sm:$0xff]
  %v1778 = vld [vmem:[#allocation2 + $0x10] sm:$0xff]
  %v1779 = vld [vmem:[#allocation2 + $0x18] sm:$0xff]
  %v1780 = vld [vmem:[#allocation2 + $0x20] sm:$0xff]
  %v1781 = vld [vmem:[#allocation2 + $0x28] sm:$0xff]
  %v1782 = vld [vmem:[#allocation2 + $0x30] sm:$0xff]
  %v1783 = vld [vmem:[#allocation2 + $0x38] sm:$0xff]
  %v1784 = vld [vmem:[#allocation2 + $0x40] sm:$0xff]
  %v1785 = vld [vmem:[#allocation2 + $0x48] sm:$0xff]
  %v1786 = vld [vmem:[#allocation2 + $0x50] sm:$0xff]
  %v1787 = vld [vmem:[#allocation2 + $0x58] sm:$0xff]
  %v1788 = vld [vmem:[#allocation2 + $0x60] sm:$0xff]
  %v1789 = vld [vmem:[#allocation2 + $0x68] sm:$0xff]
  %v1790 = vld [vmem:[#allocation2 + $0x70] sm:$0xff]
  %v1791 = vld [vmem:[#allocation2 + $0x78] sm:$0xff]
  %v1792 = vld [vmem:[#allocation2 + $0x80] sm:$0xff]
  %v1793 = vld [vmem:[#allocation2 + $0x88] sm:$0xff]
  %v1794 = vld [vmem:[#allocation2 + $0x90] sm:$0xff]
  %v1795 = vld [vmem:[#allocation2 + $0x98] sm:$0xff]
  %v1796 = vld [vmem:[#allocation2 + $0xa0] sm:$0xff]
  %v1797 = vld [vmem:[#allocation2 + $0xa8] sm:$0xff]
  %v1798 = vld [vmem:[#allocation2 + $0xb0] sm:$0xff]
  %v1799 = vld [vmem:[#allocation2 + $0xb8] sm:$0xff]
  %v1800 = vld [vmem:[#allocation2 + $0xc0] sm:$0xff]
  %v1801 = vld [vmem:[#allocation2 + $0xc8] sm:$0xff]
  %v1802 = vld [vmem:[#allocation2 + $0xd0] sm:$0xff]
  %v1803 = vld [vmem:[#allocation2 + $0xd8] sm:$0xff]
  %v1804 = vld [vmem:[#allocation2 + $0xe0] sm:$0xff]
  %v1805 = vld [vmem:[#allocation2 + $0xe8] sm:$0xff]
  %v1806 = vld [vmem:[#allocation2 + $0xf0] sm:$0xff]
  %v1807 = vld [vmem:[#allocation2 + $0xf8] sm:$0xff]
  %v1808 = vld [vmem:[#allocation2 + $0x100] sm:$0xff]
  %v1809 = vld [vmem:[#allocation2 + $0x108] sm:$0xff]
  %v1810 = vld [vmem:[#allocation2 + $0x110] sm:$0xff]
  %v1811 = vld [vmem:[#allocation2 + $0x118] sm:$0xff]
  %v1812 = vld [vmem:[#allocation2 + $0x120] sm:$0xff]
  %v1813 = vld [vmem:[#allocation2 + $0x128] sm:$0xff]
  %v1814 = vld [vmem:[#allocation2 + $0x130] sm:$0xff]
  %v1815 = vld [vmem:[#allocation2 + $0x138] sm:$0xff]
  %v1816 = vld [vmem:[#allocation2 + $0x140] sm:$0xff]
  %v1817 = vld [vmem:[#allocation2 + $0x148] sm:$0xff]
  %v1818 = vld [vmem:[#allocation2 + $0x150] sm:$0xff]
  %v1819 = vld [vmem:[#allocation2 + $0x158] sm:$0xff]
  %v1820 = vld [vmem:[#allocation2 + $0x160] sm:$0xff]
  %v1821 = vld [vmem:[#allocation2 + $0x168] sm:$0xff]
  %v1822 = vld [vmem:[#allocation2 + $0x170] sm:$0xff]
  %v1823 = vld [vmem:[#allocation2 + $0x178] sm:$0xff]
  %v1824 = vld [vmem:[#allocation2 + $0x180] sm:$0xff]
  %v1825 = vld [vmem:[#allocation2 + $0x188] sm:$0xff]
  %v1826 = vld [vmem:[#allocation2 + $0x190] sm:$0xff]
  %v1827 = vld [vmem:[#allocation2 + $0x198] sm:$0xff]
  %v1828 = vld [vmem:[#allocation2 + $0x1a0] sm:$0xff]
  %v1829 = vld [vmem:[#allocation2 + $0x1a8] sm:$0xff]
  %v1830 = vld [vmem:[#allocation2 + $0x1b0] sm:$0xff]
  %v1831 = vld [vmem:[#allocation2 + $0x1b8] sm:$0xff]
  %v1832 = vld [vmem:[#allocation2 + $0x1c0] sm:$0xff]
  %v1833 = vld [vmem:[#allocation2 + $0x1c8] sm:$0xff]
  %v1834 = vld [vmem:[#allocation2 + $0x1d0] sm:$0xff]
  %v1835 = vld [vmem:[#allocation2 + $0x1d8] sm:$0xff]
  %v1836 = vld [vmem:[#allocation2 + $0x1e0] sm:$0xff]
  %v1837 = vld [vmem:[#allocation2 + $0x1e8] sm:$0xff]
  %v1838 = vld [vmem:[#allocation2 + $0x1f0] sm:$0xff]
  %v1839 = vld [vmem:[#allocation2 + $0x1f8] sm:$0xff]
  %v1840 = vadd.f32 %v1648, %v1649
  %1841 = vadd.xlane.f32.xlu0 %v1840
  %v1842 = vpop.xlane.xlu0 %1841
  %v1843 = vadd.f32 %v1650, %v1651
  %1844 = vadd.xlane.f32.xlu0 %v1843
  %v1845 = vpop.xlane.xlu0 %1844
  %v1846 = vadd.f32 %v1652, %v1653
  %1847 = vadd.xlane.f32.xlu0 %v1846
  %v1848 = vpop.xlane.xlu0 %1847
  %v1849 = vadd.f32 %v1654, %v1655
  %1850 = vadd.xlane.f32.xlu0 %v1849
  %v1851 = vpop.xlane.xlu0 %1850
  %v1852 = vadd.f32 %v1656, %v1657
  %1853 = vadd.xlane.f32.xlu0 %v1852
  %v1854 = vpop.xlane.xlu0 %1853
  %v1855 = vadd.f32 %v1658, %v1659
  %1856 = vadd.xlane.f32.xlu0 %v1855
  %v1857 = vpop.xlane.xlu0 %1856
  %v1858 = vadd.f32 %v1660, %v1661
  %1859 = vadd.xlane.f32.xlu0 %v1858
  %v1860 = vpop.xlane.xlu0 %1859
  %v1861 = vadd.f32 %v1662, %v1663
  %1862 = vadd.xlane.f32.xlu0 %v1861
  %v1863 = vpop.xlane.xlu0 %1862
  %v1864 = vadd.f32 %v1664, %v1665
  %1865 = vadd.xlane.f32.xlu0 %v1864
  %v1866 = vpop.xlane.xlu0 %1865
  %v1867 = vadd.f32 %v1666, %v1667
  %1868 = vadd.xlane.f32.xlu0 %v1867
  %v1869 = vpop.xlane.xlu0 %1868
  %v1870 = vadd.f32 %v1668, %v1669
  %1871 = vadd.xlane.f32.xlu0 %v1870
  %v1872 = vpop.xlane.xlu0 %1871
  %v1873 = vadd.f32 %v1670, %v1671
  %1874 = vadd.xlane.f32.xlu0 %v1873
  %v1875 = vpop.xlane.xlu0 %1874
  %v1876 = vadd.f32 %v1672, %v1673
  %1877 = vadd.xlane.f32.xlu0 %v1876
  %v1878 = vpop.xlane.xlu0 %1877
  %v1879 = vadd.f32 %v1674, %v1675
  %1880 = vadd.xlane.f32.xlu0 %v1879
  %v1881 = vpop.xlane.xlu0 %1880
  %v1882 = vadd.f32 %v1676, %v1677
  %1883 = vadd.xlane.f32.xlu0 %v1882
  %v1884 = vpop.xlane.xlu0 %1883
  %v1885 = vadd.f32 %v1678, %v1679
  %1886 = vadd.xlane.f32.xlu0 %v1885
  %v1887 = vpop.xlane.xlu0 %1886
  %v1888 = vadd.f32 %v1680, %v1681
  %1889 = vadd.xlane.f32.xlu0 %v1888
  %v1890 = vpop.xlane.xlu0 %1889
  %v1891 = vadd.f32 %v1682, %v1683
  %1892 = vadd.xlane.f32.xlu0 %v1891
  %v1893 = vpop.xlane.xlu0 %1892
  %v1894 = vadd.f32 %v1684, %v1685
  %1895 = vadd.xlane.f32.xlu0 %v1894
  %v1896 = vpop.xlane.xlu0 %1895
  %v1897 = vadd.f32 %v1686, %v1687
  %1898 = vadd.xlane.f32.xlu0 %v1897
  %v1899 = vpop.xlane.xlu0 %1898
  %v1900 = vadd.f32 %v1688, %v1689
  %1901 = vadd.xlane.f32.xlu0 %v1900
  %v1902 = vpop.xlane.xlu0 %1901
  %v1903 = vadd.f32 %v1690, %v1691
  %1904 = vadd.xlane.f32.xlu0 %v1903
  %v1905 = vpop.xlane.xlu0 %1904
  %v1906 = vadd.f32 %v1692, %v1693
  %1907 = vadd.xlane.f32.xlu0 %v1906
  %v1908 = vpop.xlane.xlu0 %1907
  %v1909 = vadd.f32 %v1694, %v1695
  %1910 = vadd.xlane.f32.xlu0 %v1909
  %v1911 = vpop.xlane.xlu0 %1910
  %v1912 = vadd.f32 %v1696, %v1697
  %1913 = vadd.xlane.f32.xlu0 %v1912
  %v1914 = vpop.xlane.xlu0 %1913
  %v1915 = vadd.f32 %v1698, %v1699
  %1916 = vadd.xlane.f32.xlu0 %v1915
  %v1917 = vpop.xlane.xlu0 %1916
  %v1918 = vadd.f32 %v1700, %v1701
  %1919 = vadd.xlane.f32.xlu0 %v1918
  %v1920 = vpop.xlane.xlu0 %1919
  %v1921 = vadd.f32 %v1702, %v1703
  %1922 = vadd.xlane.f32.xlu0 %v1921
  %v1923 = vpop.xlane.xlu0 %1922
  %v1924 = vadd.f32 %v1704, %v1705
  %1925 = vadd.xlane.f32.xlu0 %v1924
  %v1926 = vpop.xlane.xlu0 %1925
  %v1927 = vadd.f32 %v1706, %v1707
  %1928 = vadd.xlane.f32.xlu0 %v1927
  %v1929 = vpop.xlane.xlu0 %1928
  %v1930 = vadd.f32 %v1708, %v1709
  %1931 = vadd.xlane.f32.xlu0 %v1930
  %v1932 = vpop.xlane.xlu0 %1931
  %v1933 = vadd.f32 %v1710, %v1711
  %1934 = vadd.xlane.f32.xlu0 %v1933
  %v1935 = vpop.xlane.xlu0 %1934
  %v1936 = vadd.f32 %v1712, %v1713
  %1937 = vadd.xlane.f32.xlu0 %v1936
  %v1938 = vpop.xlane.xlu0 %1937
  %v1939 = vadd.f32 %v1714, %v1715
  %1940 = vadd.xlane.f32.xlu0 %v1939
  %v1941 = vpop.xlane.xlu0 %1940
  %v1942 = vadd.f32 %v1716, %v1717
  %1943 = vadd.xlane.f32.xlu0 %v1942
  %v1944 = vpop.xlane.xlu0 %1943
  %v1945 = vadd.f32 %v1718, %v1719
  %1946 = vadd.xlane.f32.xlu0 %v1945
  %v1947 = vpop.xlane.xlu0 %1946
  %v1948 = vadd.f32 %v1720, %v1721
  %1949 = vadd.xlane.f32.xlu0 %v1948
  %v1950 = vpop.xlane.xlu0 %1949
  %v1951 = vadd.f32 %v1722, %v1723
  %1952 = vadd.xlane.f32.xlu0 %v1951
  %v1953 = vpop.xlane.xlu0 %1952
  %v1954 = vadd.f32 %v1724, %v1725
  %1955 = vadd.xlane.f32.xlu0 %v1954
  %v1956 = vpop.xlane.xlu0 %1955
  %v1957 = vadd.f32 %v1726, %v1727
  %1958 = vadd.xlane.f32.xlu0 %v1957
  %v1959 = vpop.xlane.xlu0 %1958
  %v1960 = vadd.f32 %v1728, %v1729
  %1961 = vadd.xlane.f32.xlu0 %v1960
  %v1962 = vpop.xlane.xlu0 %1961
  %v1963 = vadd.f32 %v1730, %v1731
  %1964 = vadd.xlane.f32.xlu0 %v1963
  %v1965 = vpop.xlane.xlu0 %1964
  %v1966 = vadd.f32 %v1732, %v1733
  %1967 = vadd.xlane.f32.xlu0 %v1966
  %v1968 = vpop.xlane.xlu0 %1967
  %v1969 = vadd.f32 %v1734, %v1735
  %1970 = vadd.xlane.f32.xlu0 %v1969
  %v1971 = vpop.xlane.xlu0 %1970
  %v1972 = vadd.f32 %v1736, %v1737
  %1973 = vadd.xlane.f32.xlu0 %v1972
  %v1974 = vpop.xlane.xlu0 %1973
  %v1975 = vadd.f32 %v1738, %v1739
  %1976 = vadd.xlane.f32.xlu0 %v1975
  %v1977 = vpop.xlane.xlu0 %1976
  %v1978 = vadd.f32 %v1740, %v1741
  %1979 = vadd.xlane.f32.xlu0 %v1978
  %v1980 = vpop.xlane.xlu0 %1979
  %v1981 = vadd.f32 %v1742, %v1743
  %1982 = vadd.xlane.f32.xlu0 %v1981
  %v1983 = vpop.xlane.xlu0 %1982
  %v1984 = vadd.f32 %v1744, %v1745
  %1985 = vadd.xlane.f32.xlu0 %v1984
  %v1986 = vpop.xlane.xlu0 %1985
  %v1987 = vadd.f32 %v1746, %v1747
  %1988 = vadd.xlane.f32.xlu0 %v1987
  %v1989 = vpop.xlane.xlu0 %1988
  %v1990 = vadd.f32 %v1748, %v1749
  %1991 = vadd.xlane.f32.xlu0 %v1990
  %v1992 = vpop.xlane.xlu0 %1991
  %v1993 = vadd.f32 %v1750, %v1751
  %1994 = vadd.xlane.f32.xlu0 %v1993
  %v1995 = vpop.xlane.xlu0 %1994
  %v1996 = vadd.f32 %v1752, %v1753
  %1997 = vadd.xlane.f32.xlu0 %v1996
  %v1998 = vpop.xlane.xlu0 %1997
  %v1999 = vadd.f32 %v1754, %v1755
  %2000 = vadd.xlane.f32.xlu0 %v1999
  %v2001 = vpop.xlane.xlu0 %2000
  %v2002 = vadd.f32 %v1756, %v1757
  %2003 = vadd.xlane.f32.xlu0 %v2002
  %v2004 = vpop.xlane.xlu0 %2003
  %v2005 = vadd.f32 %v1758, %v1759
  %2006 = vadd.xlane.f32.xlu0 %v2005
  %v2007 = vpop.xlane.xlu0 %2006
  %v2008 = vadd.f32 %v1760, %v1761
  %2009 = vadd.xlane.f32.xlu0 %v2008
  %v2010 = vpop.xlane.xlu0 %2009
  %v2011 = vadd.f32 %v1762, %v1763
  %2012 = vadd.xlane.f32.xlu0 %v2011
  %v2013 = vpop.xlane.xlu0 %2012
  %v2014 = vadd.f32 %v1764, %v1765
  %2015 = vadd.xlane.f32.xlu0 %v2014
  %v2016 = vpop.xlane.xlu0 %2015
  %v2017 = vadd.f32 %v1766, %v1767
  %2018 = vadd.xlane.f32.xlu0 %v2017
  %v2019 = vpop.xlane.xlu0 %2018
  %v2020 = vadd.f32 %v1768, %v1769
  %2021 = vadd.xlane.f32.xlu0 %v2020
  %v2022 = vpop.xlane.xlu0 %2021
  %v2023 = vadd.f32 %v1770, %v1771
  %2024 = vadd.xlane.f32.xlu0 %v2023
  %v2025 = vpop.xlane.xlu0 %2024
  %v2026 = vadd.f32 %v1772, %v1773
  %2027 = vadd.xlane.f32.xlu0 %v2026
  %v2028 = vpop.xlane.xlu0 %2027
  %v2029 = vadd.f32 %v1774, %v1775
  %2030 = vadd.xlane.f32.xlu0 %v2029
  %v2031 = vpop.xlane.xlu0 %2030
  %v2032 = vadd.f32 %v1776, %v1842
  %v2033 = vadd.f32 %v1777, %v1845
  %v2034 = vadd.f32 %v1778, %v1848
  %v2035 = vadd.f32 %v1779, %v1851
  %v2036 = vadd.f32 %v1780, %v1854
  %v2037 = vadd.f32 %v1781, %v1857
  %v2038 = vadd.f32 %v1782, %v1860
  %v2039 = vadd.f32 %v1783, %v1863
  %v2040 = vadd.f32 %v1784, %v1866
  %v2041 = vadd.f32 %v1785, %v1869
  %v2042 = vadd.f32 %v1786, %v1872
  %v2043 = vadd.f32 %v1787, %v1875
  %v2044 = vadd.f32 %v1788, %v1878
  %v2045 = vadd.f32 %v1789, %v1881
  %v2046 = vadd.f32 %v1790, %v1884
  %v2047 = vadd.f32 %v1791, %v1887
  %v2048 = vadd.f32 %v1792, %v1890
  %v2049 = vadd.f32 %v1793, %v1893
  %v2050 = vadd.f32 %v1794, %v1896
  %v2051 = vadd.f32 %v1795, %v1899
  %v2052 = vadd.f32 %v1796, %v1902
  %v2053 = vadd.f32 %v1797, %v1905
  %v2054 = vadd.f32 %v1798, %v1908
  %v2055 = vadd.f32 %v1799, %v1911
  %v2056 = vadd.f32 %v1800, %v1914
  %v2057 = vadd.f32 %v1801, %v1917
  %v2058 = vadd.f32 %v1802, %v1920
  %v2059 = vadd.f32 %v1803, %v1923
  %v2060 = vadd.f32 %v1804, %v1926
  %v2061 = vadd.f32 %v1805, %v1929
  %v2062 = vadd.f32 %v1806, %v1932
  %v2063 = vadd.f32 %v1807, %v1935
  %v2064 = vadd.f32 %v1808, %v1938
  %v2065 = vadd.f32 %v1809, %v1941
  %v2066 = vadd.f32 %v1810, %v1944
  %v2067 = vadd.f32 %v1811, %v1947
  %v2068 = vadd.f32 %v1812, %v1950
  %v2069 = vadd.f32 %v1813, %v1953
  %v2070 = vadd.f32 %v1814, %v1956
  %v2071 = vadd.f32 %v1815, %v1959
  %v2072 = vadd.f32 %v1816, %v1962
  %v2073 = vadd.f32 %v1817, %v1965
  %v2074 = vadd.f32 %v1818, %v1968
  %v2075 = vadd.f32 %v1819, %v1971
  %v2076 = vadd.f32 %v1820, %v1974
  %v2077 = vadd.f32 %v1821, %v1977
  %v2078 = vadd.f32 %v1822, %v1980
  %v2079 = vadd.f32 %v1823, %v1983
  %v2080 = vadd.f32 %v1824, %v1986
  %v2081 = vadd.f32 %v1825, %v1989
  %v2082 = vadd.f32 %v1826, %v1992
  %v2083 = vadd.f32 %v1827, %v1995
  %v2084 = vadd.f32 %v1828, %v1998
  %v2085 = vadd.f32 %v1829, %v2001
  %v2086 = vadd.f32 %v1830, %v2004
  %v2087 = vadd.f32 %v1831, %v2007
  %v2088 = vadd.f32 %v1832, %v2010
  %v2089 = vadd.f32 %v1833, %v2013
  %v2090 = vadd.f32 %v1834, %v2016
  %v2091 = vadd.f32 %v1835, %v2019
  %v2092 = vadd.f32 %v1836, %v2022
  %v2093 = vadd.f32 %v1837, %v2025
  %v2094 = vadd.f32 %v1838, %v2028
  %v2095 = vadd.f32 %v1839, %v2031
  %vm2096 = vcmask 15368
  %2097 = vst.msk [vmem:[#allocation2] sm:$0xff] %vm2096, %v2032
  %2098 = vst.msk [vmem:[#allocation2 + $0x8] sm:$0xff] %vm2096, %v2033
  %2099 = vst.msk [vmem:[#allocation2 + $0x10] sm:$0xff] %vm2096, %v2034
  %2100 = vst.msk [vmem:[#allocation2 + $0x18] sm:$0xff] %vm2096, %v2035
  %2101 = vst.msk [vmem:[#allocation2 + $0x20] sm:$0xff] %vm2096, %v2036
  %2102 = vst.msk [vmem:[#allocation2 + $0x28] sm:$0xff] %vm2096, %v2037
  %2103 = vst.msk [vmem:[#allocation2 + $0x30] sm:$0xff] %vm2096, %v2038
  %2104 = vst.msk [vmem:[#allocation2 + $0x38] sm:$0xff] %vm2096, %v2039
  %2105 = vst.msk [vmem:[#allocation2 + $0x40] sm:$0xff] %vm2096, %v2040
  %2106 = vst.msk [vmem:[#allocation2 + $0x48] sm:$0xff] %vm2096, %v2041
  %2107 = vst.msk [vmem:[#allocation2 + $0x50] sm:$0xff] %vm2096, %v2042
  %2108 = vst.msk [vmem:[#allocation2 + $0x58] sm:$0xff] %vm2096, %v2043
  %2109 = vst.msk [vmem:[#allocation2 + $0x60] sm:$0xff] %vm2096, %v2044
  %2110 = vst.msk [vmem:[#allocation2 + $0x68] sm:$0xff] %vm2096, %v2045
  %2111 = vst.msk [vmem:[#allocation2 + $0x70] sm:$0xff] %vm2096, %v2046
  %2112 = vst.msk [vmem:[#allocation2 + $0x78] sm:$0xff] %vm2096, %v2047
  %2113 = vst.msk [vmem:[#allocation2 + $0x80] sm:$0xff] %vm2096, %v2048
  %2114 = vst.msk [vmem:[#allocation2 + $0x88] sm:$0xff] %vm2096, %v2049
  %2115 = vst.msk [vmem:[#allocation2 + $0x90] sm:$0xff] %vm2096, %v2050
  %2116 = vst.msk [vmem:[#allocation2 + $0x98] sm:$0xff] %vm2096, %v2051
  %2117 = vst.msk [vmem:[#allocation2 + $0xa0] sm:$0xff] %vm2096, %v2052
  %2118 = vst.msk [vmem:[#allocation2 + $0xa8] sm:$0xff] %vm2096, %v2053
  %2119 = vst.msk [vmem:[#allocation2 + $0xb0] sm:$0xff] %vm2096, %v2054
  %2120 = vst.msk [vmem:[#allocation2 + $0xb8] sm:$0xff] %vm2096, %v2055
  %2121 = vst.msk [vmem:[#allocation2 + $0xc0] sm:$0xff] %vm2096, %v2056
  %2122 = vst.msk [vmem:[#allocation2 + $0xc8] sm:$0xff] %vm2096, %v2057
  %2123 = vst.msk [vmem:[#allocation2 + $0xd0] sm:$0xff] %vm2096, %v2058
  %2124 = vst.msk [vmem:[#allocation2 + $0xd8] sm:$0xff] %vm2096, %v2059
  %2125 = vst.msk [vmem:[#allocation2 + $0xe0] sm:$0xff] %vm2096, %v2060
  %2126 = vst.msk [vmem:[#allocation2 + $0xe8] sm:$0xff] %vm2096, %v2061
  %2127 = vst.msk [vmem:[#allocation2 + $0xf0] sm:$0xff] %vm2096, %v2062
  %2128 = vst.msk [vmem:[#allocation2 + $0xf8] sm:$0xff] %vm2096, %v2063
  %2129 = vst.msk [vmem:[#allocation2 + $0x100] sm:$0xff] %vm2096, %v2064
  %2130 = vst.msk [vmem:[#allocation2 + $0x108] sm:$0xff] %vm2096, %v2065
  %2131 = vst.msk [vmem:[#allocation2 + $0x110] sm:$0xff] %vm2096, %v2066
  %2132 = vst.msk [vmem:[#allocation2 + $0x118] sm:$0xff] %vm2096, %v2067
  %2133 = vst.msk [vmem:[#allocation2 + $0x120] sm:$0xff] %vm2096, %v2068
  %2134 = vst.msk [vmem:[#allocation2 + $0x128] sm:$0xff] %vm2096, %v2069
  %2135 = vst.msk [vmem:[#allocation2 + $0x130] sm:$0xff] %vm2096, %v2070
  %2136 = vst.msk [vmem:[#allocation2 + $0x138] sm:$0xff] %vm2096, %v2071
  %2137 = vst.msk [vmem:[#allocation2 + $0x140] sm:$0xff] %vm2096, %v2072
  %2138 = vst.msk [vmem:[#allocation2 + $0x148] sm:$0xff] %vm2096, %v2073
  %2139 = vst.msk [vmem:[#allocation2 + $0x150] sm:$0xff] %vm2096, %v2074
  %2140 = vst.msk [vmem:[#allocation2 + $0x158] sm:$0xff] %vm2096, %v2075
  %2141 = vst.msk [vmem:[#allocation2 + $0x160] sm:$0xff] %vm2096, %v2076
  %2142 = vst.msk [vmem:[#allocation2 + $0x168] sm:$0xff] %vm2096, %v2077
  %2143 = vst.msk [vmem:[#allocation2 + $0x170] sm:$0xff] %vm2096, %v2078
  %2144 = vst.msk [vmem:[#allocation2 + $0x178] sm:$0xff] %vm2096, %v2079
  %2145 = vst.msk [vmem:[#allocation2 + $0x180] sm:$0xff] %vm2096, %v2080
  %2146 = vst.msk [vmem:[#allocation2 + $0x188] sm:$0xff] %vm2096, %v2081
  %2147 = vst.msk [vmem:[#allocation2 + $0x190] sm:$0xff] %vm2096, %v2082
  %2148 = vst.msk [vmem:[#allocation2 + $0x198] sm:$0xff] %vm2096, %v2083
  %2149 = vst.msk [vmem:[#allocation2 + $0x1a0] sm:$0xff] %vm2096, %v2084
  %2150 = vst.msk [vmem:[#allocation2 + $0x1a8] sm:$0xff] %vm2096, %v2085
  %2151 = vst.msk [vmem:[#allocation2 + $0x1b0] sm:$0xff] %vm2096, %v2086
  %2152 = vst.msk [vmem:[#allocation2 + $0x1b8] sm:$0xff] %vm2096, %v2087
  %2153 = vst.msk [vmem:[#allocation2 + $0x1c0] sm:$0xff] %vm2096, %v2088
  %2154 = vst.msk [vmem:[#allocation2 + $0x1c8] sm:$0xff] %vm2096, %v2089
  %2155 = vst.msk [vmem:[#allocation2 + $0x1d0] sm:$0xff] %vm2096, %v2090
  %2156 = vst.msk [vmem:[#allocation2 + $0x1d8] sm:$0xff] %vm2096, %v2091
  %2157 = vst.msk [vmem:[#allocation2 + $0x1e0] sm:$0xff] %vm2096, %v2092
  %2158 = vst.msk [vmem:[#allocation2 + $0x1e8] sm:$0xff] %vm2096, %v2093
  %2159 = vst.msk [vmem:[#allocation2 + $0x1f0] sm:$0xff] %vm2096, %v2094
  %2160 = vst.msk [vmem:[#allocation2 + $0x1f8] sm:$0xff] %vm2096, %v2095
  // Predicated region
  $region14: #{byol_forward.2} parent=0 // pred_check
    %p2161 = pneg %p12
  $region15: #{byol_forward.2} parent=0 // pred_check_branch
    %2163 = sbr.rel (%p2161) target = $region17
  $region16: #{byol_forward.2} parent=0 // pred_region
    %v2164 = vld [vmem:[#allocation2] sm:$0xff]
    %v2165 = vld [vmem:[#allocation2 + $0x8] sm:$0xff]
    %v2166 = vld [vmem:[#allocation2 + $0x10] sm:$0xff]
    %v2167 = vld [vmem:[#allocation2 + $0x18] sm:$0xff]
    %v2168 = vld [vmem:[#allocation2 + $0x20] sm:$0xff]
    %v2169 = vld [vmem:[#allocation2 + $0x28] sm:$0xff]
    %v2170 = vld [vmem:[#allocation2 + $0x30] sm:$0xff]
    %v2171 = vld [vmem:[#allocation2 + $0x38] sm:$0xff]
    %v2172 = vld [vmem:[#allocation2 + $0x40] sm:$0xff]
    %v2173 = vld [vmem:[#allocation2 + $0x48] sm:$0xff]
    %v2174 = vld [vmem:[#allocation2 + $0x50] sm:$0xff]
    %v2175 = vld [vmem:[#allocation2 + $0x58] sm:$0xff]
    %v2176 = vld [vmem:[#allocation2 + $0x60] sm:$0xff]
    %v2177 = vld [vmem:[#allocation2 + $0x68] sm:$0xff]
    %v2178 = vld [vmem:[#allocation2 + $0x70] sm:$0xff]
    %v2179 = vld [vmem:[#allocation2 + $0x78] sm:$0xff]
    %v2180 = vld [vmem:[#allocation2 + $0x80] sm:$0xff]
    %v2181 = vld [vmem:[#allocation2 + $0x88] sm:$0xff]
    %v2182 = vld [vmem:[#allocation2 + $0x90] sm:$0xff]
    %v2183 = vld [vmem:[#allocation2 + $0x98] sm:$0xff]
    %v2184 = vld [vmem:[#allocation2 + $0xa0] sm:$0xff]
    %v2185 = vld [vmem:[#allocation2 + $0xa8] sm:$0xff]
    %v2186 = vld [vmem:[#allocation2 + $0xb0] sm:$0xff]
    %v2187 = vld [vmem:[#allocation2 + $0xb8] sm:$0xff]
    %v2188 = vld [vmem:[#allocation2 + $0xc0] sm:$0xff]
    %v2189 = vld [vmem:[#allocation2 + $0xc8] sm:$0xff]
    %v2190 = vld [vmem:[#allocation2 + $0xd0] sm:$0xff]
    %v2191 = vld [vmem:[#allocation2 + $0xd8] sm:$0xff]
    %v2192 = vld [vmem:[#allocation2 + $0xe0] sm:$0xff]
    %v2193 = vld [vmem:[#allocation2 + $0xe8] sm:$0xff]
    %v2194 = vld [vmem:[#allocation2 + $0xf0] sm:$0xff]
    %v2195 = vld [vmem:[#allocation2 + $0xf8] sm:$0xff]
    %v2196 = vld [vmem:[#allocation2 + $0x100] sm:$0xff]
    %v2197 = vld [vmem:[#allocation2 + $0x108] sm:$0xff]
    %v2198 = vld [vmem:[#allocation2 + $0x110] sm:$0xff]
    %v2199 = vld [vmem:[#allocation2 + $0x118] sm:$0xff]
    %v2200 = vld [vmem:[#allocation2 + $0x120] sm:$0xff]
    %v2201 = vld [vmem:[#allocation2 + $0x128] sm:$0xff]
    %v2202 = vld [vmem:[#allocation2 + $0x130] sm:$0xff]
    %v2203 = vld [vmem:[#allocation2 + $0x138] sm:$0xff]
    %v2204 = vld [vmem:[#allocation2 + $0x140] sm:$0xff]
    %v2205 = vld [vmem:[#allocation2 + $0x148] sm:$0xff]
    %v2206 = vld [vmem:[#allocation2 + $0x150] sm:$0xff]
    %v2207 = vld [vmem:[#allocation2 + $0x158] sm:$0xff]
    %v2208 = vld [vmem:[#allocation2 + $0x160] sm:$0xff]
    %v2209 = vld [vmem:[#allocation2 + $0x168] sm:$0xff]
    %v2210 = vld [vmem:[#allocation2 + $0x170] sm:$0xff]
    %v2211 = vld [vmem:[#allocation2 + $0x178] sm:$0xff]
    %v2212 = vld [vmem:[#allocation2 + $0x180] sm:$0xff]
    %v2213 = vld [vmem:[#allocation2 + $0x188] sm:$0xff]
    %v2214 = vld [vmem:[#allocation2 + $0x190] sm:$0xff]
    %v2215 = vld [vmem:[#allocation2 + $0x198] sm:$0xff]
    %v2216 = vld [vmem:[#allocation2 + $0x1a0] sm:$0xff]
    %v2217 = vld [vmem:[#allocation2 + $0x1a8] sm:$0xff]
    %v2218 = vld [vmem:[#allocation2 + $0x1b0] sm:$0xff]
    %v2219 = vld [vmem:[#allocation2 + $0x1b8] sm:$0xff]
    %v2220 = vld [vmem:[#allocation2 + $0x1c0] sm:$0xff]
    %v2221 = vld [vmem:[#allocation2 + $0x1c8] sm:$0xff]
    %v2222 = vld [vmem:[#allocation2 + $0x1d0] sm:$0xff]
    %v2223 = vld [vmem:[#allocation2 + $0x1d8] sm:$0xff]
    %v2224 = vld [vmem:[#allocation2 + $0x1e0] sm:$0xff]
    %v2225 = vld [vmem:[#allocation2 + $0x1e8] sm:$0xff]
    %v2226 = vld [vmem:[#allocation2 + $0x1f0] sm:$0xff]
    %v2227 = vld [vmem:[#allocation2 + $0x1f8] sm:$0xff]
    %2228 = vxpose.xlu0.b32.start [1/16] %v2164, 128
    %2229 = vxpose.xlu0.b32.cont [2/16] %v2165, 128
    %2230 = vxpose.xlu0.b32.cont [3/16] %v2166, 128
    %2231 = vxpose.xlu0.b32.cont [4/16] %v2167, 128
    %2232 = vxpose.xlu0.b32.cont [5/16] %v2168, 128
    %2233 = vxpose.xlu0.b32.cont [6/16] %v2169, 128
    %2234 = vxpose.xlu0.b32.cont [7/16] %v2170, 128
    %2235 = vxpose.xlu0.b32.cont [8/16] %v2171, 128
    %2236 = vxpose.xlu0.b32.cont [9/16] %v2172, 128
    %2237 = vxpose.xlu0.b32.cont [10/16] %v2173, 128
    %2238 = vxpose.xlu0.b32.cont [11/16] %v2174, 128
    %2239 = vxpose.xlu0.b32.cont [12/16] %v2175, 128
    %2240 = vxpose.xlu0.b32.cont [13/16] %v2176, 128
    %2241 = vxpose.xlu0.b32.cont [14/16] %v2177, 128
    %2242 = vxpose.xlu0.b32.cont [15/16] %v2178, 128
    %2243 = vxpose.xlu0.b32.end [16/16] %v2179, 128
    %v2244 = vpop.trf.xlu0
    %v2245 = vpop.trf.xlu0
    %v2246 = vpop.trf.xlu0
    %v2247 = vpop.trf.xlu0
    %v2248 = vpop.trf.xlu0
    %v2249 = vpop.trf.xlu0
    %v2250 = vpop.trf.xlu0
    %v2251 = vpop.trf.xlu0
    %v2252 = vpop.trf.xlu0
    %v2253 = vpop.trf.xlu0
    %v2254 = vpop.trf.xlu0
    %v2255 = vpop.trf.xlu0
    %v2256 = vpop.trf.xlu0
    %v2257 = vpop.trf.xlu0
    %v2258 = vpop.trf.xlu0
    %v2259 = vpop.trf.xlu0
    %2260 = vxpose.xlu0.b32.start [1/16] %v2180, 128
    %2261 = vxpose.xlu0.b32.cont [2/16] %v2181, 128
    %2262 = vxpose.xlu0.b32.cont [3/16] %v2182, 128
    %2263 = vxpose.xlu0.b32.cont [4/16] %v2183, 128
    %2264 = vxpose.xlu0.b32.cont [5/16] %v2184, 128
    %2265 = vxpose.xlu0.b32.cont [6/16] %v2185, 128
    %2266 = vxpose.xlu0.b32.cont [7/16] %v2186, 128
    %2267 = vxpose.xlu0.b32.cont [8/16] %v2187, 128
    %2268 = vxpose.xlu0.b32.cont [9/16] %v2188, 128
    %2269 = vxpose.xlu0.b32.cont [10/16] %v2189, 128
    %2270 = vxpose.xlu0.b32.cont [11/16] %v2190, 128
    %2271 = vxpose.xlu0.b32.cont [12/16] %v2191, 128
    %2272 = vxpose.xlu0.b32.cont [13/16] %v2192, 128
    %2273 = vxpose.xlu0.b32.cont [14/16] %v2193, 128
    %2274 = vxpose.xlu0.b32.cont [15/16] %v2194, 128
    %2275 = vxpose.xlu0.b32.end [16/16] %v2195, 128
    %v2276 = vpop.trf.xlu0
    %v2277 = vpop.trf.xlu0
    %v2278 = vpop.trf.xlu0
    %v2279 = vpop.trf.xlu0
    %v2280 = vpop.trf.xlu0
    %v2281 = vpop.trf.xlu0
    %v2282 = vpop.trf.xlu0
    %v2283 = vpop.trf.xlu0
    %v2284 = vpop.trf.xlu0
    %v2285 = vpop.trf.xlu0
    %v2286 = vpop.trf.xlu0
    %v2287 = vpop.trf.xlu0
    %v2288 = vpop.trf.xlu0
    %v2289 = vpop.trf.xlu0
    %v2290 = vpop.trf.xlu0
    %v2291 = vpop.trf.xlu0
    %2292 = vxpose.xlu0.b32.start [1/16] %v2196, 128
    %2293 = vxpose.xlu0.b32.cont [2/16] %v2197, 128
    %2294 = vxpose.xlu0.b32.cont [3/16] %v2198, 128
    %2295 = vxpose.xlu0.b32.cont [4/16] %v2199, 128
    %2296 = vxpose.xlu0.b32.cont [5/16] %v2200, 128
    %2297 = vxpose.xlu0.b32.cont [6/16] %v2201, 128
    %2298 = vxpose.xlu0.b32.cont [7/16] %v2202, 128
    %2299 = vxpose.xlu0.b32.cont [8/16] %v2203, 128
    %2300 = vxpose.xlu0.b32.cont [9/16] %v2204, 128
    %2301 = vxpose.xlu0.b32.cont [10/16] %v2205, 128
    %2302 = vxpose.xlu0.b32.cont [11/16] %v2206, 128
    %2303 = vxpose.xlu0.b32.cont [12/16] %v2207, 128
    %2304 = vxpose.xlu0.b32.cont [13/16] %v2208, 128
    %2305 = vxpose.xlu0.b32.cont [14/16] %v2209, 128
    %2306 = vxpose.xlu0.b32.cont [15/16] %v2210, 128
    %2307 = vxpose.xlu0.b32.end [16/16] %v2211, 128
    %v2308 = vpop.trf.xlu0
    %v2309 = vpop.trf.xlu0
    %v2310 = vpop.trf.xlu0
    %v2311 = vpop.trf.xlu0
    %v2312 = vpop.trf.xlu0
    %v2313 = vpop.trf.xlu0
    %v2314 = vpop.trf.xlu0
    %v2315 = vpop.trf.xlu0
    %v2316 = vpop.trf.xlu0
    %v2317 = vpop.trf.xlu0
    %v2318 = vpop.trf.xlu0
    %v2319 = vpop.trf.xlu0
    %v2320 = vpop.trf.xlu0
    %v2321 = vpop.trf.xlu0
    %v2322 = vpop.trf.xlu0
    %v2323 = vpop.trf.xlu0
    %2324 = vxpose.xlu0.b32.start [1/16] %v2212, 128
    %2325 = vxpose.xlu0.b32.cont [2/16] %v2213, 128
    %2326 = vxpose.xlu0.b32.cont [3/16] %v2214, 128
    %2327 = vxpose.xlu0.b32.cont [4/16] %v2215, 128
    %2328 = vxpose.xlu0.b32.cont [5/16] %v2216, 128
    %2329 = vxpose.xlu0.b32.cont [6/16] %v2217, 128
    %2330 = vxpose.xlu0.b32.cont [7/16] %v2218, 128
    %2331 = vxpose.xlu0.b32.cont [8/16] %v2219, 128
    %2332 = vxpose.xlu0.b32.cont [9/16] %v2220, 128
    %2333 = vxpose.xlu0.b32.cont [10/16] %v2221, 128
    %2334 = vxpose.xlu0.b32.cont [11/16] %v2222, 128
    %2335 = vxpose.xlu0.b32.cont [12/16] %v2223, 128
    %2336 = vxpose.xlu0.b32.cont [13/16] %v2224, 128
    %2337 = vxpose.xlu0.b32.cont [14/16] %v2225, 128
    %2338 = vxpose.xlu0.b32.cont [15/16] %v2226, 128
    %2339 = vxpose.xlu0.b32.end [16/16] %v2227, 128
    %v2340 = vpop.trf.xlu0
    %v2341 = vpop.trf.xlu0
    %v2342 = vpop.trf.xlu0
    %v2343 = vpop.trf.xlu0
    %v2344 = vpop.trf.xlu0
    %v2345 = vpop.trf.xlu0
    %v2346 = vpop.trf.xlu0
    %v2347 = vpop.trf.xlu0
    %v2348 = vpop.trf.xlu0
    %v2349 = vpop.trf.xlu0
    %v2350 = vpop.trf.xlu0
    %v2351 = vpop.trf.xlu0
    %v2352 = vpop.trf.xlu0
    %v2353 = vpop.trf.xlu0
    %v2354 = vpop.trf.xlu0
    %v2355 = vpop.trf.xlu0
    %v2356 = vmul.f32 %v2244, 0.00390625
    %v2357 = vmul.f32 %v2276, 0.00390625
    %v2358 = vmul.f32 %v2308, 0.00390625
    %v2359 = vmul.f32 %v2340, 0.00390625
    %v2364 = vcombine.low %v2356, %v2357
    %v2365 = vcombine.low %v2358, %v2359
    %v2367 = vunpack.c.l.s4 1983009808
    %v2368 = vunpack.c.0.s8 %v2367
    %v2369 = vlaneseq
    %v2370 = vshrl.u32 %v2369, 7
    %v2371 = vsub.s32 %v2368, %v2370
    %v2372 = vrot.slane %v2364, %v2371
    %v2374 = vunpack.c.l.s4 1983009808
    %v2375 = vunpack.c.0.s8 %v2374
    %v2376 = vlaneseq
    %v2377 = vshrl.u32 %v2376, 7
    %v2378 = vsub.s32 %v2375, %v2377
    %v2379 = vrot.slane %v2365, %v2378
    %v2380 = vcombine.low %v2372, %v2379
    %2382 = vst [vmem:[%s2] sm:$0xff] %v2380
  $region17: #{byol_forward.2} parent=0 // pred_fallthru
    _
  // Predicated region
  $region18: #{byol_forward.2} parent=0 // pred_check
    _
  $region19: #{byol_forward.2} parent=0 // pred_check_branch
    %2384 = sbr.rel (0) target = $region21
  $region20: #{byol_forward.2} parent=0 // pred_region
    _
  $region21: #{byol_forward.2} parent=0 // pred_fallthru
    _
  // Predicated region
  $region22: #{byol_forward.2} parent=0 // pred_check
    _
  $region23: #{byol_forward.2} parent=0 // pred_check_branch
    %2386 = sbr.rel (0) target = $region25
  $region24: #{byol_forward.2} parent=0 // pred_region
    _
  $region25: #{byol_forward.2} parent=0 // pred_fallthru
    _

// kernel: byol_forward.3
$region0: #{byol_forward.3}
  #allocation0 [shape = 'u32[]', space=smem, size = 0x4, offset = 0x4, fixed_abs, tag = 'smem constant byte address 0x4 - core index']
  #allocation1 [shape = 'u32[144,128]{1,0:T(1,128)}', space=vmem, size = 0x12000, scoped, tag = 'internal scratch']
  %s0 = inlined_call_operand.vmem [shape: f32[2,512], index: 0, kind: input, shape index: {}]
  %s1 = inlined_call_operand.hbm [shape: f32[512,1024], index: 1, kind: input, shape index: {}]
  %s2 = inlined_call_operand.hbm [shape: f32[1,1024], index: 2, kind: input, shape index: {}]
  %s3 = inlined_call_operand.hbm [shape: f32[1,1024], index: 3, kind: input, shape index: {}]
  %s4 = inlined_call_operand.hbm [shape: f32[1024,128], index: 4, kind: input, shape index: {}]
  %s5 = inlined_call_operand.hbm [shape: f32[1,128], index: 5, kind: input, shape index: {}]
  %s6 = inlined_call_operand.hbm [shape: f32[128,1024], index: 6, kind: input, shape index: {}]
  %s7 = inlined_call_operand.hbm [shape: f32[1,1024], index: 7, kind: input, shape index: {}]
  %s8 = inlined_call_operand.hbm [shape: f32[1,1024], index: 8, kind: input, shape index: {}]
  %s9 = inlined_call_operand.hbm [shape: f32[1024,128], index: 9, kind: input, shape index: {}]
  %s10 = inlined_call_operand.hbm [shape: f32[1,128], index: 10, kind: input, shape index: {}]
  %s11 = inlined_call_operand.hbm [shape: f32[2,128], index: 11, kind: output, shape index: {}]
  %s12 = sld [smem:[#allocation0]]
  $region94: #{byol_forward.3} parent=0
    _
  %s14 = ssub.s32 1, %s12
  %s15 = scalar_select 0, %s14, %s12
  $region1: #{byol_forward.3} parent=0
    #allocation2 [shape = 'u8[2097152]{0}', space=vmem, size = 0x200000, scoped, tag = 'input window, operand 1, single buffered']
    #allocation3 [shape = 's32[1]{0}', space=sflag, size = 0x4, scoped, tag = 'scoped memory for byol_forward.3']
    #allocation4 [shape = 's32[1]{0}', space=sflag, size = 0x4, scoped, tag = 'scoped memory for byol_forward.3']
    #allocation5 [shape = 'u8[4096]{0}', space=vmem, size = 0x1000, scoped, tag = 'input window, operand 2, single buffered']
    #allocation6 [shape = 's32[1]{0}', space=sflag, size = 0x4, scoped, tag = 'scoped memory for byol_forward.3']
    #allocation7 [shape = 'u8[4096]{0}', space=vmem, size = 0x1000, scoped, tag = 'input window, operand 3, single buffered']
    #allocation8 [shape = 'u8[524288]{0}', space=vmem, size = 0x80000, scoped, tag = 'input window, operand 4, single buffered']
    #allocation9 [shape = 's32[1]{0}', space=sflag, size = 0x4, scoped, tag = 'scoped memory for byol_forward.3']
    #allocation10 [shape = 'u8[512]{0}', space=vmem, size = 0x400, scoped, tag = 'input window, operand 5, single buffered']
    #allocation11 [shape = 'u8[524288]{0}', space=vmem, size = 0x80000, scoped, tag = 'input window, operand 6, single buffered']
    #allocation12 [shape = 's32[1]{0}', space=sflag, size = 0x4, scoped, tag = 'scoped memory for byol_forward.3']
    #allocation13 [shape = 'u8[4096]{0}', space=vmem, size = 0x1000, scoped, tag = 'input window, operand 7, single buffered']
    #allocation14 [shape = 'u8[4096]{0}', space=vmem, size = 0x1000, scoped, tag = 'input window, operand 8, single buffered']
    #allocation15 [shape = 's32[1]{0}', space=sflag, size = 0x4, scoped, tag = 'scoped memory for byol_forward.3']
    #allocation16 [shape = 'u8[524288]{0}', space=vmem, size = 0x80000, scoped, tag = 'input window, operand 9, single buffered']
    #allocation17 [shape = 'u8[512]{0}', space=vmem, size = 0x400, scoped, tag = 'input window, operand 10, single buffered']
    #allocation18 [shape = 's32[1]{0}', space=sflag, size = 0x4, scoped, tag = 'scoped memory for byol_forward.3']
    #allocation19 [shape = 'u8[1024]{0}', space=vmem, size = 0x400, scoped, tag = 'output window, operand 0, single buffered']
    %16 = vsyncpa [#allocation3], 0
    %17 = vsyncpa [#allocation6], 0
    %18 = vsyncpa [#allocation9], 0
    %19 = vsyncpa [#allocation12], 0
    %20 = vsyncpa [#allocation15], 0
    %21 = vsyncpa [#allocation18], 0
    %22 = vsyncpa [#allocation4], 0
    // Predicated region
    $region2: #{byol_forward.3} parent=1 // pred_check
      _
    $region3: #{byol_forward.3} parent=1 // pred_check_branch
      %24 = sbr.rel (0) target = $region5
    $region4: #{byol_forward.3} parent=1 // pred_region
      _
    $region5: #{byol_forward.3} parent=1 // pred_fallthru
      _
    // Predicated region
    $region6: #{byol_forward.3} parent=1 // pred_check
      _
    $region7: #{byol_forward.3} parent=1 // pred_check_branch
      %26 = sbr.rel (0) target = $region9
    $region8: #{byol_forward.3} parent=1 // pred_region
      %s28 = ssub.s32 65536, 65536
      %29 = vsyncadd [#allocation3], %s28
      %s30 = sshll.u32 [#allocation2], 4
      %s31 = int_to_ptr.vmem [resolvable:$true] %s30
      %36 = dma.hbm_to_vmem [thread:$0]  %s1, 65536, %s31, [#allocation3], 1024, 1024, 64
    $region9: #{byol_forward.3} parent=1 // pred_fallthru
      _
    // Predicated region
    $region10: #{byol_forward.3} parent=1 // pred_check
      _
    $region11: #{byol_forward.3} parent=1 // pred_check_branch
      %38 = sbr.rel (0) target = $region13
    $region12: #{byol_forward.3} parent=1 // pred_region
      %s40 = ssub.s32 128, 128
      %41 = vsyncadd [#allocation6], %s40
      %s43 = sshll.u32 [#allocation5], 4
      %s44 = int_to_ptr.vmem [resolvable:$true] %s43
      %46 = dma.hbm_to_vmem [thread:$0]  %s2, 128, %s44, [#allocation6]
    $region13: #{byol_forward.3} parent=1 // pred_fallthru
      _
    // Predicated region
    $region14: #{byol_forward.3} parent=1 // pred_check
      _
    $region15: #{byol_forward.3} parent=1 // pred_check_branch
      %48 = sbr.rel (0) target = $region17
    $region16: #{byol_forward.3} parent=1 // pred_region
      %s50 = ssub.s32 128, 128
      %51 = vsyncadd [#allocation6], %s50
      %s53 = sshll.u32 [#allocation7], 4
      %s54 = int_to_ptr.vmem [resolvable:$true] %s53
      %56 = dma.hbm_to_vmem [thread:$0]  %s3, 128, %s54, [#allocation6]
    $region17: #{byol_forward.3} parent=1 // pred_fallthru
      _
    // Predicated region
    $region18: #{byol_forward.3} parent=1 // pred_check
      _
    $region19: #{byol_forward.3} parent=1 // pred_check_branch
      %58 = sbr.rel (0) target = $region21
    $region20: #{byol_forward.3} parent=1 // pred_region
      %s60 = ssub.s32 16384, 16384
      %61 = vsyncadd [#allocation9], %s60
      %s62 = sshll.u32 [#allocation8], 4
      %s63 = int_to_ptr.vmem [resolvable:$true] %s62
      %68 = dma.hbm_to_vmem [thread:$0]  %s4, 16384, %s63, [#allocation9], 128, 128, 8
    $region21: #{byol_forward.3} parent=1 // pred_fallthru
      _
    // Predicated region
    $region22: #{byol_forward.3} parent=1 // pred_check
      _
    $region23: #{byol_forward.3} parent=1 // pred_check_branch
      %70 = sbr.rel (0) target = $region25
    $region24: #{byol_forward.3} parent=1 // pred_region
      %s72 = ssub.s32 16, 16
      %73 = vsyncadd [#allocation9], %s72
      %s75 = sshll.u32 [#allocation10], 4
      %s76 = int_to_ptr.vmem [resolvable:$true] %s75
      %78 = dma.hbm_to_vmem [thread:$0]  %s5, 16, %s76, [#allocation9]
    $region25: #{byol_forward.3} parent=1 // pred_fallthru
      _
    // Predicated region
    $region26: #{byol_forward.3} parent=1 // pred_check
      _
    $region27: #{byol_forward.3} parent=1 // pred_check_branch
      %80 = sbr.rel (0) target = $region29
    $region28: #{byol_forward.3} parent=1 // pred_region
      %s82 = ssub.s32 16384, 16384
      %83 = vsyncadd [#allocation12], %s82
      %s84 = sshll.u32 [#allocation11], 4
      %s85 = int_to_ptr.vmem [resolvable:$true] %s84
      %90 = dma.hbm_to_vmem [thread:$0]  %s6, 16384, %s85, [#allocation12], 1024, 1024, 64
    $region29: #{byol_forward.3} parent=1 // pred_fallthru
      _
    // Predicated region
    $region30: #{byol_forward.3} parent=1 // pred_check
      _
    $region31: #{byol_forward.3} parent=1 // pred_check_branch
      %92 = sbr.rel (0) target = $region33
    $region32: #{byol_forward.3} parent=1 // pred_region
      %s94 = ssub.s32 128, 128
      %95 = vsyncadd [#allocation12], %s94
      %s97 = sshll.u32 [#allocation13], 4
      %s98 = int_to_ptr.vmem [resolvable:$true] %s97
      %100 = dma.hbm_to_vmem [thread:$0]  %s7, 128, %s98, [#allocation12]
    $region33: #{byol_forward.3} parent=1 // pred_fallthru
      _
    // Predicated region
    $region34: #{byol_forward.3} parent=1 // pred_check
      _
    $region35: #{byol_forward.3} parent=1 // pred_check_branch
      %102 = sbr.rel (0) target = $region37
    $region36: #{byol_forward.3} parent=1 // pred_region
      %s104 = ssub.s32 128, 128
      %105 = vsyncadd [#allocation15], %s104
      %s107 = sshll.u32 [#allocation14], 4
      %s108 = int_to_ptr.vmem [resolvable:$true] %s107
      %110 = dma.hbm_to_vmem [thread:$0]  %s8, 128, %s108, [#allocation15]
    $region37: #{byol_forward.3} parent=1 // pred_fallthru
      _
    // Predicated region
    $region38: #{byol_forward.3} parent=1 // pred_check
      _
    $region39: #{byol_forward.3} parent=1 // pred_check_branch
      %112 = sbr.rel (0) target = $region41
    $region40: #{byol_forward.3} parent=1 // pred_region
      %s114 = ssub.s32 16384, 16384
      %115 = vsyncadd [#allocation15], %s114
      %s116 = sshll.u32 [#allocation16], 4
      %s117 = int_to_ptr.vmem [resolvable:$true] %s116
      %122 = dma.hbm_to_vmem [thread:$0]  %s9, 16384, %s117, [#allocation15], 128, 128, 8
    $region41: #{byol_forward.3} parent=1 // pred_fallthru
      _
    // Predicated region
    $region42: #{byol_forward.3} parent=1 // pred_check
      _
    $region43: #{byol_forward.3} parent=1 // pred_check_branch
      %124 = sbr.rel (0) target = $region45
    $region44: #{byol_forward.3} parent=1 // pred_region
      %s126 = ssub.s32 16, 16
      %127 = vsyncadd [#allocation18], %s126
      %s129 = sshll.u32 [#allocation17], 4
      %s130 = int_to_ptr.vmem [resolvable:$true] %s129
      %132 = dma.hbm_to_vmem [thread:$0]  %s10, 16, %s130, [#allocation18]
    $region45: #{byol_forward.3} parent=1 // pred_fallthru
      _
    // Predicated region
    $region46: #{byol_forward.3} parent=1 // pred_check
      _
    $region47: #{byol_forward.3} parent=1 // pred_check_branch
      %134 = sbr.rel (0) target = $region49
    $region48: #{byol_forward.3} parent=1 // pred_region
      %135 = dma.done [#allocation3], 65536
    $region49: #{byol_forward.3} parent=1 // pred_fallthru
      _
    // Predicated region
    $region50: #{byol_forward.3} parent=1 // pred_check
      _
    $region51: #{byol_forward.3} parent=1 // pred_check_branch
      %137 = sbr.rel (0) target = $region53
    $region52: #{byol_forward.3} parent=1 // pred_region
      %138 = dma.done [#allocation6], 128
    $region53: #{byol_forward.3} parent=1 // pred_fallthru
      _
    // Predicated region
    $region54: #{byol_forward.3} parent=1 // pred_check
      _
    $region55: #{byol_forward.3} parent=1 // pred_check_branch
      %140 = sbr.rel (0) target = $region57
    $region56: #{byol_forward.3} parent=1 // pred_region
      %141 = dma.done [#allocation6], 128
    $region57: #{byol_forward.3} parent=1 // pred_fallthru
      _
    // Predicated region
    $region58: #{byol_forward.3} parent=1 // pred_check
      _
    $region59: #{byol_forward.3} parent=1 // pred_check_branch
      %143 = sbr.rel (0) target = $region61
    $region60: #{byol_forward.3} parent=1 // pred_region
      %144 = dma.done [#allocation9], 16384
    $region61: #{byol_forward.3} parent=1 // pred_fallthru
      _
    // Predicated region
    $region62: #{byol_forward.3} parent=1 // pred_check
      _
    $region63: #{byol_forward.3} parent=1 // pred_check_branch
      %146 = sbr.rel (0) target = $region65
    $region64: #{byol_forward.3} parent=1 // pred_region
      %147 = dma.done [#allocation9], 16
    $region65: #{byol_forward.3} parent=1 // pred_fallthru
      _
    // Predicated region
    $region66: #{byol_forward.3} parent=1 // pred_check
      _
    $region67: #{byol_forward.3} parent=1 // pred_check_branch
      %149 = sbr.rel (0) target = $region69
    $region68: #{byol_forward.3} parent=1 // pred_region
      %150 = dma.done [#allocation12], 16384
    $region69: #{byol_forward.3} parent=1 // pred_fallthru
      _
    // Predicated region
    $region70: #{byol_forward.3} parent=1 // pred_check
      _
    $region71: #{byol_forward.3} parent=1 // pred_check_branch
      %152 = sbr.rel (0) target = $region73
    $region72: #{byol_forward.3} parent=1 // pred_region
      %153 = dma.done [#allocation12], 128
    $region73: #{byol_forward.3} parent=1 // pred_fallthru
      _
    // Predicated region
    $region74: #{byol_forward.3} parent=1 // pred_check
      _
    $region75: #{byol_forward.3} parent=1 // pred_check_branch
      %155 = sbr.rel (0) target = $region77
    $region76: #{byol_forward.3} parent=1 // pred_region
      %156 = dma.done [#allocation15], 128
    $region77: #{byol_forward.3} parent=1 // pred_fallthru
      _
    // Predicated region
    $region78: #{byol_forward.3} parent=1 // pred_check
      _
    $region79: #{byol_forward.3} parent=1 // pred_check_branch
      %158 = sbr.rel (0) target = $region81
    $region80: #{byol_forward.3} parent=1 // pred_region
      %159 = dma.done [#allocation15], 16384
    $region81: #{byol_forward.3} parent=1 // pred_fallthru
      _
    // Predicated region
    $region82: #{byol_forward.3} parent=1 // pred_check
      _
    $region83: #{byol_forward.3} parent=1 // pred_check_branch
      %161 = sbr.rel (0) target = $region85
    $region84: #{byol_forward.3} parent=1 // pred_region
      %162 = dma.done [#allocation18], 16
    $region85: #{byol_forward.3} parent=1 // pred_fallthru
      _
    %v163 = vld [vmem:[%s0] sm:$0xff]
    %v164 = vld [vmem:[#allocation2] sm:$0xff]
    %v165 = vld [vmem:[#allocation2 + $0x8] sm:$0xff]
    %v166 = vld [vmem:[#allocation2 + $0x10] sm:$0xff]
    %v167 = vld [vmem:[#allocation2 + $0x18] sm:$0xff]
    %v168 = vld [vmem:[#allocation2 + $0x20] sm:$0xff]
    %v169 = vld [vmem:[#allocation2 + $0x28] sm:$0xff]
    %v170 = vld [vmem:[#allocation2 + $0x30] sm:$0xff]
    %v171 = vld [vmem:[#allocation2 + $0x38] sm:$0xff]
    %v172 = vld [vmem:[#allocation2 + $0x40] sm:$0xff]
    %v173 = vld [vmem:[#allocation2 + $0x48] sm:$0xff]
    %v174 = vld [vmem:[#allocation2 + $0x50] sm:$0xff]
    %v175 = vld [vmem:[#allocation2 + $0x58] sm:$0xff]
    %v176 = vld [vmem:[#allocation2 + $0x60] sm:$0xff]
    %v177 = vld [vmem:[#allocation2 + $0x68] sm:$0xff]
    %v178 = vld [vmem:[#allocation2 + $0x70] sm:$0xff]
    %v179 = vld [vmem:[#allocation2 + $0x78] sm:$0xff]
    %v180 = vld [vmem:[#allocation2 + $0x80] sm:$0xff]
    %v181 = vld [vmem:[#allocation2 + $0x88] sm:$0xff]
    %v182 = vld [vmem:[#allocation2 + $0x90] sm:$0xff]
    %v183 = vld [vmem:[#allocation2 + $0x98] sm:$0xff]
    %v184 = vld [vmem:[#allocation2 + $0xa0] sm:$0xff]
    %v185 = vld [vmem:[#allocation2 + $0xa8] sm:$0xff]
    %v186 = vld [vmem:[#allocation2 + $0xb0] sm:$0xff]
    %v187 = vld [vmem:[#allocation2 + $0xb8] sm:$0xff]
    %v188 = vld [vmem:[#allocation2 + $0xc0] sm:$0xff]
    %v189 = vld [vmem:[#allocation2 + $0xc8] sm:$0xff]
    %v190 = vld [vmem:[#allocation2 + $0xd0] sm:$0xff]
    %v191 = vld [vmem:[#allocation2 + $0xd8] sm:$0xff]
    %v192 = vld [vmem:[#allocation2 + $0xe0] sm:$0xff]
    %v193 = vld [vmem:[#allocation2 + $0xe8] sm:$0xff]
    %v194 = vld [vmem:[#allocation2 + $0xf0] sm:$0xff]
    %v195 = vld [vmem:[#allocation2 + $0xf8] sm:$0xff]
    %v196 = vld [vmem:[#allocation2 + $0x100] sm:$0xff]
    %v197 = vld [vmem:[#allocation2 + $0x108] sm:$0xff]
    %v198 = vld [vmem:[#allocation2 + $0x110] sm:$0xff]
    %v199 = vld [vmem:[#allocation2 + $0x118] sm:$0xff]
    %v200 = vld [vmem:[#allocation2 + $0x120] sm:$0xff]
    %v201 = vld [vmem:[#allocation2 + $0x128] sm:$0xff]
    %v202 = vld [vmem:[#allocation2 + $0x130] sm:$0xff]
    %v203 = vld [vmem:[#allocation2 + $0x138] sm:$0xff]
    %v204 = vld [vmem:[#allocation2 + $0x140] sm:$0xff]
    %v205 = vld [vmem:[#allocation2 + $0x148] sm:$0xff]
    %v206 = vld [vmem:[#allocation2 + $0x150] sm:$0xff]
    %v207 = vld [vmem:[#allocation2 + $0x158] sm:$0xff]
    %v208 = vld [vmem:[#allocation2 + $0x160] sm:$0xff]
    %v209 = vld [vmem:[#allocation2 + $0x168] sm:$0xff]
    %v210 = vld [vmem:[#allocation2 + $0x170] sm:$0xff]
    %v211 = vld [vmem:[#allocation2 + $0x178] sm:$0xff]
    %v212 = vld [vmem:[#allocation2 + $0x180] sm:$0xff]
    %v213 = vld [vmem:[#allocation2 + $0x188] sm:$0xff]
    %v214 = vld [vmem:[#allocation2 + $0x190] sm:$0xff]
    %v215 = vld [vmem:[#allocation2 + $0x198] sm:$0xff]
    %v216 = vld [vmem:[#allocation2 + $0x1a0] sm:$0xff]
    %v217 = vld [vmem:[#allocation2 + $0x1a8] sm:$0xff]
    %v218 = vld [vmem:[#allocation2 + $0x1b0] sm:$0xff]
    %v219 = vld [vmem:[#allocation2 + $0x1b8] sm:$0xff]
    %v220 = vld [vmem:[#allocation2 + $0x1c0] sm:$0xff]
    %v221 = vld [vmem:[#allocation2 + $0x1c8] sm:$0xff]
    %v222 = vld [vmem:[#allocation2 + $0x1d0] sm:$0xff]
    %v223 = vld [vmem:[#allocation2 + $0x1d8] sm:$0xff]
    %v224 = vld [vmem:[#allocation2 + $0x1e0] sm:$0xff]
    %v225 = vld [vmem:[#allocation2 + $0x1e8] sm:$0xff]
    %v226 = vld [vmem:[#allocation2 + $0x1f0] sm:$0xff]
    %v227 = vld [vmem:[#allocation2 + $0x1f8] sm:$0xff]
    %v228 = vld [vmem:[#allocation2 + $0x200] sm:$0xff]
    %v229 = vld [vmem:[#allocation2 + $0x208] sm:$0xff]
    %v230 = vld [vmem:[#allocation2 + $0x210] sm:$0xff]
    %v231 = vld [vmem:[#allocation2 + $0x218] sm:$0xff]
    %v232 = vld [vmem:[#allocation2 + $0x220] sm:$0xff]
    %v233 = vld [vmem:[#allocation2 + $0x228] sm:$0xff]
    %v234 = vld [vmem:[#allocation2 + $0x230] sm:$0xff]
    %v235 = vld [vmem:[#allocation2 + $0x238] sm:$0xff]
    %v236 = vld [vmem:[#allocation2 + $0x240] sm:$0xff]
    %v237 = vld [vmem:[#allocation2 + $0x248] sm:$0xff]
    %v238 = vld [vmem:[#allocation2 + $0x250] sm:$0xff]
    %v239 = vld [vmem:[#allocation2 + $0x258] sm:$0xff]
    %v240 = vld [vmem:[#allocation2 + $0x260] sm:$0xff]
    %v241 = vld [vmem:[#allocation2 + $0x268] sm:$0xff]
    %v242 = vld [vmem:[#allocation2 + $0x270] sm:$0xff]
    %v243 = vld [vmem:[#allocation2 + $0x278] sm:$0xff]
    %v244 = vld [vmem:[#allocation2 + $0x280] sm:$0xff]
    %v245 = vld [vmem:[#allocation2 + $0x288] sm:$0xff]
    %v246 = vld [vmem:[#allocation2 + $0x290] sm:$0xff]
    %v247 = vld [vmem:[#allocation2 + $0x298] sm:$0xff]
    %v248 = vld [vmem:[#allocation2 + $0x2a0] sm:$0xff]
    %v249 = vld [vmem:[#allocation2 + $0x2a8] sm:$0xff]
    %v250 = vld [vmem:[#allocation2 + $0x2b0] sm:$0xff]
    %v251 = vld [vmem:[#allocation2 + $0x2b8] sm:$0xff]
    %v252 = vld [vmem:[#allocation2 + $0x2c0] sm:$0xff]
    %v253 = vld [vmem:[#allocation2 + $0x2c8] sm:$0xff]
    %v254 = vld [vmem:[#allocation2 + $0x2d0] sm:$0xff]
    %v255 = vld [vmem:[#allocation2 + $0x2d8] sm:$0xff]
    %v256 = vld [vmem:[#allocation2 + $0x2e0] sm:$0xff]
    %v257 = vld [vmem:[#allocation2 + $0x2e8] sm:$0xff]
    %v258 = vld [vmem:[#allocation2 + $0x2f0] sm:$0xff]
    %v259 = vld [vmem:[#allocation2 + $0x2f8] sm:$0xff]
    %v260 = vld [vmem:[#allocation2 + $0x300] sm:$0xff]
    %v261 = vld [vmem:[#allocation2 + $0x308] sm:$0xff]
    %v262 = vld [vmem:[#allocation2 + $0x310] sm:$0xff]
    %v263 = vld [vmem:[#allocation2 + $0x318] sm:$0xff]
    %v264 = vld [vmem:[#allocation2 + $0x320] sm:$0xff]
    %v265 = vld [vmem:[#allocation2 + $0x328] sm:$0xff]
    %v266 = vld [vmem:[#allocation2 + $0x330] sm:$0xff]
    %v267 = vld [vmem:[#allocation2 + $0x338] sm:$0xff]
    %v268 = vld [vmem:[#allocation2 + $0x340] sm:$0xff]
    %v269 = vld [vmem:[#allocation2 + $0x348] sm:$0xff]
    %v270 = vld [vmem:[#allocation2 + $0x350] sm:$0xff]
    %v271 = vld [vmem:[#allocation2 + $0x358] sm:$0xff]
    %v272 = vld [vmem:[#allocation2 + $0x360] sm:$0xff]
    %v273 = vld [vmem:[#allocation2 + $0x368] sm:$0xff]
    %v274 = vld [vmem:[#allocation2 + $0x370] sm:$0xff]
    %v275 = vld [vmem:[#allocation2 + $0x378] sm:$0xff]
    %v276 = vld [vmem:[#allocation2 + $0x380] sm:$0xff]
    %v277 = vld [vmem:[#allocation2 + $0x388] sm:$0xff]
    %v278 = vld [vmem:[#allocation2 + $0x390] sm:$0xff]
    %v279 = vld [vmem:[#allocation2 + $0x398] sm:$0xff]
    %v280 = vld [vmem:[#allocation2 + $0x3a0] sm:$0xff]
    %v281 = vld [vmem:[#allocation2 + $0x3a8] sm:$0xff]
    %v282 = vld [vmem:[#allocation2 + $0x3b0] sm:$0xff]
    %v283 = vld [vmem:[#allocation2 + $0x3b8] sm:$0xff]
    %v284 = vld [vmem:[#allocation2 + $0x3c0] sm:$0xff]
    %v285 = vld [vmem:[#allocation2 + $0x3c8] sm:$0xff]
    %v286 = vld [vmem:[#allocation2 + $0x3d0] sm:$0xff]
    %v287 = vld [vmem:[#allocation2 + $0x3d8] sm:$0xff]
    %v288 = vld [vmem:[#allocation2 + $0x3e0] sm:$0xff]
    %v289 = vld [vmem:[#allocation2 + $0x3e8] sm:$0xff]
    %v290 = vld [vmem:[#allocation2 + $0x3f0] sm:$0xff]
    %v291 = vld [vmem:[#allocation2 + $0x3f8] sm:$0xff]
    %v292 = vld [vmem:[#allocation2 + $0x400] sm:$0xff]
    %v293 = vld [vmem:[#allocation2 + $0x408] sm:$0xff]
    %v294 = vld [vmem:[#allocation2 + $0x410] sm:$0xff]
    %v295 = vld [vmem:[#allocation2 + $0x418] sm:$0xff]
    %v296 = vld [vmem:[#allocation2 + $0x420] sm:$0xff]
    %v297 = vld [vmem:[#allocation2 + $0x428] sm:$0xff]
    %v298 = vld [vmem:[#allocation2 + $0x430] sm:$0xff]
    %v299 = vld [vmem:[#allocation2 + $0x438] sm:$0xff]
    %v300 = vld [vmem:[#allocation2 + $0x440] sm:$0xff]
    %v301 = vld [vmem:[#allocation2 + $0x448] sm:$0xff]
    %v302 = vld [vmem:[#allocation2 + $0x450] sm:$0xff]
    %v303 = vld [vmem:[#allocation2 + $0x458] sm:$0xff]
    %v304 = vld [vmem:[#allocation2 + $0x460] sm:$0xff]
    %v305 = vld [vmem:[#allocation2 + $0x468] sm:$0xff]
    %v306 = vld [vmem:[#allocation2 + $0x470] sm:$0xff]
    %v307 = vld [vmem:[#allocation2 + $0x478] sm:$0xff]
    %v308 = vld [vmem:[#allocation2 + $0x480] sm:$0xff]
    %v309 = vld [vmem:[#allocation2 + $0x488] sm:$0xff]
    %v310 = vld [vmem:[#allocation2 + $0x490] sm:$0xff]
    %v311 = vld [vmem:[#allocation2 + $0x498] sm:$0xff]
    %v312 = vld [vmem:[#allocation2 + $0x4a0] sm:$0xff]
    %v313 = vld [vmem:[#allocation2 + $0x4a8] sm:$0xff]
    %v314 = vld [vmem:[#allocation2 + $0x4b0] sm:$0xff]
    %v315 = vld [vmem:[#allocation2 + $0x4b8] sm:$0xff]
    %v316 = vld [vmem:[#allocation2 + $0x4c0] sm:$0xff]
    %v317 = vld [vmem:[#allocation2 + $0x4c8] sm:$0xff]
    %v318 = vld [vmem:[#allocation2 + $0x4d0] sm:$0xff]
    %v319 = vld [vmem:[#allocation2 + $0x4d8] sm:$0xff]
    %v320 = vld [vmem:[#allocation2 + $0x4e0] sm:$0xff]
    %v321 = vld [vmem:[#allocation2 + $0x4e8] sm:$0xff]
    %v322 = vld [vmem:[#allocation2 + $0x4f0] sm:$0xff]
    %v323 = vld [vmem:[#allocation2 + $0x4f8] sm:$0xff]
    %v324 = vld [vmem:[#allocation2 + $0x500] sm:$0xff]
    %v325 = vld [vmem:[#allocation2 + $0x508] sm:$0xff]
    %v326 = vld [vmem:[#allocation2 + $0x510] sm:$0xff]
    %v327 = vld [vmem:[#allocation2 + $0x518] sm:$0xff]
    %v328 = vld [vmem:[#allocation2 + $0x520] sm:$0xff]
    %v329 = vld [vmem:[#allocation2 + $0x528] sm:$0xff]
    %v330 = vld [vmem:[#allocation2 + $0x530] sm:$0xff]
    %v331 = vld [vmem:[#allocation2 + $0x538] sm:$0xff]
    %v332 = vld [vmem:[#allocation2 + $0x540] sm:$0xff]
    %v333 = vld [vmem:[#allocation2 + $0x548] sm:$0xff]
    %v334 = vld [vmem:[#allocation2 + $0x550] sm:$0xff]
    %v335 = vld [vmem:[#allocation2 + $0x558] sm:$0xff]
    %v336 = vld [vmem:[#allocation2 + $0x560] sm:$0xff]
    %v337 = vld [vmem:[#allocation2 + $0x568] sm:$0xff]
    %v338 = vld [vmem:[#allocation2 + $0x570] sm:$0xff]
    %v339 = vld [vmem:[#allocation2 + $0x578] sm:$0xff]
    %v340 = vld [vmem:[#allocation2 + $0x580] sm:$0xff]
    %v341 = vld [vmem:[#allocation2 + $0x588] sm:$0xff]
    %v342 = vld [vmem:[#allocation2 + $0x590] sm:$0xff]
    %v343 = vld [vmem:[#allocation2 + $0x598] sm:$0xff]
    %v344 = vld [vmem:[#allocation2 + $0x5a0] sm:$0xff]
    %v345 = vld [vmem:[#allocation2 + $0x5a8] sm:$0xff]
    %v346 = vld [vmem:[#allocation2 + $0x5b0] sm:$0xff]
    %v347 = vld [vmem:[#allocation2 + $0x5b8] sm:$0xff]
    %v348 = vld [vmem:[#allocation2 + $0x5c0] sm:$0xff]
    %v349 = vld [vmem:[#allocation2 + $0x5c8] sm:$0xff]
    %v350 = vld [vmem:[#allocation2 + $0x5d0] sm:$0xff]
    %v351 = vld [vmem:[#allocation2 + $0x5d8] sm:$0xff]
    %v352 = vld [vmem:[#allocation2 + $0x5e0] sm:$0xff]
    %v353 = vld [vmem:[#allocation2 + $0x5e8] sm:$0xff]
    %v354 = vld [vmem:[#allocation2 + $0x5f0] sm:$0xff]
    %v355 = vld [vmem:[#allocation2 + $0x5f8] sm:$0xff]
    %v356 = vld [vmem:[#allocation2 + $0x600] sm:$0xff]
    %v357 = vld [vmem:[#allocation2 + $0x608] sm:$0xff]
    %v358 = vld [vmem:[#allocation2 + $0x610] sm:$0xff]
    %v359 = vld [vmem:[#allocation2 + $0x618] sm:$0xff]
    %v360 = vld [vmem:[#allocation2 + $0x620] sm:$0xff]
    %v361 = vld [vmem:[#allocation2 + $0x628] sm:$0xff]
    %v362 = vld [vmem:[#allocation2 + $0x630] sm:$0xff]
    %v363 = vld [vmem:[#allocation2 + $0x638] sm:$0xff]
    %v364 = vld [vmem:[#allocation2 + $0x640] sm:$0xff]
    %v365 = vld [vmem:[#allocation2 + $0x648] sm:$0xff]
    %v366 = vld [vmem:[#allocation2 + $0x650] sm:$0xff]
    %v367 = vld [vmem:[#allocation2 + $0x658] sm:$0xff]
    %v368 = vld [vmem:[#allocation2 + $0x660] sm:$0xff]
    %v369 = vld [vmem:[#allocation2 + $0x668] sm:$0xff]
    %v370 = vld [vmem:[#allocation2 + $0x670] sm:$0xff]
    %v371 = vld [vmem:[#allocation2 + $0x678] sm:$0xff]
    %v372 = vld [vmem:[#allocation2 + $0x680] sm:$0xff]
    %v373 = vld [vmem:[#allocation2 + $0x688] sm:$0xff]
    %v374 = vld [vmem:[#allocation2 + $0x690] sm:$0xff]
    %v375 = vld [vmem:[#allocation2 + $0x698] sm:$0xff]
    %v376 = vld [vmem:[#allocation2 + $0x6a0] sm:$0xff]
    %v377 = vld [vmem:[#allocation2 + $0x6a8] sm:$0xff]
    %v378 = vld [vmem:[#allocation2 + $0x6b0] sm:$0xff]
    %v379 = vld [vmem:[#allocation2 + $0x6b8] sm:$0xff]
    %v380 = vld [vmem:[#allocation2 + $0x6c0] sm:$0xff]
    %v381 = vld [vmem:[#allocation2 + $0x6c8] sm:$0xff]
    %v382 = vld [vmem:[#allocation2 + $0x6d0] sm:$0xff]
    %v383 = vld [vmem:[#allocation2 + $0x6d8] sm:$0xff]
    %v384 = vld [vmem:[#allocation2 + $0x6e0] sm:$0xff]
    %v385 = vld [vmem:[#allocation2 + $0x6e8] sm:$0xff]
    %v386 = vld [vmem:[#allocation2 + $0x6f0] sm:$0xff]
    %v387 = vld [vmem:[#allocation2 + $0x6f8] sm:$0xff]
    %v388 = vld [vmem:[#allocation2 + $0x700] sm:$0xff]
    %v389 = vld [vmem:[#allocation2 + $0x708] sm:$0xff]
    %v390 = vld [vmem:[#allocation2 + $0x710] sm:$0xff]
    %v391 = vld [vmem:[#allocation2 + $0x718] sm:$0xff]
    %v392 = vld [vmem:[#allocation2 + $0x720] sm:$0xff]
    %v393 = vld [vmem:[#allocation2 + $0x728] sm:$0xff]
    %v394 = vld [vmem:[#allocation2 + $0x730] sm:$0xff]
    %v395 = vld [vmem:[#allocation2 + $0x738] sm:$0xff]
    %v396 = vld [vmem:[#allocation2 + $0x740] sm:$0xff]
    %v397 = vld [vmem:[#allocation2 + $0x748] sm:$0xff]
    %v398 = vld [vmem:[#allocation2 + $0x750] sm:$0xff]
    %v399 = vld [vmem:[#allocation2 + $0x758] sm:$0xff]
    %v400 = vld [vmem:[#allocation2 + $0x760] sm:$0xff]
    %v401 = vld [vmem:[#allocation2 + $0x768] sm:$0xff]
    %v402 = vld [vmem:[#allocation2 + $0x770] sm:$0xff]
    %v403 = vld [vmem:[#allocation2 + $0x778] sm:$0xff]
    %v404 = vld [vmem:[#allocation2 + $0x780] sm:$0xff]
    %v405 = vld [vmem:[#allocation2 + $0x788] sm:$0xff]
    %v406 = vld [vmem:[#allocation2 + $0x790] sm:$0xff]
    %v407 = vld [vmem:[#allocation2 + $0x798] sm:$0xff]
    %v408 = vld [vmem:[#allocation2 + $0x7a0] sm:$0xff]
    %v409 = vld [vmem:[#allocation2 + $0x7a8] sm:$0xff]
    %v410 = vld [vmem:[#allocation2 + $0x7b0] sm:$0xff]
    %v411 = vld [vmem:[#allocation2 + $0x7b8] sm:$0xff]
    %v412 = vld [vmem:[#allocation2 + $0x7c0] sm:$0xff]
    %v413 = vld [vmem:[#allocation2 + $0x7c8] sm:$0xff]
    %v414 = vld [vmem:[#allocation2 + $0x7d0] sm:$0xff]
    %v415 = vld [vmem:[#allocation2 + $0x7d8] sm:$0xff]
    %v416 = vld [vmem:[#allocation2 + $0x7e0] sm:$0xff]
    %v417 = vld [vmem:[#allocation2 + $0x7e8] sm:$0xff]
    %v418 = vld [vmem:[#allocation2 + $0x7f0] sm:$0xff]
    %v419 = vld [vmem:[#allocation2 + $0x7f8] sm:$0xff]
    %v420 = vld [vmem:[#allocation2 + $0x800] sm:$0xff]
    %v421 = vld [vmem:[#allocation2 + $0x808] sm:$0xff]
    %v422 = vld [vmem:[#allocation2 + $0x810] sm:$0xff]
    %v423 = vld [vmem:[#allocation2 + $0x818] sm:$0xff]
    %v424 = vld [vmem:[#allocation2 + $0x820] sm:$0xff]
    %v425 = vld [vmem:[#allocation2 + $0x828] sm:$0xff]
    %v426 = vld [vmem:[#allocation2 + $0x830] sm:$0xff]
    %v427 = vld [vmem:[#allocation2 + $0x838] sm:$0xff]
    %v428 = vld [vmem:[#allocation2 + $0x840] sm:$0xff]
    %v429 = vld [vmem:[#allocation2 + $0x848] sm:$0xff]
    %v430 = vld [vmem:[#allocation2 + $0x850] sm:$0xff]
    %v431 = vld [vmem:[#allocation2 + $0x858] sm:$0xff]
    %v432 = vld [vmem:[#allocation2 + $0x860] sm:$0xff]
    %v433 = vld [vmem:[#allocation2 + $0x868] sm:$0xff]
    %v434 = vld [vmem:[#allocation2 + $0x870] sm:$0xff]
    %v435 = vld [vmem:[#allocation2 + $0x878] sm:$0xff]
    %v436 = vld [vmem:[#allocation2 + $0x880] sm:$0xff]
    %v437 = vld [vmem:[#allocation2 + $0x888] sm:$0xff]
    %v438 = vld [vmem:[#allocation2 + $0x890] sm:$0xff]
    %v439 = vld [vmem:[#allocation2 + $0x898] sm:$0xff]
    %v440 = vld [vmem:[#allocation2 + $0x8a0] sm:$0xff]
    %v441 = vld [vmem:[#allocation2 + $0x8a8] sm:$0xff]
    %v442 = vld [vmem:[#allocation2 + $0x8b0] sm:$0xff]
    %v443 = vld [vmem:[#allocation2 + $0x8b8] sm:$0xff]
    %v444 = vld [vmem:[#allocation2 + $0x8c0] sm:$0xff]
    %v445 = vld [vmem:[#allocation2 + $0x8c8] sm:$0xff]
    %v446 = vld [vmem:[#allocation2 + $0x8d0] sm:$0xff]
    %v447 = vld [vmem:[#allocation2 + $0x8d8] sm:$0xff]
    %v448 = vld [vmem:[#allocation2 + $0x8e0] sm:$0xff]
    %v449 = vld [vmem:[#allocation2 + $0x8e8] sm:$0xff]
    %v450 = vld [vmem:[#allocation2 + $0x8f0] sm:$0xff]
    %v451 = vld [vmem:[#allocation2 + $0x8f8] sm:$0xff]
    %v452 = vld [vmem:[#allocation2 + $0x900] sm:$0xff]
    %v453 = vld [vmem:[#allocation2 + $0x908] sm:$0xff]
    %v454 = vld [vmem:[#allocation2 + $0x910] sm:$0xff]
    %v455 = vld [vmem:[#allocation2 + $0x918] sm:$0xff]
    %v456 = vld [vmem:[#allocation2 + $0x920] sm:$0xff]
    %v457 = vld [vmem:[#allocation2 + $0x928] sm:$0xff]
    %v458 = vld [vmem:[#allocation2 + $0x930] sm:$0xff]
    %v459 = vld [vmem:[#allocation2 + $0x938] sm:$0xff]
    %v460 = vld [vmem:[#allocation2 + $0x940] sm:$0xff]
    %v461 = vld [vmem:[#allocation2 + $0x948] sm:$0xff]
    %v462 = vld [vmem:[#allocation2 + $0x950] sm:$0xff]
    %v463 = vld [vmem:[#allocation2 + $0x958] sm:$0xff]
    %v464 = vld [vmem:[#allocation2 + $0x960] sm:$0xff]
    %v465 = vld [vmem:[#allocation2 + $0x968] sm:$0xff]
    %v466 = vld [vmem:[#allocation2 + $0x970] sm:$0xff]
    %v467 = vld [vmem:[#allocation2 + $0x978] sm:$0xff]
    %v468 = vld [vmem:[#allocation2 + $0x980] sm:$0xff]
    %v469 = vld [vmem:[#allocation2 + $0x988] sm:$0xff]
    %v470 = vld [vmem:[#allocation2 + $0x990] sm:$0xff]
    %v471 = vld [vmem:[#allocation2 + $0x998] sm:$0xff]
    %v472 = vld [vmem:[#allocation2 + $0x9a0] sm:$0xff]
    %v473 = vld [vmem:[#allocation2 + $0x9a8] sm:$0xff]
    %v474 = vld [vmem:[#allocation2 + $0x9b0] sm:$0xff]
    %v475 = vld [vmem:[#allocation2 + $0x9b8] sm:$0xff]
    %v476 = vld [vmem:[#allocation2 + $0x9c0] sm:$0xff]
    %v477 = vld [vmem:[#allocation2 + $0x9c8] sm:$0xff]
    %v478 = vld [vmem:[#allocation2 + $0x9d0] sm:$0xff]
    %v479 = vld [vmem:[#allocation2 + $0x9d8] sm:$0xff]
    %v480 = vld [vmem:[#allocation2 + $0x9e0] sm:$0xff]
    %v481 = vld [vmem:[#allocation2 + $0x9e8] sm:$0xff]
    %v482 = vld [vmem:[#allocation2 + $0x9f0] sm:$0xff]
    %v483 = vld [vmem:[#allocation2 + $0x9f8] sm:$0xff]
    %v484 = vld [vmem:[#allocation2 + $0xa00] sm:$0xff]
    %v485 = vld [vmem:[#allocation2 + $0xa08] sm:$0xff]
    %v486 = vld [vmem:[#allocation2 + $0xa10] sm:$0xff]
    %v487 = vld [vmem:[#allocation2 + $0xa18] sm:$0xff]
    %v488 = vld [vmem:[#allocation2 + $0xa20] sm:$0xff]
    %v489 = vld [vmem:[#allocation2 + $0xa28] sm:$0xff]
    %v490 = vld [vmem:[#allocation2 + $0xa30] sm:$0xff]
    %v491 = vld [vmem:[#allocation2 + $0xa38] sm:$0xff]
    %v492 = vld [vmem:[#allocation2 + $0xa40] sm:$0xff]
    %v493 = vld [vmem:[#allocation2 + $0xa48] sm:$0xff]
    %v494 = vld [vmem:[#allocation2 + $0xa50] sm:$0xff]
    %v495 = vld [vmem:[#allocation2 + $0xa58] sm:$0xff]
    %v496 = vld [vmem:[#allocation2 + $0xa60] sm:$0xff]
    %v497 = vld [vmem:[#allocation2 + $0xa68] sm:$0xff]
    %v498 = vld [vmem:[#allocation2 + $0xa70] sm:$0xff]
    %v499 = vld [vmem:[#allocation2 + $0xa78] sm:$0xff]
    %v500 = vld [vmem:[#allocation2 + $0xa80] sm:$0xff]
    %v501 = vld [vmem:[#allocation2 + $0xa88] sm:$0xff]
    %v502 = vld [vmem:[#allocation2 + $0xa90] sm:$0xff]
    %v503 = vld [vmem:[#allocation2 + $0xa98] sm:$0xff]
    %v504 = vld [vmem:[#allocation2 + $0xaa0] sm:$0xff]
    %v505 = vld [vmem:[#allocation2 + $0xaa8] sm:$0xff]
    %v506 = vld [vmem:[#allocation2 + $0xab0] sm:$0xff]
    %v507 = vld [vmem:[#allocation2 + $0xab8] sm:$0xff]
    %v508 = vld [vmem:[#allocation2 + $0xac0] sm:$0xff]
    %v509 = vld [vmem:[#allocation2 + $0xac8] sm:$0xff]
    %v510 = vld [vmem:[#allocation2 + $0xad0] sm:$0xff]
    %v511 = vld [vmem:[#allocation2 + $0xad8] sm:$0xff]
    %v512 = vld [vmem:[#allocation2 + $0xae0] sm:$0xff]
    %v513 = vld [vmem:[#allocation2 + $0xae8] sm:$0xff]
    %v514 = vld [vmem:[#allocation2 + $0xaf0] sm:$0xff]
    %v515 = vld [vmem:[#allocation2 + $0xaf8] sm:$0xff]
    %v516 = vld [vmem:[#allocation2 + $0xb00] sm:$0xff]
    %v517 = vld [vmem:[#allocation2 + $0xb08] sm:$0xff]
    %v518 = vld [vmem:[#allocation2 + $0xb10] sm:$0xff]
    %v519 = vld [vmem:[#allocation2 + $0xb18] sm:$0xff]
    %v520 = vld [vmem:[#allocation2 + $0xb20] sm:$0xff]
    %v521 = vld [vmem:[#allocation2 + $0xb28] sm:$0xff]
    %v522 = vld [vmem:[#allocation2 + $0xb30] sm:$0xff]
    %v523 = vld [vmem:[#allocation2 + $0xb38] sm:$0xff]
    %v524 = vld [vmem:[#allocation2 + $0xb40] sm:$0xff]
    %v525 = vld [vmem:[#allocation2 + $0xb48] sm:$0xff]
    %v526 = vld [vmem:[#allocation2 + $0xb50] sm:$0xff]
    %v527 = vld [vmem:[#allocation2 + $0xb58] sm:$0xff]
    %v528 = vld [vmem:[#allocation2 + $0xb60] sm:$0xff]
    %v529 = vld [vmem:[#allocation2 + $0xb68] sm:$0xff]
    %v530 = vld [vmem:[#allocation2 + $0xb70] sm:$0xff]
    %v531 = vld [vmem:[#allocation2 + $0xb78] sm:$0xff]
    %v532 = vld [vmem:[#allocation2 + $0xb80] sm:$0xff]
    %v533 = vld [vmem:[#allocation2 + $0xb88] sm:$0xff]
    %v534 = vld [vmem:[#allocation2 + $0xb90] sm:$0xff]
    %v535 = vld [vmem:[#allocation2 + $0xb98] sm:$0xff]
    %v536 = vld [vmem:[#allocation2 + $0xba0] sm:$0xff]
    %v537 = vld [vmem:[#allocation2 + $0xba8] sm:$0xff]
    %v538 = vld [vmem:[#allocation2 + $0xbb0] sm:$0xff]
    %v539 = vld [vmem:[#allocation2 + $0xbb8] sm:$0xff]
    %v540 = vld [vmem:[#allocation2 + $0xbc0] sm:$0xff]
    %v541 = vld [vmem:[#allocation2 + $0xbc8] sm:$0xff]
    %v542 = vld [vmem:[#allocation2 + $0xbd0] sm:$0xff]
    %v543 = vld [vmem:[#allocation2 + $0xbd8] sm:$0xff]
    %v544 = vld [vmem:[#allocation2 + $0xbe0] sm:$0xff]
    %v545 = vld [vmem:[#allocation2 + $0xbe8] sm:$0xff]
    %v546 = vld [vmem:[#allocation2 + $0xbf0] sm:$0xff]
    %v547 = vld [vmem:[#allocation2 + $0xbf8] sm:$0xff]
    %v548 = vld [vmem:[#allocation2 + $0xc00] sm:$0xff]
    %v549 = vld [vmem:[#allocation2 + $0xc08] sm:$0xff]
    %v550 = vld [vmem:[#allocation2 + $0xc10] sm:$0xff]
    %v551 = vld [vmem:[#allocation2 + $0xc18] sm:$0xff]
    %v552 = vld [vmem:[#allocation2 + $0xc20] sm:$0xff]
    %v553 = vld [vmem:[#allocation2 + $0xc28] sm:$0xff]
    %v554 = vld [vmem:[#allocation2 + $0xc30] sm:$0xff]
    %v555 = vld [vmem:[#allocation2 + $0xc38] sm:$0xff]
    %v556 = vld [vmem:[#allocation2 + $0xc40] sm:$0xff]
    %v557 = vld [vmem:[#allocation2 + $0xc48] sm:$0xff]
    %v558 = vld [vmem:[#allocation2 + $0xc50] sm:$0xff]
    %v559 = vld [vmem:[#allocation2 + $0xc58] sm:$0xff]
    %v560 = vld [vmem:[#allocation2 + $0xc60] sm:$0xff]
    %v561 = vld [vmem:[#allocation2 + $0xc68] sm:$0xff]
    %v562 = vld [vmem:[#allocation2 + $0xc70] sm:$0xff]
    %v563 = vld [vmem:[#allocation2 + $0xc78] sm:$0xff]
    %v564 = vld [vmem:[#allocation2 + $0xc80] sm:$0xff]
    %v565 = vld [vmem:[#allocation2 + $0xc88] sm:$0xff]
    %v566 = vld [vmem:[#allocation2 + $0xc90] sm:$0xff]
    %v567 = vld [vmem:[#allocation2 + $0xc98] sm:$0xff]
    %v568 = vld [vmem:[#allocation2 + $0xca0] sm:$0xff]
    %v569 = vld [vmem:[#allocation2 + $0xca8] sm:$0xff]
    %v570 = vld [vmem:[#allocation2 + $0xcb0] sm:$0xff]
    %v571 = vld [vmem:[#allocation2 + $0xcb8] sm:$0xff]
    %v572 = vld [vmem:[#allocation2 + $0xcc0] sm:$0xff]
    %v573 = vld [vmem:[#allocation2 + $0xcc8] sm:$0xff]
    %v574 = vld [vmem:[#allocation2 + $0xcd0] sm:$0xff]
    %v575 = vld [vmem:[#allocation2 + $0xcd8] sm:$0xff]
    %v576 = vld [vmem:[#allocation2 + $0xce0] sm:$0xff]
    %v577 = vld [vmem:[#allocation2 + $0xce8] sm:$0xff]
    %v578 = vld [vmem:[#allocation2 + $0xcf0] sm:$0xff]
    %v579 = vld [vmem:[#allocation2 + $0xcf8] sm:$0xff]
    %v580 = vld [vmem:[#allocation2 + $0xd00] sm:$0xff]
    %v581 = vld [vmem:[#allocation2 + $0xd08] sm:$0xff]
    %v582 = vld [vmem:[#allocation2 + $0xd10] sm:$0xff]
    %v583 = vld [vmem:[#allocation2 + $0xd18] sm:$0xff]
    %v584 = vld [vmem:[#allocation2 + $0xd20] sm:$0xff]
    %v585 = vld [vmem:[#allocation2 + $0xd28] sm:$0xff]
    %v586 = vld [vmem:[#allocation2 + $0xd30] sm:$0xff]
    %v587 = vld [vmem:[#allocation2 + $0xd38] sm:$0xff]
    %v588 = vld [vmem:[#allocation2 + $0xd40] sm:$0xff]
    %v589 = vld [vmem:[#allocation2 + $0xd48] sm:$0xff]
    %v590 = vld [vmem:[#allocation2 + $0xd50] sm:$0xff]
    %v591 = vld [vmem:[#allocation2 + $0xd58] sm:$0xff]
    %v592 = vld [vmem:[#allocation2 + $0xd60] sm:$0xff]
    %v593 = vld [vmem:[#allocation2 + $0xd68] sm:$0xff]
    %v594 = vld [vmem:[#allocation2 + $0xd70] sm:$0xff]
    %v595 = vld [vmem:[#allocation2 + $0xd78] sm:$0xff]
    %v596 = vld [vmem:[#allocation2 + $0xd80] sm:$0xff]
    %v597 = vld [vmem:[#allocation2 + $0xd88] sm:$0xff]
    %v598 = vld [vmem:[#allocation2 + $0xd90] sm:$0xff]
    %v599 = vld [vmem:[#allocation2 + $0xd98] sm:$0xff]
    %v600 = vld [vmem:[#allocation2 + $0xda0] sm:$0xff]
    %v601 = vld [vmem:[#allocation2 + $0xda8] sm:$0xff]
    %v602 = vld [vmem:[#allocation2 + $0xdb0] sm:$0xff]
    %v603 = vld [vmem:[#allocation2 + $0xdb8] sm:$0xff]
    %v604 = vld [vmem:[#allocation2 + $0xdc0] sm:$0xff]
    %v605 = vld [vmem:[#allocation2 + $0xdc8] sm:$0xff]
    %v606 = vld [vmem:[#allocation2 + $0xdd0] sm:$0xff]
    %v607 = vld [vmem:[#allocation2 + $0xdd8] sm:$0xff]
    %v608 = vld [vmem:[#allocation2 + $0xde0] sm:$0xff]
    %v609 = vld [vmem:[#allocation2 + $0xde8] sm:$0xff]
    %v610 = vld [vmem:[#allocation2 + $0xdf0] sm:$0xff]
    %v611 = vld [vmem:[#allocation2 + $0xdf8] sm:$0xff]
    %v612 = vld [vmem:[#allocation2 + $0xe00] sm:$0xff]
    %v613 = vld [vmem:[#allocation2 + $0xe08] sm:$0xff]
    %v614 = vld [vmem:[#allocation2 + $0xe10] sm:$0xff]
    %v615 = vld [vmem:[#allocation2 + $0xe18] sm:$0xff]
    %v616 = vld [vmem:[#allocation2 + $0xe20] sm:$0xff]
    %v617 = vld [vmem:[#allocation2 + $0xe28] sm:$0xff]
    %v618 = vld [vmem:[#allocation2 + $0xe30] sm:$0xff]
    %v619 = vld [vmem:[#allocation2 + $0xe38] sm:$0xff]
    %v620 = vld [vmem:[#allocation2 + $0xe40] sm:$0xff]
    %v621 = vld [vmem:[#allocation2 + $0xe48] sm:$0xff]
    %v622 = vld [vmem:[#allocation2 + $0xe50] sm:$0xff]
    %v623 = vld [vmem:[#allocation2 + $0xe58] sm:$0xff]
    %v624 = vld [vmem:[#allocation2 + $0xe60] sm:$0xff]
    %v625 = vld [vmem:[#allocation2 + $0xe68] sm:$0xff]
    %v626 = vld [vmem:[#allocation2 + $0xe70] sm:$0xff]
    %v627 = vld [vmem:[#allocation2 + $0xe78] sm:$0xff]
    %v628 = vld [vmem:[#allocation2 + $0xe80] sm:$0xff]
    %v629 = vld [vmem:[#allocation2 + $0xe88] sm:$0xff]
    %v630 = vld [vmem:[#allocation2 + $0xe90] sm:$0xff]
    %v631 = vld [vmem:[#allocation2 + $0xe98] sm:$0xff]
    %v632 = vld [vmem:[#allocation2 + $0xea0] sm:$0xff]
    %v633 = vld [vmem:[#allocation2 + $0xea8] sm:$0xff]
    %v634 = vld [vmem:[#allocation2 + $0xeb0] sm:$0xff]
    %v635 = vld [vmem:[#allocation2 + $0xeb8] sm:$0xff]
    %v636 = vld [vmem:[#allocation2 + $0xec0] sm:$0xff]
    %v637 = vld [vmem:[#allocation2 + $0xec8] sm:$0xff]
    %v638 = vld [vmem:[#allocation2 + $0xed0] sm:$0xff]
    %v639 = vld [vmem:[#allocation2 + $0xed8] sm:$0xff]
    %v640 = vld [vmem:[#allocation2 + $0xee0] sm:$0xff]
    %v641 = vld [vmem:[#allocation2 + $0xee8] sm:$0xff]
    %v642 = vld [vmem:[#allocation2 + $0xef0] sm:$0xff]
    %v643 = vld [vmem:[#allocation2 + $0xef8] sm:$0xff]
    %v644 = vld [vmem:[#allocation2 + $0xf00] sm:$0xff]
    %v645 = vld [vmem:[#allocation2 + $0xf08] sm:$0xff]
    %v646 = vld [vmem:[#allocation2 + $0xf10] sm:$0xff]
    %v647 = vld [vmem:[#allocation2 + $0xf18] sm:$0xff]
    %v648 = vld [vmem:[#allocation2 + $0xf20] sm:$0xff]
    %v649 = vld [vmem:[#allocation2 + $0xf28] sm:$0xff]
    %v650 = vld [vmem:[#allocation2 + $0xf30] sm:$0xff]
    %v651 = vld [vmem:[#allocation2 + $0xf38] sm:$0xff]
    %v652 = vld [vmem:[#allocation2 + $0xf40] sm:$0xff]
    %v653 = vld [vmem:[#allocation2 + $0xf48] sm:$0xff]
    %v654 = vld [vmem:[#allocation2 + $0xf50] sm:$0xff]
    %v655 = vld [vmem:[#allocation2 + $0xf58] sm:$0xff]
    %v656 = vld [vmem:[#allocation2 + $0xf60] sm:$0xff]
    %v657 = vld [vmem:[#allocation2 + $0xf68] sm:$0xff]
    %v658 = vld [vmem:[#allocation2 + $0xf70] sm:$0xff]
    %v659 = vld [vmem:[#allocation2 + $0xf78] sm:$0xff]
    %v660 = vld [vmem:[#allocation2 + $0xf80] sm:$0xff]
    %v661 = vld [vmem:[#allocation2 + $0xf88] sm:$0xff]
    %v662 = vld [vmem:[#allocation2 + $0xf90] sm:$0xff]
    %v663 = vld [vmem:[#allocation2 + $0xf98] sm:$0xff]
    %v664 = vld [vmem:[#allocation2 + $0xfa0] sm:$0xff]
    %v665 = vld [vmem:[#allocation2 + $0xfa8] sm:$0xff]
    %v666 = vld [vmem:[#allocation2 + $0xfb0] sm:$0xff]
    %v667 = vld [vmem:[#allocation2 + $0xfb8] sm:$0xff]
    %v668 = vld [vmem:[#allocation2 + $0xfc0] sm:$0xff]
    %v669 = vld [vmem:[#allocation2 + $0xfc8] sm:$0xff]
    %v670 = vld [vmem:[#allocation2 + $0xfd0] sm:$0xff]
    %v671 = vld [vmem:[#allocation2 + $0xfd8] sm:$0xff]
    %v672 = vld [vmem:[#allocation2 + $0xfe0] sm:$0xff]
    %v673 = vld [vmem:[#allocation2 + $0xfe8] sm:$0xff]
    %v674 = vld [vmem:[#allocation2 + $0xff0] sm:$0xff]
    %v675 = vld [vmem:[#allocation2 + $0xff8] sm:$0xff]
    %v677 = vcombine.high %v163, %v163
    %v679 = vunpack.c.l.s4 1983009808
    %v680 = vunpack.c.0.s8 %v679
    %v681 = vlaneseq
    %v682 = vshrl.u32 %v681, 7
    %v683 = vsub.s32 %v680, %v682
    %v684 = vrot.slane %v163, %v683
    %v686 = vunpack.c.l.s4 1983009808
    %v687 = vunpack.c.0.s8 %v686
    %v688 = vlaneseq
    %v689 = vshrl.u32 %v688, 7
    %v690 = vsub.s32 %v687, %v689
    %v691 = vrot.slane %v677, %v690
    %v692 = vcombine.high %v684, %v684
    %v693 = vcombine.high %v691, %v691
    %698 = vmatprep.subr.mxu0 %v165
    %699 = vmatpush1.msra.mxu0 %v164
    %700 = vmatprep.subr.mxu0 %v173
    %701 = vmatpush1.msra.mxu0 %v172
    %702 = vmatprep.subr.mxu0 %v181
    %703 = vmatpush1.msra.mxu0 %v180
    %704 = vmatprep.subr.mxu0 %v189
    %705 = vmatpush1.msra.mxu0 %v188
    %706 = vmatprep.subr.mxu0 %v197
    %707 = vmatpush1.msra.mxu0 %v196
    %708 = vmatprep.subr.mxu0 %v205
    %709 = vmatpush1.msra.mxu0 %v204
    %710 = vmatprep.subr.mxu0 %v213
    %711 = vmatpush1.msra.mxu0 %v212
    %712 = vmatprep.subr.mxu0 %v221
    %713 = vmatpush1.msra.mxu0 %v220
    %714 = vmatprep.subr.mxu0 %v229
    %715 = vmatpush1.msra.mxu0 %v228
    %716 = vmatprep.subr.mxu0 %v237
    %717 = vmatpush1.msra.mxu0 %v236
    %718 = vmatprep.subr.mxu0 %v245
    %719 = vmatpush1.msra.mxu0 %v244
    %720 = vmatprep.subr.mxu0 %v253
    %721 = vmatpush1.msra.mxu0 %v252
    %722 = vmatprep.subr.mxu0 %v261
    %723 = vmatpush1.msra.mxu0 %v260
    %724 = vmatprep.subr.mxu0 %v269
    %725 = vmatpush1.msra.mxu0 %v268
    %726 = vmatprep.subr.mxu0 %v277
    %727 = vmatpush1.msra.mxu0 %v276
    %728 = vmatprep.subr.mxu0 %v285
    %729 = vmatpush1.msra.mxu0 %v284
    %730 = vmatprep.subr.mxu0 %v293
    %731 = vmatpush1.msra.mxu0 %v292
    %732 = vmatprep.subr.mxu0 %v301
    %733 = vmatpush1.msra.mxu0 %v300
    %734 = vmatprep.subr.mxu0 %v309
    %735 = vmatpush1.msra.mxu0 %v308
    %736 = vmatprep.subr.mxu0 %v317
    %737 = vmatpush1.msra.mxu0 %v316
    %738 = vmatprep.subr.mxu0 %v325
    %739 = vmatpush1.msra.mxu0 %v324
    %740 = vmatprep.subr.mxu0 %v333
    %741 = vmatpush1.msra.mxu0 %v332
    %742 = vmatprep.subr.mxu0 %v341
    %743 = vmatpush1.msra.mxu0 %v340
    %744 = vmatprep.subr.mxu0 %v349
    %745 = vmatpush1.msra.mxu0 %v348
    %746 = vmatprep.subr.mxu0 %v357
    %747 = vmatpush1.msra.mxu0 %v356
    %748 = vmatprep.subr.mxu0 %v365
    %749 = vmatpush1.msra.mxu0 %v364
    %750 = vmatprep.subr.mxu0 %v373
    %751 = vmatpush1.msra.mxu0 %v372
    %752 = vmatprep.subr.mxu0 %v381
    %753 = vmatpush1.msra.mxu0 %v380
    %754 = vmatprep.subr.mxu0 %v389
    %755 = vmatpush1.msra.mxu0 %v388
    %756 = vmatprep.subr.mxu0 %v397
    %757 = vmatpush1.msra.mxu0 %v396
    %758 = vmatprep.subr.mxu0 %v405
    %759 = vmatpush1.msra.mxu0 %v404
    %760 = vmatprep.subr.mxu0 %v413
    %761 = vmatpush1.msra.mxu0 %v412
    %762 = vmatprep.mubr.f32.mxu0 %v692
    %763 = vmatmul.mubr.f32.gmra.mrb[0].mxu0 %v684
    %v764 = vpop.f32.mrb[0].mxu0
    %v765 = vadd.f32 0.0, %v764
    %v766 = vpop.f32.mrb[0].mxu0
    %v767 = vadd.f32 0.0, %v766
    %768 = vdwg.mxu0
    %769 = vmatprep.subr.mxu0 %v421
    %770 = vmatpush1.msra.mxu0 %v420
    %771 = vmatprep.subr.mxu0 %v429
    %772 = vmatpush1.msra.mxu0 %v428
    %773 = vmatprep.subr.mxu0 %v437
    %774 = vmatpush1.msra.mxu0 %v436
    %775 = vmatprep.subr.mxu0 %v445
    %776 = vmatpush1.msra.mxu0 %v444
    %777 = vmatprep.subr.mxu0 %v453
    %778 = vmatpush1.msra.mxu0 %v452
    %779 = vmatprep.subr.mxu0 %v461
    %780 = vmatpush1.msra.mxu0 %v460
    %781 = vmatprep.subr.mxu0 %v469
    %782 = vmatpush1.msra.mxu0 %v468
    %783 = vmatprep.subr.mxu0 %v477
    %784 = vmatpush1.msra.mxu0 %v476
    %785 = vmatprep.subr.mxu0 %v485
    %786 = vmatpush1.msra.mxu0 %v484
    %787 = vmatprep.subr.mxu0 %v493
    %788 = vmatpush1.msra.mxu0 %v492
    %789 = vmatprep.subr.mxu0 %v501
    %790 = vmatpush1.msra.mxu0 %v500
    %791 = vmatprep.subr.mxu0 %v509
    %792 = vmatpush1.msra.mxu0 %v508
    %793 = vmatprep.subr.mxu0 %v517
    %794 = vmatpush1.msra.mxu0 %v516
    %795 = vmatprep.subr.mxu0 %v525
    %796 = vmatpush1.msra.mxu0 %v524
    %797 = vmatprep.subr.mxu0 %v533
    %798 = vmatpush1.msra.mxu0 %v532
    %799 = vmatprep.subr.mxu0 %v541
    %800 = vmatpush1.msra.mxu0 %v540
    %801 = vmatprep.subr.mxu0 %v549
    %802 = vmatpush1.msra.mxu0 %v548
    %803 = vmatprep.subr.mxu0 %v557
    %804 = vmatpush1.msra.mxu0 %v556
    %805 = vmatprep.subr.mxu0 %v565
    %806 = vmatpush1.msra.mxu0 %v564
    %807 = vmatprep.subr.mxu0 %v573
    %808 = vmatpush1.msra.mxu0 %v572
    %809 = vmatprep.subr.mxu0 %v581
    %810 = vmatpush1.msra.mxu0 %v580
    %811 = vmatprep.subr.mxu0 %v589
    %812 = vmatpush1.msra.mxu0 %v588
    %813 = vmatprep.subr.mxu0 %v597
    %814 = vmatpush1.msra.mxu0 %v596
    %815 = vmatprep.subr.mxu0 %v605
    %816 = vmatpush1.msra.mxu0 %v604
    %817 = vmatprep.subr.mxu0 %v613
    %818 = vmatpush1.msra.mxu0 %v612
    %819 = vmatprep.subr.mxu0 %v621
    %820 = vmatpush1.msra.mxu0 %v620
    %821 = vmatprep.subr.mxu0 %v629
    %822 = vmatpush1.msra.mxu0 %v628
    %823 = vmatprep.subr.mxu0 %v637
    %824 = vmatpush1.msra.mxu0 %v636
    %825 = vmatprep.subr.mxu0 %v645
    %826 = vmatpush1.msra.mxu0 %v644
    %827 = vmatprep.subr.mxu0 %v653
    %828 = vmatpush1.msra.mxu0 %v652
    %829 = vmatprep.subr.mxu0 %v661
    %830 = vmatpush1.msra.mxu0 %v660
    %831 = vmatprep.subr.mxu0 %v669
    %832 = vmatpush1.msra.mxu0 %v668
    %833 = vmatprep.mubr.f32.mxu0 %v693
    %834 = vmatmul.mubr.f32.gmra.mrb[0].mxu0 %v691
    %v835 = vpop.f32.mrb[0].mxu0
    %v836 = vadd.f32 %v765, %v835
    %v837 = vpop.f32.mrb[0].mxu0
    %v838 = vadd.f32 %v767, %v837
    %839 = vdwg.mxu0
    %840 = vmatprep.subr.mxu0 %v167
    %841 = vmatpush1.msra.mxu0 %v166
    %842 = vmatprep.subr.mxu0 %v175
    %843 = vmatpush1.msra.mxu0 %v174
    %844 = vmatprep.subr.mxu0 %v183
    %845 = vmatpush1.msra.mxu0 %v182
    %846 = vmatprep.subr.mxu0 %v191
    %847 = vmatpush1.msra.mxu0 %v190
    %848 = vmatprep.subr.mxu0 %v199
    %849 = vmatpush1.msra.mxu0 %v198
    %850 = vmatprep.subr.mxu0 %v207
    %851 = vmatpush1.msra.mxu0 %v206
    %852 = vmatprep.subr.mxu0 %v215
    %853 = vmatpush1.msra.mxu0 %v214
    %854 = vmatprep.subr.mxu0 %v223
    %855 = vmatpush1.msra.mxu0 %v222
    %856 = vmatprep.subr.mxu0 %v231
    %857 = vmatpush1.msra.mxu0 %v230
    %858 = vmatprep.subr.mxu0 %v239
    %859 = vmatpush1.msra.mxu0 %v238
    %860 = vmatprep.subr.mxu0 %v247
    %861 = vmatpush1.msra.mxu0 %v246
    %862 = vmatprep.subr.mxu0 %v255
    %863 = vmatpush1.msra.mxu0 %v254
    %864 = vmatprep.subr.mxu0 %v263
    %865 = vmatpush1.msra.mxu0 %v262
    %866 = vmatprep.subr.mxu0 %v271
    %867 = vmatpush1.msra.mxu0 %v270
    %868 = vmatprep.subr.mxu0 %v279
    %869 = vmatpush1.msra.mxu0 %v278
    %870 = vmatprep.subr.mxu0 %v287
    %871 = vmatpush1.msra.mxu0 %v286
    %872 = vmatprep.subr.mxu0 %v295
    %873 = vmatpush1.msra.mxu0 %v294
    %874 = vmatprep.subr.mxu0 %v303
    %875 = vmatpush1.msra.mxu0 %v302
    %876 = vmatprep.subr.mxu0 %v311
    %877 = vmatpush1.msra.mxu0 %v310
    %878 = vmatprep.subr.mxu0 %v319
    %879 = vmatpush1.msra.mxu0 %v318
    %880 = vmatprep.subr.mxu0 %v327
    %881 = vmatpush1.msra.mxu0 %v326
    %882 = vmatprep.subr.mxu0 %v335
    %883 = vmatpush1.msra.mxu0 %v334
    %884 = vmatprep.subr.mxu0 %v343
    %885 = vmatpush1.msra.mxu0 %v342
    %886 = vmatprep.subr.mxu0 %v351
    %887 = vmatpush1.msra.mxu0 %v350
    %888 = vmatprep.subr.mxu0 %v359
    %889 = vmatpush1.msra.mxu0 %v358
    %890 = vmatprep.subr.mxu0 %v367
    %891 = vmatpush1.msra.mxu0 %v366
    %892 = vmatprep.subr.mxu0 %v375
    %893 = vmatpush1.msra.mxu0 %v374
    %894 = vmatprep.subr.mxu0 %v383
    %895 = vmatpush1.msra.mxu0 %v382
    %896 = vmatprep.subr.mxu0 %v391
    %897 = vmatpush1.msra.mxu0 %v390
    %898 = vmatprep.subr.mxu0 %v399
    %899 = vmatpush1.msra.mxu0 %v398
    %900 = vmatprep.subr.mxu0 %v407
    %901 = vmatpush1.msra.mxu0 %v406
    %902 = vmatprep.subr.mxu0 %v415
    %903 = vmatpush1.msra.mxu0 %v414
    %904 = vmatprep.mubr.f32.mxu0 %v692
    %905 = vmatmul.mubr.f32.gmra.mrb[0].mxu0 %v684
    %v906 = vpop.f32.mrb[0].mxu0
    %v907 = vadd.f32 0.0, %v906
    %v908 = vpop.f32.mrb[0].mxu0
    %v909 = vadd.f32 0.0, %v908
    %910 = vdwg.mxu0
    %911 = vmatprep.subr.mxu0 %v423
    %912 = vmatpush1.msra.mxu0 %v422
    %913 = vmatprep.subr.mxu0 %v431
    %914 = vmatpush1.msra.mxu0 %v430
    %915 = vmatprep.subr.mxu0 %v439
    %916 = vmatpush1.msra.mxu0 %v438
    %917 = vmatprep.subr.mxu0 %v447
    %918 = vmatpush1.msra.mxu0 %v446
    %919 = vmatprep.subr.mxu0 %v455
    %920 = vmatpush1.msra.mxu0 %v454
    %921 = vmatprep.subr.mxu0 %v463
    %922 = vmatpush1.msra.mxu0 %v462
    %923 = vmatprep.subr.mxu0 %v471
    %924 = vmatpush1.msra.mxu0 %v470
    %925 = vmatprep.subr.mxu0 %v479
    %926 = vmatpush1.msra.mxu0 %v478
    %927 = vmatprep.subr.mxu0 %v487
    %928 = vmatpush1.msra.mxu0 %v486
    %929 = vmatprep.subr.mxu0 %v495
    %930 = vmatpush1.msra.mxu0 %v494
    %931 = vmatprep.subr.mxu0 %v503
    %932 = vmatpush1.msra.mxu0 %v502
    %933 = vmatprep.subr.mxu0 %v511
    %934 = vmatpush1.msra.mxu0 %v510
    %935 = vmatprep.subr.mxu0 %v519
    %936 = vmatpush1.msra.mxu0 %v518
    %937 = vmatprep.subr.mxu0 %v527
    %938 = vmatpush1.msra.mxu0 %v526
    %939 = vmatprep.subr.mxu0 %v535
    %940 = vmatpush1.msra.mxu0 %v534
    %941 = vmatprep.subr.mxu0 %v543
    %942 = vmatpush1.msra.mxu0 %v542
    %943 = vmatprep.subr.mxu0 %v551
    %944 = vmatpush1.msra.mxu0 %v550
    %945 = vmatprep.subr.mxu0 %v559
    %946 = vmatpush1.msra.mxu0 %v558
    %947 = vmatprep.subr.mxu0 %v567
    %948 = vmatpush1.msra.mxu0 %v566
    %949 = vmatprep.subr.mxu0 %v575
    %950 = vmatpush1.msra.mxu0 %v574
    %951 = vmatprep.subr.mxu0 %v583
    %952 = vmatpush1.msra.mxu0 %v582
    %953 = vmatprep.subr.mxu0 %v591
    %954 = vmatpush1.msra.mxu0 %v590
    %955 = vmatprep.subr.mxu0 %v599
    %956 = vmatpush1.msra.mxu0 %v598
    %957 = vmatprep.subr.mxu0 %v607
    %958 = vmatpush1.msra.mxu0 %v606
    %959 = vmatprep.subr.mxu0 %v615
    %960 = vmatpush1.msra.mxu0 %v614
    %961 = vmatprep.subr.mxu0 %v623
    %962 = vmatpush1.msra.mxu0 %v622
    %963 = vmatprep.subr.mxu0 %v631
    %964 = vmatpush1.msra.mxu0 %v630
    %965 = vmatprep.subr.mxu0 %v639
    %966 = vmatpush1.msra.mxu0 %v638
    %967 = vmatprep.subr.mxu0 %v647
    %968 = vmatpush1.msra.mxu0 %v646
    %969 = vmatprep.subr.mxu0 %v655
    %970 = vmatpush1.msra.mxu0 %v654
    %971 = vmatprep.subr.mxu0 %v663
    %972 = vmatpush1.msra.mxu0 %v662
    %973 = vmatprep.subr.mxu0 %v671
    %974 = vmatpush1.msra.mxu0 %v670
    %975 = vmatprep.mubr.f32.mxu0 %v693
    %976 = vmatmul.mubr.f32.gmra.mrb[0].mxu0 %v691
    %v977 = vpop.f32.mrb[0].mxu0
    %v978 = vadd.f32 %v907, %v977
    %v979 = vpop.f32.mrb[0].mxu0
    %v980 = vadd.f32 %v909, %v979
    %981 = vdwg.mxu0
    %982 = vmatprep.subr.mxu0 %v169
    %983 = vmatpush1.msra.mxu0 %v168
    %984 = vmatprep.subr.mxu0 %v177
    %985 = vmatpush1.msra.mxu0 %v176
    %986 = vmatprep.subr.mxu0 %v185
    %987 = vmatpush1.msra.mxu0 %v184
    %988 = vmatprep.subr.mxu0 %v193
    %989 = vmatpush1.msra.mxu0 %v192
    %990 = vmatprep.subr.mxu0 %v201
    %991 = vmatpush1.msra.mxu0 %v200
    %992 = vmatprep.subr.mxu0 %v209
    %993 = vmatpush1.msra.mxu0 %v208
    %994 = vmatprep.subr.mxu0 %v217
    %995 = vmatpush1.msra.mxu0 %v216
    %996 = vmatprep.subr.mxu0 %v225
    %997 = vmatpush1.msra.mxu0 %v224
    %998 = vmatprep.subr.mxu0 %v233
    %999 = vmatpush1.msra.mxu0 %v232
    %1000 = vmatprep.subr.mxu0 %v241
    %1001 = vmatpush1.msra.mxu0 %v240
    %1002 = vmatprep.subr.mxu0 %v249
    %1003 = vmatpush1.msra.mxu0 %v248
    %1004 = vmatprep.subr.mxu0 %v257
    %1005 = vmatpush1.msra.mxu0 %v256
    %1006 = vmatprep.subr.mxu0 %v265
    %1007 = vmatpush1.msra.mxu0 %v264
    %1008 = vmatprep.subr.mxu0 %v273
    %1009 = vmatpush1.msra.mxu0 %v272
    %1010 = vmatprep.subr.mxu0 %v281
    %1011 = vmatpush1.msra.mxu0 %v280
    %1012 = vmatprep.subr.mxu0 %v289
    %1013 = vmatpush1.msra.mxu0 %v288
    %1014 = vmatprep.subr.mxu0 %v297
    %1015 = vmatpush1.msra.mxu0 %v296
    %1016 = vmatprep.subr.mxu0 %v305
    %1017 = vmatpush1.msra.mxu0 %v304
    %1018 = vmatprep.subr.mxu0 %v313
    %1019 = vmatpush1.msra.mxu0 %v312
    %1020 = vmatprep.subr.mxu0 %v321
    %1021 = vmatpush1.msra.mxu0 %v320
    %1022 = vmatprep.subr.mxu0 %v329
    %1023 = vmatpush1.msra.mxu0 %v328
    %1024 = vmatprep.subr.mxu0 %v337
    %1025 = vmatpush1.msra.mxu0 %v336
    %1026 = vmatprep.subr.mxu0 %v345
    %1027 = vmatpush1.msra.mxu0 %v344
    %1028 = vmatprep.subr.mxu0 %v353
    %1029 = vmatpush1.msra.mxu0 %v352
    %1030 = vmatprep.subr.mxu0 %v361
    %1031 = vmatpush1.msra.mxu0 %v360
    %1032 = vmatprep.subr.mxu0 %v369
    %1033 = vmatpush1.msra.mxu0 %v368
    %1034 = vmatprep.subr.mxu0 %v377
    %1035 = vmatpush1.msra.mxu0 %v376
    %1036 = vmatprep.subr.mxu0 %v385
    %1037 = vmatpush1.msra.mxu0 %v384
    %1038 = vmatprep.subr.mxu0 %v393
    %1039 = vmatpush1.msra.mxu0 %v392
    %1040 = vmatprep.subr.mxu0 %v401
    %1041 = vmatpush1.msra.mxu0 %v400
    %1042 = vmatprep.subr.mxu0 %v409
    %1043 = vmatpush1.msra.mxu0 %v408
    %1044 = vmatprep.subr.mxu0 %v417
    %1045 = vmatpush1.msra.mxu0 %v416
    %1046 = vmatprep.mubr.f32.mxu0 %v692
    %1047 = vmatmul.mubr.f32.gmra.mrb[0].mxu0 %v684
    %v1048 = vpop.f32.mrb[0].mxu0
    %v1049 = vadd.f32 0.0, %v1048
    %v1050 = vpop.f32.mrb[0].mxu0
    %v1051 = vadd.f32 0.0, %v1050
    %1052 = vdwg.mxu0
    %1053 = vmatprep.subr.mxu0 %v425
    %1054 = vmatpush1.msra.mxu0 %v424
    %1055 = vmatprep.subr.mxu0 %v433
    %1056 = vmatpush1.msra.mxu0 %v432
    %1057 = vmatprep.subr.mxu0 %v441
    %1058 = vmatpush1.msra.mxu0 %v440
    %1059 = vmatprep.subr.mxu0 %v449
    %1060 = vmatpush1.msra.mxu0 %v448
    %1061 = vmatprep.subr.mxu0 %v457
    %1062 = vmatpush1.msra.mxu0 %v456
    %1063 = vmatprep.subr.mxu0 %v465
    %1064 = vmatpush1.msra.mxu0 %v464
    %1065 = vmatprep.subr.mxu0 %v473
    %1066 = vmatpush1.msra.mxu0 %v472
    %1067 = vmatprep.subr.mxu0 %v481
    %1068 = vmatpush1.msra.mxu0 %v480
    %1069 = vmatprep.subr.mxu0 %v489
    %1070 = vmatpush1.msra.mxu0 %v488
    %1071 = vmatprep.subr.mxu0 %v497
    %1072 = vmatpush1.msra.mxu0 %v496
    %1073 = vmatprep.subr.mxu0 %v505
    %1074 = vmatpush1.msra.mxu0 %v504
    %1075 = vmatprep.subr.mxu0 %v513
    %1076 = vmatpush1.msra.mxu0 %v512
    %1077 = vmatprep.subr.mxu0 %v521
    %1078 = vmatpush1.msra.mxu0 %v520
    %1079 = vmatprep.subr.mxu0 %v529
    %1080 = vmatpush1.msra.mxu0 %v528
    %1081 = vmatprep.subr.mxu0 %v537
    %1082 = vmatpush1.msra.mxu0 %v536
    %1083 = vmatprep.subr.mxu0 %v545
    %1084 = vmatpush1.msra.mxu0 %v544
    %1085 = vmatprep.subr.mxu0 %v553
    %1086 = vmatpush1.msra.mxu0 %v552
    %1087 = vmatprep.subr.mxu0 %v561
    %1088 = vmatpush1.msra.mxu0 %v560
    %1089 = vmatprep.subr.mxu0 %v569
    %1090 = vmatpush1.msra.mxu0 %v568
    %1091 = vmatprep.subr.mxu0 %v577
    %1092 = vmatpush1.msra.mxu0 %v576
    %1093 = vmatprep.subr.mxu0 %v585
    %1094 = vmatpush1.msra.mxu0 %v584
    %1095 = vmatprep.subr.mxu0 %v593
    %1096 = vmatpush1.msra.mxu0 %v592
    %1097 = vmatprep.subr.mxu0 %v601
    %1098 = vmatpush1.msra.mxu0 %v600
    %1099 = vmatprep.subr.mxu0 %v609
    %1100 = vmatpush1.msra.mxu0 %v608
    %1101 = vmatprep.subr.mxu0 %v617
    %1102 = vmatpush1.msra.mxu0 %v616
    %1103 = vmatprep.subr.mxu0 %v625
    %1104 = vmatpush1.msra.mxu0 %v624
    %1105 = vmatprep.subr.mxu0 %v633
    %1106 = vmatpush1.msra.mxu0 %v632
    %1107 = vmatprep.subr.mxu0 %v641
    %1108 = vmatpush1.msra.mxu0 %v640
    %1109 = vmatprep.subr.mxu0 %v649
    %1110 = vmatpush1.msra.mxu0 %v648
    %1111 = vmatprep.subr.mxu0 %v657
    %1112 = vmatpush1.msra.mxu0 %v656
    %1113 = vmatprep.subr.mxu0 %v665
    %1114 = vmatpush1.msra.mxu0 %v664
    %1115 = vmatprep.subr.mxu0 %v673
    %1116 = vmatpush1.msra.mxu0 %v672
    %1117 = vmatprep.mubr.f32.mxu0 %v693
    %1118 = vmatmul.mubr.f32.gmra.mrb[0].mxu0 %v691
    %v1119 = vpop.f32.mrb[0].mxu0
    %v1120 = vadd.f32 %v1049, %v1119
    %v1121 = vpop.f32.mrb[0].mxu0
    %v1122 = vadd.f32 %v1051, %v1121
    %1123 = vdwg.mxu0
    %1124 = vmatprep.subr.mxu0 %v171
    %1125 = vmatpush1.msra.mxu0 %v170
    %1126 = vmatprep.subr.mxu0 %v179
    %1127 = vmatpush1.msra.mxu0 %v178
    %1128 = vmatprep.subr.mxu0 %v187
    %1129 = vmatpush1.msra.mxu0 %v186
    %1130 = vmatprep.subr.mxu0 %v195
    %1131 = vmatpush1.msra.mxu0 %v194
    %1132 = vmatprep.subr.mxu0 %v203
    %1133 = vmatpush1.msra.mxu0 %v202
    %1134 = vmatprep.subr.mxu0 %v211
    %1135 = vmatpush1.msra.mxu0 %v210
    %1136 = vmatprep.subr.mxu0 %v219
    %1137 = vmatpush1.msra.mxu0 %v218
    %1138 = vmatprep.subr.mxu0 %v227
    %1139 = vmatpush1.msra.mxu0 %v226
    %1140 = vmatprep.subr.mxu0 %v235
    %1141 = vmatpush1.msra.mxu0 %v234
    %1142 = vmatprep.subr.mxu0 %v243
    %1143 = vmatpush1.msra.mxu0 %v242
    %1144 = vmatprep.subr.mxu0 %v251
    %1145 = vmatpush1.msra.mxu0 %v250
    %1146 = vmatprep.subr.mxu0 %v259
    %1147 = vmatpush1.msra.mxu0 %v258
    %1148 = vmatprep.subr.mxu0 %v267
    %1149 = vmatpush1.msra.mxu0 %v266
    %1150 = vmatprep.subr.mxu0 %v275
    %1151 = vmatpush1.msra.mxu0 %v274
    %1152 = vmatprep.subr.mxu0 %v283
    %1153 = vmatpush1.msra.mxu0 %v282
    %1154 = vmatprep.subr.mxu0 %v291
    %1155 = vmatpush1.msra.mxu0 %v290
    %1156 = vmatprep.subr.mxu0 %v299
    %1157 = vmatpush1.msra.mxu0 %v298
    %1158 = vmatprep.subr.mxu0 %v307
    %1159 = vmatpush1.msra.mxu0 %v306
    %1160 = vmatprep.subr.mxu0 %v315
    %1161 = vmatpush1.msra.mxu0 %v314
    %1162 = vmatprep.subr.mxu0 %v323
    %1163 = vmatpush1.msra.mxu0 %v322
    %1164 = vmatprep.subr.mxu0 %v331
    %1165 = vmatpush1.msra.mxu0 %v330
    %1166 = vmatprep.subr.mxu0 %v339
    %1167 = vmatpush1.msra.mxu0 %v338
    %1168 = vmatprep.subr.mxu0 %v347
    %1169 = vmatpush1.msra.mxu0 %v346
    %1170 = vmatprep.subr.mxu0 %v355
    %1171 = vmatpush1.msra.mxu0 %v354
    %1172 = vmatprep.subr.mxu0 %v363
    %1173 = vmatpush1.msra.mxu0 %v362
    %1174 = vmatprep.subr.mxu0 %v371
    %1175 = vmatpush1.msra.mxu0 %v370
    %1176 = vmatprep.subr.mxu0 %v379
    %1177 = vmatpush1.msra.mxu0 %v378
    %1178 = vmatprep.subr.mxu0 %v387
    %1179 = vmatpush1.msra.mxu0 %v386
    %1180 = vmatprep.subr.mxu0 %v395
    %1181 = vmatpush1.msra.mxu0 %v394
    %1182 = vmatprep.subr.mxu0 %v403
    %1183 = vmatpush1.msra.mxu0 %v402
    %1184 = vmatprep.subr.mxu0 %v411
    %1185 = vmatpush1.msra.mxu0 %v410
    %1186 = vmatprep.subr.mxu0 %v419
    %1187 = vmatpush1.msra.mxu0 %v418
    %1188 = vmatprep.mubr.f32.mxu0 %v692
    %1189 = vmatmul.mubr.f32.gmra.mrb[0].mxu0 %v684
    %v1190 = vpop.f32.mrb[0].mxu0
    %v1191 = vadd.f32 0.0, %v1190
    %v1192 = vpop.f32.mrb[0].mxu0
    %v1193 = vadd.f32 0.0, %v1192
    %1194 = vdwg.mxu0
    %1195 = vmatprep.subr.mxu0 %v427
    %1196 = vmatpush1.msra.mxu0 %v426
    %1197 = vmatprep.subr.mxu0 %v435
    %1198 = vmatpush1.msra.mxu0 %v434
    %1199 = vmatprep.subr.mxu0 %v443
    %1200 = vmatpush1.msra.mxu0 %v442
    %1201 = vmatprep.subr.mxu0 %v451
    %1202 = vmatpush1.msra.mxu0 %v450
    %1203 = vmatprep.subr.mxu0 %v459
    %1204 = vmatpush1.msra.mxu0 %v458
    %1205 = vmatprep.subr.mxu0 %v467
    %1206 = vmatpush1.msra.mxu0 %v466
    %1207 = vmatprep.subr.mxu0 %v475
    %1208 = vmatpush1.msra.mxu0 %v474
    %1209 = vmatprep.subr.mxu0 %v483
    %1210 = vmatpush1.msra.mxu0 %v482
    %1211 = vmatprep.subr.mxu0 %v491
    %1212 = vmatpush1.msra.mxu0 %v490
    %1213 = vmatprep.subr.mxu0 %v499
    %1214 = vmatpush1.msra.mxu0 %v498
    %1215 = vmatprep.subr.mxu0 %v507
    %1216 = vmatpush1.msra.mxu0 %v506
    %1217 = vmatprep.subr.mxu0 %v515
    %1218 = vmatpush1.msra.mxu0 %v514
    %1219 = vmatprep.subr.mxu0 %v523
    %1220 = vmatpush1.msra.mxu0 %v522
    %1221 = vmatprep.subr.mxu0 %v531
    %1222 = vmatpush1.msra.mxu0 %v530
    %1223 = vmatprep.subr.mxu0 %v539
    %1224 = vmatpush1.msra.mxu0 %v538
    %1225 = vmatprep.subr.mxu0 %v547
    %1226 = vmatpush1.msra.mxu0 %v546
    %1227 = vmatprep.subr.mxu0 %v555
    %1228 = vmatpush1.msra.mxu0 %v554
    %1229 = vmatprep.subr.mxu0 %v563
    %1230 = vmatpush1.msra.mxu0 %v562
    %1231 = vmatprep.subr.mxu0 %v571
    %1232 = vmatpush1.msra.mxu0 %v570
    %1233 = vmatprep.subr.mxu0 %v579
    %1234 = vmatpush1.msra.mxu0 %v578
    %1235 = vmatprep.subr.mxu0 %v587
    %1236 = vmatpush1.msra.mxu0 %v586
    %1237 = vmatprep.subr.mxu0 %v595
    %1238 = vmatpush1.msra.mxu0 %v594
    %1239 = vmatprep.subr.mxu0 %v603
    %1240 = vmatpush1.msra.mxu0 %v602
    %1241 = vmatprep.subr.mxu0 %v611
    %1242 = vmatpush1.msra.mxu0 %v610
    %1243 = vmatprep.subr.mxu0 %v619
    %1244 = vmatpush1.msra.mxu0 %v618
    %1245 = vmatprep.subr.mxu0 %v627
    %1246 = vmatpush1.msra.mxu0 %v626
    %1247 = vmatprep.subr.mxu0 %v635
    %1248 = vmatpush1.msra.mxu0 %v634
    %1249 = vmatprep.subr.mxu0 %v643
    %1250 = vmatpush1.msra.mxu0 %v642
    %1251 = vmatprep.subr.mxu0 %v651
    %1252 = vmatpush1.msra.mxu0 %v650
    %1253 = vmatprep.subr.mxu0 %v659
    %1254 = vmatpush1.msra.mxu0 %v658
    %1255 = vmatprep.subr.mxu0 %v667
    %1256 = vmatpush1.msra.mxu0 %v666
    %1257 = vmatprep.subr.mxu0 %v675
    %1258 = vmatpush1.msra.mxu0 %v674
    %1259 = vmatprep.mubr.f32.mxu0 %v693
    %1260 = vmatmul.mubr.f32.gmra.mrb[0].mxu0 %v691
    %v1261 = vpop.f32.mrb[0].mxu0
    %v1262 = vadd.f32 %v1191, %v1261
    %v1263 = vpop.f32.mrb[0].mxu0
    %v1264 = vadd.f32 %v1193, %v1263
    %1265 = vdwg.mxu0
    %vm1266 = vcmask 1041408
    %v1267 = vsel %vm1266, %v836, 0.0
    %v1268 = vrot.slane %v1267, 4
    %v1269 = vadd.f32 %v1267, %v1268
    %v1270 = vrot.slane %v1269, 2
    %v1271 = vadd.f32 %v1269, %v1270
    %v1272 = vrot.slane %v1271, 1
    %v1273 = vadd.f32 %v1271, %v1272
    %v1274 = vsel %vm1266, %v838, 0.0
    %v1275 = vrot.slane %v1274, 4
    %v1276 = vadd.f32 %v1274, %v1275
    %v1277 = vrot.slane %v1276, 2
    %v1278 = vadd.f32 %v1276, %v1277
    %v1279 = vrot.slane %v1278, 1
    %v1280 = vadd.f32 %v1278, %v1279
    %v1281 = vsel %vm1266, %v978, 0.0
    %v1282 = vrot.slane %v1281, 4
    %v1283 = vadd.f32 %v1281, %v1282
    %v1284 = vrot.slane %v1283, 2
    %v1285 = vadd.f32 %v1283, %v1284
    %v1286 = vrot.slane %v1285, 1
    %v1287 = vadd.f32 %v1285, %v1286
    %v1288 = vsel %vm1266, %v980, 0.0
    %v1289 = vrot.slane %v1288, 4
    %v1290 = vadd.f32 %v1288, %v1289
    %v1291 = vrot.slane %v1290, 2
    %v1292 = vadd.f32 %v1290, %v1291
    %v1293 = vrot.slane %v1292, 1
    %v1294 = vadd.f32 %v1292, %v1293
    %v1295 = vsel %vm1266, %v1120, 0.0
    %v1296 = vrot.slane %v1295, 4
    %v1297 = vadd.f32 %v1295, %v1296
    %v1298 = vrot.slane %v1297, 2
    %v1299 = vadd.f32 %v1297, %v1298
    %v1300 = vrot.slane %v1299, 1
    %v1301 = vadd.f32 %v1299, %v1300
    %v1302 = vsel %vm1266, %v1122, 0.0
    %v1303 = vrot.slane %v1302, 4
    %v1304 = vadd.f32 %v1302, %v1303
    %v1305 = vrot.slane %v1304, 2
    %v1306 = vadd.f32 %v1304, %v1305
    %v1307 = vrot.slane %v1306, 1
    %v1308 = vadd.f32 %v1306, %v1307
    %v1309 = vsel %vm1266, %v1262, 0.0
    %v1310 = vrot.slane %v1309, 4
    %v1311 = vadd.f32 %v1309, %v1310
    %v1312 = vrot.slane %v1311, 2
    %v1313 = vadd.f32 %v1311, %v1312
    %v1314 = vrot.slane %v1313, 1
    %v1315 = vadd.f32 %v1313, %v1314
    %v1316 = vsel %vm1266, %v1264, 0.0
    %v1317 = vrot.slane %v1316, 4
    %v1318 = vadd.f32 %v1316, %v1317
    %v1319 = vrot.slane %v1318, 2
    %v1320 = vadd.f32 %v1318, %v1319
    %v1321 = vrot.slane %v1320, 1
    %v1322 = vadd.f32 %v1320, %v1321
    %v1323 = vrcp.pop 2.0
    %v1324 = vmul.f32 %v1273, %v1323
    %v1325 = vmul.f32 %v1280, %v1323
    %v1326 = vmul.f32 %v1287, %v1323
    %v1327 = vmul.f32 %v1294, %v1323
    %v1328 = vmul.f32 %v1301, %v1323
    %v1329 = vmul.f32 %v1308, %v1323
    %v1330 = vmul.f32 %v1315, %v1323
    %v1331 = vmul.f32 %v1322, %v1323
    %v1332 = vsub.f32 %v836, %v1324
    %v1333 = vsub.f32 %v838, %v1325
    %v1334 = vsub.f32 %v978, %v1326
    %v1335 = vsub.f32 %v980, %v1327
    %v1336 = vsub.f32 %v1120, %v1328
    %v1337 = vsub.f32 %v1122, %v1329
    %v1338 = vsub.f32 %v1262, %v1330
    %v1339 = vsub.f32 %v1264, %v1331
    %v1340 = vmul.f32 %v1332, %v1332
    %v1341 = vmul.f32 %v1333, %v1333
    %v1342 = vmul.f32 %v1334, %v1334
    %v1343 = vmul.f32 %v1335, %v1335
    %v1344 = vmul.f32 %v1336, %v1336
    %v1345 = vmul.f32 %v1337, %v1337
    %v1346 = vmul.f32 %v1338, %v1338
    %v1347 = vmul.f32 %v1339, %v1339
    %v1348 = vsel %vm1266, %v1340, 0.0
    %v1349 = vrot.slane %v1348, 4
    %v1350 = vadd.f32 %v1348, %v1349
    %v1351 = vrot.slane %v1350, 2
    %v1352 = vadd.f32 %v1350, %v1351
    %v1353 = vrot.slane %v1352, 1
    %v1354 = vadd.f32 %v1352, %v1353
    %v1355 = vsel %vm1266, %v1341, 0.0
    %v1356 = vrot.slane %v1355, 4
    %v1357 = vadd.f32 %v1355, %v1356
    %v1358 = vrot.slane %v1357, 2
    %v1359 = vadd.f32 %v1357, %v1358
    %v1360 = vrot.slane %v1359, 1
    %v1361 = vadd.f32 %v1359, %v1360
    %v1362 = vsel %vm1266, %v1342, 0.0
    %v1363 = vrot.slane %v1362, 4
    %v1364 = vadd.f32 %v1362, %v1363
    %v1365 = vrot.slane %v1364, 2
    %v1366 = vadd.f32 %v1364, %v1365
    %v1367 = vrot.slane %v1366, 1
    %v1368 = vadd.f32 %v1366, %v1367
    %v1369 = vsel %vm1266, %v1343, 0.0
    %v1370 = vrot.slane %v1369, 4
    %v1371 = vadd.f32 %v1369, %v1370
    %v1372 = vrot.slane %v1371, 2
    %v1373 = vadd.f32 %v1371, %v1372
    %v1374 = vrot.slane %v1373, 1
    %v1375 = vadd.f32 %v1373, %v1374
    %v1376 = vsel %vm1266, %v1344, 0.0
    %v1377 = vrot.slane %v1376, 4
    %v1378 = vadd.f32 %v1376, %v1377
    %v1379 = vrot.slane %v1378, 2
    %v1380 = vadd.f32 %v1378, %v1379
    %v1381 = vrot.slane %v1380, 1
    %v1382 = vadd.f32 %v1380, %v1381
    %v1383 = vsel %vm1266, %v1345, 0.0
    %v1384 = vrot.slane %v1383, 4
    %v1385 = vadd.f32 %v1383, %v1384
    %v1386 = vrot.slane %v1385, 2
    %v1387 = vadd.f32 %v1385, %v1386
    %v1388 = vrot.slane %v1387, 1
    %v1389 = vadd.f32 %v1387, %v1388
    %v1390 = vsel %vm1266, %v1346, 0.0
    %v1391 = vrot.slane %v1390, 4
    %v1392 = vadd.f32 %v1390, %v1391
    %v1393 = vrot.slane %v1392, 2
    %v1394 = vadd.f32 %v1392, %v1393
    %v1395 = vrot.slane %v1394, 1
    %v1396 = vadd.f32 %v1394, %v1395
    %v1397 = vsel %vm1266, %v1347, 0.0
    %v1398 = vrot.slane %v1397, 4
    %v1399 = vadd.f32 %v1397, %v1398
    %v1400 = vrot.slane %v1399, 2
    %v1401 = vadd.f32 %v1399, %v1400
    %v1402 = vrot.slane %v1401, 1
    %v1403 = vadd.f32 %v1401, %v1402
    %v1404 = vmul.f32 %v1354, %v1323
    %v1405 = vmul.f32 %v1361, %v1323
    %v1406 = vmul.f32 %v1368, %v1323
    %v1407 = vmul.f32 %v1375, %v1323
    %v1408 = vmul.f32 %v1382, %v1323
    %v1409 = vmul.f32 %v1389, %v1323
    %v1410 = vmul.f32 %v1396, %v1323
    %v1411 = vmul.f32 %v1403, %v1323
    %v1412 = vadd.f32 %v1404, 1e-05
    %v1413 = vadd.f32 %v1405, 1e-05
    %v1414 = vadd.f32 %v1406, 1e-05
    %v1415 = vadd.f32 %v1407, 1e-05
    %v1416 = vadd.f32 %v1408, 1e-05
    %v1417 = vadd.f32 %v1409, 1e-05
    %v1418 = vadd.f32 %v1410, 1e-05
    %v1419 = vadd.f32 %v1411, 1e-05
    %v1420 = vrsqrt.pop %v1412
    %v1421 = vrsqrt.pop %v1413
    %v1422 = vrsqrt.pop %v1414
    %v1423 = vrsqrt.pop %v1415
    %v1424 = vrsqrt.pop %v1416
    %v1425 = vrsqrt.pop %v1417
    %v1426 = vrsqrt.pop %v1418
    %v1427 = vrsqrt.pop %v1419
    %v1428 = vmul.f32 %v1332, %v1420
    %v1429 = vmul.f32 %v1333, %v1421
    %v1430 = vmul.f32 %v1334, %v1422
    %v1431 = vmul.f32 %v1335, %v1423
    %v1432 = vmul.f32 %v1336, %v1424
    %v1433 = vmul.f32 %v1337, %v1425
    %v1434 = vmul.f32 %v1338, %v1426
    %v1435 = vmul.f32 %v1339, %v1427
    %v1436 = vld [vmem:[#allocation5] sm:$0xff]
    %v1438 = vlaneseq
    %v1439 = vshrl.u32 %v1438, 7
    %v1440 = vsub.s32 0, %v1439
    %v1441 = vrot.slane %v1436, %v1440
    %v1442 = vlaneseq
    %v1443 = vshrl.u32 %v1442, 7
    %v1444 = vsub.s32 1, %v1443
    %v1445 = vrot.slane %v1436, %v1444
    %v1446 = vlaneseq
    %v1447 = vshrl.u32 %v1446, 7
    %v1448 = vsub.s32 2, %v1447
    %v1449 = vrot.slane %v1436, %v1448
    %v1450 = vlaneseq
    %v1451 = vshrl.u32 %v1450, 7
    %v1452 = vsub.s32 3, %v1451
    %v1453 = vrot.slane %v1436, %v1452
    %v1454 = vlaneseq
    %v1455 = vshrl.u32 %v1454, 7
    %v1456 = vsub.s32 4, %v1455
    %v1457 = vrot.slane %v1436, %v1456
    %v1458 = vlaneseq
    %v1459 = vshrl.u32 %v1458, 7
    %v1460 = vsub.s32 5, %v1459
    %v1461 = vrot.slane %v1436, %v1460
    %v1462 = vlaneseq
    %v1463 = vshrl.u32 %v1462, 7
    %v1464 = vsub.s32 6, %v1463
    %v1465 = vrot.slane %v1436, %v1464
    %v1466 = vlaneseq
    %v1467 = vshrl.u32 %v1466, 7
    %v1468 = vsub.s32 7, %v1467
    %v1469 = vrot.slane %v1436, %v1468
    %v1478 = vmul.f32 %v1428, %v1441
    %v1479 = vmul.f32 %v1429, %v1445
    %v1480 = vmul.f32 %v1430, %v1449
    %v1481 = vmul.f32 %v1431, %v1453
    %v1482 = vmul.f32 %v1432, %v1457
    %v1483 = vmul.f32 %v1433, %v1461
    %v1484 = vmul.f32 %v1434, %v1465
    %v1485 = vmul.f32 %v1435, %v1469
    %v1486 = vld [vmem:[#allocation7] sm:$0xff]
    %v1488 = vlaneseq
    %v1489 = vshrl.u32 %v1488, 7
    %v1490 = vsub.s32 0, %v1489
    %v1491 = vrot.slane %v1486, %v1490
    %v1492 = vlaneseq
    %v1493 = vshrl.u32 %v1492, 7
    %v1494 = vsub.s32 1, %v1493
    %v1495 = vrot.slane %v1486, %v1494
    %v1496 = vlaneseq
    %v1497 = vshrl.u32 %v1496, 7
    %v1498 = vsub.s32 2, %v1497
    %v1499 = vrot.slane %v1486, %v1498
    %v1500 = vlaneseq
    %v1501 = vshrl.u32 %v1500, 7
    %v1502 = vsub.s32 3, %v1501
    %v1503 = vrot.slane %v1486, %v1502
    %v1504 = vlaneseq
    %v1505 = vshrl.u32 %v1504, 7
    %v1506 = vsub.s32 4, %v1505
    %v1507 = vrot.slane %v1486, %v1506
    %v1508 = vlaneseq
    %v1509 = vshrl.u32 %v1508, 7
    %v1510 = vsub.s32 5, %v1509
    %v1511 = vrot.slane %v1486, %v1510
    %v1512 = vlaneseq
    %v1513 = vshrl.u32 %v1512, 7
    %v1514 = vsub.s32 6, %v1513
    %v1515 = vrot.slane %v1486, %v1514
    %v1516 = vlaneseq
    %v1517 = vshrl.u32 %v1516, 7
    %v1518 = vsub.s32 7, %v1517
    %v1519 = vrot.slane %v1486, %v1518
    %v1528 = vadd.f32 %v1478, %v1491
    %v1529 = vadd.f32 %v1479, %v1495
    %v1530 = vadd.f32 %v1480, %v1499
    %v1531 = vadd.f32 %v1481, %v1503
    %v1532 = vadd.f32 %v1482, %v1507
    %v1533 = vadd.f32 %v1483, %v1511
    %v1534 = vadd.f32 %v1484, %v1515
    %v1535 = vadd.f32 %v1485, %v1519
    %v1536 = vmax.f32 %v1528, 0.0
    %v1537 = vmax.f32 %v1529, 0.0
    %v1538 = vmax.f32 %v1530, 0.0
    %v1539 = vmax.f32 %v1531, 0.0
    %v1540 = vmax.f32 %v1532, 0.0
    %v1541 = vmax.f32 %v1533, 0.0
    %v1542 = vmax.f32 %v1534, 0.0
    %v1543 = vmax.f32 %v1535, 0.0
    %v1544 = vld [vmem:[#allocation8] sm:$0xff]
    %v1545 = vld [vmem:[#allocation8 + $0x8] sm:$0xff]
    %v1546 = vld [vmem:[#allocation8 + $0x10] sm:$0xff]
    %v1547 = vld [vmem:[#allocation8 + $0x18] sm:$0xff]
    %v1548 = vld [vmem:[#allocation8 + $0x20] sm:$0xff]
    %v1549 = vld [vmem:[#allocation8 + $0x28] sm:$0xff]
    %v1550 = vld [vmem:[#allocation8 + $0x30] sm:$0xff]
    %v1551 = vld [vmem:[#allocation8 + $0x38] sm:$0xff]
    %v1552 = vld [vmem:[#allocation8 + $0x40] sm:$0xff]
    %v1553 = vld [vmem:[#allocation8 + $0x48] sm:$0xff]
    %v1554 = vld [vmem:[#allocation8 + $0x50] sm:$0xff]
    %v1555 = vld [vmem:[#allocation8 + $0x58] sm:$0xff]
    %v1556 = vld [vmem:[#allocation8 + $0x60] sm:$0xff]
    %v1557 = vld [vmem:[#allocation8 + $0x68] sm:$0xff]
    %v1558 = vld [vmem:[#allocation8 + $0x70] sm:$0xff]
    %v1559 = vld [vmem:[#allocation8 + $0x78] sm:$0xff]
    %v1560 = vld [vmem:[#allocation8 + $0x80] sm:$0xff]
    %v1561 = vld [vmem:[#allocation8 + $0x88] sm:$0xff]
    %v1562 = vld [vmem:[#allocation8 + $0x90] sm:$0xff]
    %v1563 = vld [vmem:[#allocation8 + $0x98] sm:$0xff]
    %v1564 = vld [vmem:[#allocation8 + $0xa0] sm:$0xff]
    %v1565 = vld [vmem:[#allocation8 + $0xa8] sm:$0xff]
    %v1566 = vld [vmem:[#allocation8 + $0xb0] sm:$0xff]
    %v1567 = vld [vmem:[#allocation8 + $0xb8] sm:$0xff]
    %v1568 = vld [vmem:[#allocation8 + $0xc0] sm:$0xff]
    %v1569 = vld [vmem:[#allocation8 + $0xc8] sm:$0xff]
    %v1570 = vld [vmem:[#allocation8 + $0xd0] sm:$0xff]
    %v1571 = vld [vmem:[#allocation8 + $0xd8] sm:$0xff]
    %v1572 = vld [vmem:[#allocation8 + $0xe0] sm:$0xff]
    %v1573 = vld [vmem:[#allocation8 + $0xe8] sm:$0xff]
    %v1574 = vld [vmem:[#allocation8 + $0xf0] sm:$0xff]
    %v1575 = vld [vmem:[#allocation8 + $0xf8] sm:$0xff]
    %v1576 = vld [vmem:[#allocation8 + $0x100] sm:$0xff]
    %v1577 = vld [vmem:[#allocation8 + $0x108] sm:$0xff]
    %v1578 = vld [vmem:[#allocation8 + $0x110] sm:$0xff]
    %v1579 = vld [vmem:[#allocation8 + $0x118] sm:$0xff]
    %v1580 = vld [vmem:[#allocation8 + $0x120] sm:$0xff]
    %v1581 = vld [vmem:[#allocation8 + $0x128] sm:$0xff]
    %v1582 = vld [vmem:[#allocation8 + $0x130] sm:$0xff]
    %v1583 = vld [vmem:[#allocation8 + $0x138] sm:$0xff]
    %v1584 = vld [vmem:[#allocation8 + $0x140] sm:$0xff]
    %v1585 = vld [vmem:[#allocation8 + $0x148] sm:$0xff]
    %v1586 = vld [vmem:[#allocation8 + $0x150] sm:$0xff]
    %v1587 = vld [vmem:[#allocation8 + $0x158] sm:$0xff]
    %v1588 = vld [vmem:[#allocation8 + $0x160] sm:$0xff]
    %v1589 = vld [vmem:[#allocation8 + $0x168] sm:$0xff]
    %v1590 = vld [vmem:[#allocation8 + $0x170] sm:$0xff]
    %v1591 = vld [vmem:[#allocation8 + $0x178] sm:$0xff]
    %v1592 = vld [vmem:[#allocation8 + $0x180] sm:$0xff]
    %v1593 = vld [vmem:[#allocation8 + $0x188] sm:$0xff]
    %v1594 = vld [vmem:[#allocation8 + $0x190] sm:$0xff]
    %v1595 = vld [vmem:[#allocation8 + $0x198] sm:$0xff]
    %v1596 = vld [vmem:[#allocation8 + $0x1a0] sm:$0xff]
    %v1597 = vld [vmem:[#allocation8 + $0x1a8] sm:$0xff]
    %v1598 = vld [vmem:[#allocation8 + $0x1b0] sm:$0xff]
    %v1599 = vld [vmem:[#allocation8 + $0x1b8] sm:$0xff]
    %v1600 = vld [vmem:[#allocation8 + $0x1c0] sm:$0xff]
    %v1601 = vld [vmem:[#allocation8 + $0x1c8] sm:$0xff]
    %v1602 = vld [vmem:[#allocation8 + $0x1d0] sm:$0xff]
    %v1603 = vld [vmem:[#allocation8 + $0x1d8] sm:$0xff]
    %v1604 = vld [vmem:[#allocation8 + $0x1e0] sm:$0xff]
    %v1605 = vld [vmem:[#allocation8 + $0x1e8] sm:$0xff]
    %v1606 = vld [vmem:[#allocation8 + $0x1f0] sm:$0xff]
    %v1607 = vld [vmem:[#allocation8 + $0x1f8] sm:$0xff]
    %v1608 = vld [vmem:[#allocation8 + $0x200] sm:$0xff]
    %v1609 = vld [vmem:[#allocation8 + $0x208] sm:$0xff]
    %v1610 = vld [vmem:[#allocation8 + $0x210] sm:$0xff]
    %v1611 = vld [vmem:[#allocation8 + $0x218] sm:$0xff]
    %v1612 = vld [vmem:[#allocation8 + $0x220] sm:$0xff]
    %v1613 = vld [vmem:[#allocation8 + $0x228] sm:$0xff]
    %v1614 = vld [vmem:[#allocation8 + $0x230] sm:$0xff]
    %v1615 = vld [vmem:[#allocation8 + $0x238] sm:$0xff]
    %v1616 = vld [vmem:[#allocation8 + $0x240] sm:$0xff]
    %v1617 = vld [vmem:[#allocation8 + $0x248] sm:$0xff]
    %v1618 = vld [vmem:[#allocation8 + $0x250] sm:$0xff]
    %v1619 = vld [vmem:[#allocation8 + $0x258] sm:$0xff]
    %v1620 = vld [vmem:[#allocation8 + $0x260] sm:$0xff]
    %v1621 = vld [vmem:[#allocation8 + $0x268] sm:$0xff]
    %v1622 = vld [vmem:[#allocation8 + $0x270] sm:$0xff]
    %v1623 = vld [vmem:[#allocation8 + $0x278] sm:$0xff]
    %v1624 = vld [vmem:[#allocation8 + $0x280] sm:$0xff]
    %v1625 = vld [vmem:[#allocation8 + $0x288] sm:$0xff]
    %v1626 = vld [vmem:[#allocation8 + $0x290] sm:$0xff]
    %v1627 = vld [vmem:[#allocation8 + $0x298] sm:$0xff]
    %v1628 = vld [vmem:[#allocation8 + $0x2a0] sm:$0xff]
    %v1629 = vld [vmem:[#allocation8 + $0x2a8] sm:$0xff]
    %v1630 = vld [vmem:[#allocation8 + $0x2b0] sm:$0xff]
    %v1631 = vld [vmem:[#allocation8 + $0x2b8] sm:$0xff]
    %v1632 = vld [vmem:[#allocation8 + $0x2c0] sm:$0xff]
    %v1633 = vld [vmem:[#allocation8 + $0x2c8] sm:$0xff]
    %v1634 = vld [vmem:[#allocation8 + $0x2d0] sm:$0xff]
    %v1635 = vld [vmem:[#allocation8 + $0x2d8] sm:$0xff]
    %v1636 = vld [vmem:[#allocation8 + $0x2e0] sm:$0xff]
    %v1637 = vld [vmem:[#allocation8 + $0x2e8] sm:$0xff]
    %v1638 = vld [vmem:[#allocation8 + $0x2f0] sm:$0xff]
    %v1639 = vld [vmem:[#allocation8 + $0x2f8] sm:$0xff]
    %v1640 = vld [vmem:[#allocation8 + $0x300] sm:$0xff]
    %v1641 = vld [vmem:[#allocation8 + $0x308] sm:$0xff]
    %v1642 = vld [vmem:[#allocation8 + $0x310] sm:$0xff]
    %v1643 = vld [vmem:[#allocation8 + $0x318] sm:$0xff]
    %v1644 = vld [vmem:[#allocation8 + $0x320] sm:$0xff]
    %v1645 = vld [vmem:[#allocation8 + $0x328] sm:$0xff]
    %v1646 = vld [vmem:[#allocation8 + $0x330] sm:$0xff]
    %v1647 = vld [vmem:[#allocation8 + $0x338] sm:$0xff]
    %v1648 = vld [vmem:[#allocation8 + $0x340] sm:$0xff]
    %v1649 = vld [vmem:[#allocation8 + $0x348] sm:$0xff]
    %v1650 = vld [vmem:[#allocation8 + $0x350] sm:$0xff]
    %v1651 = vld [vmem:[#allocation8 + $0x358] sm:$0xff]
    %v1652 = vld [vmem:[#allocation8 + $0x360] sm:$0xff]
    %v1653 = vld [vmem:[#allocation8 + $0x368] sm:$0xff]
    %v1654 = vld [vmem:[#allocation8 + $0x370] sm:$0xff]
    %v1655 = vld [vmem:[#allocation8 + $0x378] sm:$0xff]
    %v1656 = vld [vmem:[#allocation8 + $0x380] sm:$0xff]
    %v1657 = vld [vmem:[#allocation8 + $0x388] sm:$0xff]
    %v1658 = vld [vmem:[#allocation8 + $0x390] sm:$0xff]
    %v1659 = vld [vmem:[#allocation8 + $0x398] sm:$0xff]
    %v1660 = vld [vmem:[#allocation8 + $0x3a0] sm:$0xff]
    %v1661 = vld [vmem:[#allocation8 + $0x3a8] sm:$0xff]
    %v1662 = vld [vmem:[#allocation8 + $0x3b0] sm:$0xff]
    %v1663 = vld [vmem:[#allocation8 + $0x3b8] sm:$0xff]
    %v1664 = vld [vmem:[#allocation8 + $0x3c0] sm:$0xff]
    %v1665 = vld [vmem:[#allocation8 + $0x3c8] sm:$0xff]
    %v1666 = vld [vmem:[#allocation8 + $0x3d0] sm:$0xff]
    %v1667 = vld [vmem:[#allocation8 + $0x3d8] sm:$0xff]
    %v1668 = vld [vmem:[#allocation8 + $0x3e0] sm:$0xff]
    %v1669 = vld [vmem:[#allocation8 + $0x3e8] sm:$0xff]
    %v1670 = vld [vmem:[#allocation8 + $0x3f0] sm:$0xff]
    %v1671 = vld [vmem:[#allocation8 + $0x3f8] sm:$0xff]
    %v1672 = vld [vmem:[#allocation10] sm:$0x1]
    %v1674 = vlaneseq
    %v1675 = vshrl.u32 %v1674, 7
    %v1676 = vsub.s32 0, %v1675
    %v1677 = vrot.slane %v1672, %v1676
    %1679 = vmatprep.subr.mxu0 0.0
    %1680 = vmatpush1.msra.mxu0 %v1544
    %1681 = vmatprep.subr.mxu0 0.0
    %1682 = vmatpush1.msra.mxu0 %v1545
    %1683 = vmatprep.subr.mxu0 0.0
    %1684 = vmatpush1.msra.mxu0 %v1546
    %1685 = vmatprep.subr.mxu0 0.0
    %1686 = vmatpush1.msra.mxu0 %v1547
    %1687 = vmatprep.subr.mxu0 0.0
    %1688 = vmatpush1.msra.mxu0 %v1548
    %1689 = vmatprep.subr.mxu0 0.0
    %1690 = vmatpush1.msra.mxu0 %v1549
    %1691 = vmatprep.subr.mxu0 0.0
    %1692 = vmatpush1.msra.mxu0 %v1550
    %1693 = vmatprep.subr.mxu0 0.0
    %1694 = vmatpush1.msra.mxu0 %v1551
    %1695 = vmatprep.subr.mxu0 0.0
    %1696 = vmatpush1.msra.mxu0 %v1552
    %1697 = vmatprep.subr.mxu0 0.0
    %1698 = vmatpush1.msra.mxu0 %v1553
    %1699 = vmatprep.subr.mxu0 0.0
    %1700 = vmatpush1.msra.mxu0 %v1554
    %1701 = vmatprep.subr.mxu0 0.0
    %1702 = vmatpush1.msra.mxu0 %v1555
    %1703 = vmatprep.subr.mxu0 0.0
    %1704 = vmatpush1.msra.mxu0 %v1556
    %1705 = vmatprep.subr.mxu0 0.0
    %1706 = vmatpush1.msra.mxu0 %v1557
    %1707 = vmatprep.subr.mxu0 0.0
    %1708 = vmatpush1.msra.mxu0 %v1558
    %1709 = vmatprep.subr.mxu0 0.0
    %1710 = vmatpush1.msra.mxu0 %v1559
    %1711 = vmatprep.subr.mxu0 0.0
    %1712 = vmatpush1.msra.mxu0 %v1560
    %1713 = vmatprep.subr.mxu0 0.0
    %1714 = vmatpush1.msra.mxu0 %v1561
    %1715 = vmatprep.subr.mxu0 0.0
    %1716 = vmatpush1.msra.mxu0 %v1562
    %1717 = vmatprep.subr.mxu0 0.0
    %1718 = vmatpush1.msra.mxu0 %v1563
    %1719 = vmatprep.subr.mxu0 0.0
    %1720 = vmatpush1.msra.mxu0 %v1564
    %1721 = vmatprep.subr.mxu0 0.0
    %1722 = vmatpush1.msra.mxu0 %v1565
    %1723 = vmatprep.subr.mxu0 0.0
    %1724 = vmatpush1.msra.mxu0 %v1566
    %1725 = vmatprep.subr.mxu0 0.0
    %1726 = vmatpush1.msra.mxu0 %v1567
    %1727 = vmatprep.subr.mxu0 0.0
    %1728 = vmatpush1.msra.mxu0 %v1568
    %1729 = vmatprep.subr.mxu0 0.0
    %1730 = vmatpush1.msra.mxu0 %v1569
    %1731 = vmatprep.subr.mxu0 0.0
    %1732 = vmatpush1.msra.mxu0 %v1570
    %1733 = vmatprep.subr.mxu0 0.0
    %1734 = vmatpush1.msra.mxu0 %v1571
    %1735 = vmatprep.subr.mxu0 0.0
    %1736 = vmatpush1.msra.mxu0 %v1572
    %1737 = vmatprep.subr.mxu0 0.0
    %1738 = vmatpush1.msra.mxu0 %v1573
    %1739 = vmatprep.subr.mxu0 0.0
    %1740 = vmatpush1.msra.mxu0 %v1574
    %1741 = vmatprep.subr.mxu0 0.0
    %1742 = vmatpush1.msra.mxu0 %v1575
    %1743 = vmatprep.mubr.f32.mxu0 %v1537
    %1744 = vmatmul.mubr.f32.gmra.mrb[0].mxu0 %v1536
    %v1745 = vpop.f32.mrb[0].mxu0
    %v1746 = vadd.f32 %v1677, %v1745
    %v1747 = vpop.f32.mrb[0].mxu0
    %1748 = vdwg.mxu0
    %1749 = vmatprep.subr.mxu0 0.0
    %1750 = vmatpush1.msra.mxu0 %v1576
    %1751 = vmatprep.subr.mxu0 0.0
    %1752 = vmatpush1.msra.mxu0 %v1577
    %1753 = vmatprep.subr.mxu0 0.0
    %1754 = vmatpush1.msra.mxu0 %v1578
    %1755 = vmatprep.subr.mxu0 0.0
    %1756 = vmatpush1.msra.mxu0 %v1579
    %1757 = vmatprep.subr.mxu0 0.0
    %1758 = vmatpush1.msra.mxu0 %v1580
    %1759 = vmatprep.subr.mxu0 0.0
    %1760 = vmatpush1.msra.mxu0 %v1581
    %1761 = vmatprep.subr.mxu0 0.0
    %1762 = vmatpush1.msra.mxu0 %v1582
    %1763 = vmatprep.subr.mxu0 0.0
    %1764 = vmatpush1.msra.mxu0 %v1583
    %1765 = vmatprep.subr.mxu0 0.0
    %1766 = vmatpush1.msra.mxu0 %v1584
    %1767 = vmatprep.subr.mxu0 0.0
    %1768 = vmatpush1.msra.mxu0 %v1585
    %1769 = vmatprep.subr.mxu0 0.0
    %1770 = vmatpush1.msra.mxu0 %v1586
    %1771 = vmatprep.subr.mxu0 0.0
    %1772 = vmatpush1.msra.mxu0 %v1587
    %1773 = vmatprep.subr.mxu0 0.0
    %1774 = vmatpush1.msra.mxu0 %v1588
    %1775 = vmatprep.subr.mxu0 0.0
    %1776 = vmatpush1.msra.mxu0 %v1589
    %1777 = vmatprep.subr.mxu0 0.0
    %1778 = vmatpush1.msra.mxu0 %v1590
    %1779 = vmatprep.subr.mxu0 0.0
    %1780 = vmatpush1.msra.mxu0 %v1591
    %1781 = vmatprep.subr.mxu0 0.0
    %1782 = vmatpush1.msra.mxu0 %v1592
    %1783 = vmatprep.subr.mxu0 0.0
    %1784 = vmatpush1.msra.mxu0 %v1593
    %1785 = vmatprep.subr.mxu0 0.0
    %1786 = vmatpush1.msra.mxu0 %v1594
    %1787 = vmatprep.subr.mxu0 0.0
    %1788 = vmatpush1.msra.mxu0 %v1595
    %1789 = vmatprep.subr.mxu0 0.0
    %1790 = vmatpush1.msra.mxu0 %v1596
    %1791 = vmatprep.subr.mxu0 0.0
    %1792 = vmatpush1.msra.mxu0 %v1597
    %1793 = vmatprep.subr.mxu0 0.0
    %1794 = vmatpush1.msra.mxu0 %v1598
    %1795 = vmatprep.subr.mxu0 0.0
    %1796 = vmatpush1.msra.mxu0 %v1599
    %1797 = vmatprep.subr.mxu0 0.0
    %1798 = vmatpush1.msra.mxu0 %v1600
    %1799 = vmatprep.subr.mxu0 0.0
    %1800 = vmatpush1.msra.mxu0 %v1601
    %1801 = vmatprep.subr.mxu0 0.0
    %1802 = vmatpush1.msra.mxu0 %v1602
    %1803 = vmatprep.subr.mxu0 0.0
    %1804 = vmatpush1.msra.mxu0 %v1603
    %1805 = vmatprep.subr.mxu0 0.0
    %1806 = vmatpush1.msra.mxu0 %v1604
    %1807 = vmatprep.subr.mxu0 0.0
    %1808 = vmatpush1.msra.mxu0 %v1605
    %1809 = vmatprep.subr.mxu0 0.0
    %1810 = vmatpush1.msra.mxu0 %v1606
    %1811 = vmatprep.subr.mxu0 0.0
    %1812 = vmatpush1.msra.mxu0 %v1607
    %1813 = vmatprep.mubr.f32.mxu0 %v1539
    %1814 = vmatmul.mubr.f32.gmra.mrb[0].mxu0 %v1538
    %v1815 = vpop.f32.mrb[0].mxu0
    %v1816 = vadd.f32 %v1746, %v1815
    %v1817 = vpop.f32.mrb[0].mxu0
    %1818 = vdwg.mxu0
    %1819 = vmatprep.subr.mxu0 0.0
    %1820 = vmatpush1.msra.mxu0 %v1608
    %1821 = vmatprep.subr.mxu0 0.0
    %1822 = vmatpush1.msra.mxu0 %v1609
    %1823 = vmatprep.subr.mxu0 0.0
    %1824 = vmatpush1.msra.mxu0 %v1610
    %1825 = vmatprep.subr.mxu0 0.0
    %1826 = vmatpush1.msra.mxu0 %v1611
    %1827 = vmatprep.subr.mxu0 0.0
    %1828 = vmatpush1.msra.mxu0 %v1612
    %1829 = vmatprep.subr.mxu0 0.0
    %1830 = vmatpush1.msra.mxu0 %v1613
    %1831 = vmatprep.subr.mxu0 0.0
    %1832 = vmatpush1.msra.mxu0 %v1614
    %1833 = vmatprep.subr.mxu0 0.0
    %1834 = vmatpush1.msra.mxu0 %v1615
    %1835 = vmatprep.subr.mxu0 0.0
    %1836 = vmatpush1.msra.mxu0 %v1616
    %1837 = vmatprep.subr.mxu0 0.0
    %1838 = vmatpush1.msra.mxu0 %v1617
    %1839 = vmatprep.subr.mxu0 0.0
    %1840 = vmatpush1.msra.mxu0 %v1618
    %1841 = vmatprep.subr.mxu0 0.0
    %1842 = vmatpush1.msra.mxu0 %v1619
    %1843 = vmatprep.subr.mxu0 0.0
    %1844 = vmatpush1.msra.mxu0 %v1620
    %1845 = vmatprep.subr.mxu0 0.0
    %1846 = vmatpush1.msra.mxu0 %v1621
    %1847 = vmatprep.subr.mxu0 0.0
    %1848 = vmatpush1.msra.mxu0 %v1622
    %1849 = vmatprep.subr.mxu0 0.0
    %1850 = vmatpush1.msra.mxu0 %v1623
    %1851 = vmatprep.subr.mxu0 0.0
    %1852 = vmatpush1.msra.mxu0 %v1624
    %1853 = vmatprep.subr.mxu0 0.0
    %1854 = vmatpush1.msra.mxu0 %v1625
    %1855 = vmatprep.subr.mxu0 0.0
    %1856 = vmatpush1.msra.mxu0 %v1626
    %1857 = vmatprep.subr.mxu0 0.0
    %1858 = vmatpush1.msra.mxu0 %v1627
    %1859 = vmatprep.subr.mxu0 0.0
    %1860 = vmatpush1.msra.mxu0 %v1628
    %1861 = vmatprep.subr.mxu0 0.0
    %1862 = vmatpush1.msra.mxu0 %v1629
    %1863 = vmatprep.subr.mxu0 0.0
    %1864 = vmatpush1.msra.mxu0 %v1630
    %1865 = vmatprep.subr.mxu0 0.0
    %1866 = vmatpush1.msra.mxu0 %v1631
    %1867 = vmatprep.subr.mxu0 0.0
    %1868 = vmatpush1.msra.mxu0 %v1632
    %1869 = vmatprep.subr.mxu0 0.0
    %1870 = vmatpush1.msra.mxu0 %v1633
    %1871 = vmatprep.subr.mxu0 0.0
    %1872 = vmatpush1.msra.mxu0 %v1634
    %1873 = vmatprep.subr.mxu0 0.0
    %1874 = vmatpush1.msra.mxu0 %v1635
    %1875 = vmatprep.subr.mxu0 0.0
    %1876 = vmatpush1.msra.mxu0 %v1636
    %1877 = vmatprep.subr.mxu0 0.0
    %1878 = vmatpush1.msra.mxu0 %v1637
    %1879 = vmatprep.subr.mxu0 0.0
    %1880 = vmatpush1.msra.mxu0 %v1638
    %1881 = vmatprep.subr.mxu0 0.0
    %1882 = vmatpush1.msra.mxu0 %v1639
    %1883 = vmatprep.mubr.f32.mxu0 %v1541
    %1884 = vmatmul.mubr.f32.gmra.mrb[0].mxu0 %v1540
    %v1885 = vpop.f32.mrb[0].mxu0
    %v1886 = vadd.f32 %v1816, %v1885
    %v1887 = vpop.f32.mrb[0].mxu0
    %1888 = vdwg.mxu0
    %1889 = vmatprep.subr.mxu0 0.0
    %1890 = vmatpush1.msra.mxu0 %v1640
    %1891 = vmatprep.subr.mxu0 0.0
    %1892 = vmatpush1.msra.mxu0 %v1641
    %1893 = vmatprep.subr.mxu0 0.0
    %1894 = vmatpush1.msra.mxu0 %v1642
    %1895 = vmatprep.subr.mxu0 0.0
    %1896 = vmatpush1.msra.mxu0 %v1643
    %1897 = vmatprep.subr.mxu0 0.0
    %1898 = vmatpush1.msra.mxu0 %v1644
    %1899 = vmatprep.subr.mxu0 0.0
    %1900 = vmatpush1.msra.mxu0 %v1645
    %1901 = vmatprep.subr.mxu0 0.0
    %1902 = vmatpush1.msra.mxu0 %v1646
    %1903 = vmatprep.subr.mxu0 0.0
    %1904 = vmatpush1.msra.mxu0 %v1647
    %1905 = vmatprep.subr.mxu0 0.0
    %1906 = vmatpush1.msra.mxu0 %v1648
    %1907 = vmatprep.subr.mxu0 0.0
    %1908 = vmatpush1.msra.mxu0 %v1649
    %1909 = vmatprep.subr.mxu0 0.0
    %1910 = vmatpush1.msra.mxu0 %v1650
    %1911 = vmatprep.subr.mxu0 0.0
    %1912 = vmatpush1.msra.mxu0 %v1651
    %1913 = vmatprep.subr.mxu0 0.0
    %1914 = vmatpush1.msra.mxu0 %v1652
    %1915 = vmatprep.subr.mxu0 0.0
    %1916 = vmatpush1.msra.mxu0 %v1653
    %1917 = vmatprep.subr.mxu0 0.0
    %1918 = vmatpush1.msra.mxu0 %v1654
    %1919 = vmatprep.subr.mxu0 0.0
    %1920 = vmatpush1.msra.mxu0 %v1655
    %1921 = vmatprep.subr.mxu0 0.0
    %1922 = vmatpush1.msra.mxu0 %v1656
    %1923 = vmatprep.subr.mxu0 0.0
    %1924 = vmatpush1.msra.mxu0 %v1657
    %1925 = vmatprep.subr.mxu0 0.0
    %1926 = vmatpush1.msra.mxu0 %v1658
    %1927 = vmatprep.subr.mxu0 0.0
    %1928 = vmatpush1.msra.mxu0 %v1659
    %1929 = vmatprep.subr.mxu0 0.0
    %1930 = vmatpush1.msra.mxu0 %v1660
    %1931 = vmatprep.subr.mxu0 0.0
    %1932 = vmatpush1.msra.mxu0 %v1661
    %1933 = vmatprep.subr.mxu0 0.0
    %1934 = vmatpush1.msra.mxu0 %v1662
    %1935 = vmatprep.subr.mxu0 0.0
    %1936 = vmatpush1.msra.mxu0 %v1663
    %1937 = vmatprep.subr.mxu0 0.0
    %1938 = vmatpush1.msra.mxu0 %v1664
    %1939 = vmatprep.subr.mxu0 0.0
    %1940 = vmatpush1.msra.mxu0 %v1665
    %1941 = vmatprep.subr.mxu0 0.0
    %1942 = vmatpush1.msra.mxu0 %v1666
    %1943 = vmatprep.subr.mxu0 0.0
    %1944 = vmatpush1.msra.mxu0 %v1667
    %1945 = vmatprep.subr.mxu0 0.0
    %1946 = vmatpush1.msra.mxu0 %v1668
    %1947 = vmatprep.subr.mxu0 0.0
    %1948 = vmatpush1.msra.mxu0 %v1669
    %1949 = vmatprep.subr.mxu0 0.0
    %1950 = vmatpush1.msra.mxu0 %v1670
    %1951 = vmatprep.subr.mxu0 0.0
    %1952 = vmatpush1.msra.mxu0 %v1671
    %1953 = vmatprep.mubr.f32.mxu0 %v1543
    %1954 = vmatmul.mubr.f32.gmra.mrb[0].mxu0 %v1542
    %v1955 = vpop.f32.mrb[0].mxu0
    %v1956 = vadd.f32 %v1886, %v1955
    %v1957 = vpop.f32.mrb[0].mxu0
    %1958 = vdwg.mxu0
    %v1959 = vld [vmem:[#allocation11] sm:$0xff]
    %v1960 = vld [vmem:[#allocation11 + $0x8] sm:$0xff]
    %v1961 = vld [vmem:[#allocation11 + $0x10] sm:$0xff]
    %v1962 = vld [vmem:[#allocation11 + $0x18] sm:$0xff]
    %v1963 = vld [vmem:[#allocation11 + $0x20] sm:$0xff]
    %v1964 = vld [vmem:[#allocation11 + $0x28] sm:$0xff]
    %v1965 = vld [vmem:[#allocation11 + $0x30] sm:$0xff]
    %v1966 = vld [vmem:[#allocation11 + $0x38] sm:$0xff]
    %v1967 = vld [vmem:[#allocation11 + $0x40] sm:$0xff]
    %v1968 = vld [vmem:[#allocation11 + $0x48] sm:$0xff]
    %v1969 = vld [vmem:[#allocation11 + $0x50] sm:$0xff]
    %v1970 = vld [vmem:[#allocation11 + $0x58] sm:$0xff]
    %v1971 = vld [vmem:[#allocation11 + $0x60] sm:$0xff]
    %v1972 = vld [vmem:[#allocation11 + $0x68] sm:$0xff]
    %v1973 = vld [vmem:[#allocation11 + $0x70] sm:$0xff]
    %v1974 = vld [vmem:[#allocation11 + $0x78] sm:$0xff]
    %v1975 = vld [vmem:[#allocation11 + $0x80] sm:$0xff]
    %v1976 = vld [vmem:[#allocation11 + $0x88] sm:$0xff]
    %v1977 = vld [vmem:[#allocation11 + $0x90] sm:$0xff]
    %v1978 = vld [vmem:[#allocation11 + $0x98] sm:$0xff]
    %v1979 = vld [vmem:[#allocation11 + $0xa0] sm:$0xff]
    %v1980 = vld [vmem:[#allocation11 + $0xa8] sm:$0xff]
    %v1981 = vld [vmem:[#allocation11 + $0xb0] sm:$0xff]
    %v1982 = vld [vmem:[#allocation11 + $0xb8] sm:$0xff]
    %v1983 = vld [vmem:[#allocation11 + $0xc0] sm:$0xff]
    %v1984 = vld [vmem:[#allocation11 + $0xc8] sm:$0xff]
    %v1985 = vld [vmem:[#allocation11 + $0xd0] sm:$0xff]
    %v1986 = vld [vmem:[#allocation11 + $0xd8] sm:$0xff]
    %v1987 = vld [vmem:[#allocation11 + $0xe0] sm:$0xff]
    %v1988 = vld [vmem:[#allocation11 + $0xe8] sm:$0xff]
    %v1989 = vld [vmem:[#allocation11 + $0xf0] sm:$0xff]
    %v1990 = vld [vmem:[#allocation11 + $0xf8] sm:$0xff]
    %v1991 = vld [vmem:[#allocation11 + $0x100] sm:$0xff]
    %v1992 = vld [vmem:[#allocation11 + $0x108] sm:$0xff]
    %v1993 = vld [vmem:[#allocation11 + $0x110] sm:$0xff]
    %v1994 = vld [vmem:[#allocation11 + $0x118] sm:$0xff]
    %v1995 = vld [vmem:[#allocation11 + $0x120] sm:$0xff]
    %v1996 = vld [vmem:[#allocation11 + $0x128] sm:$0xff]
    %v1997 = vld [vmem:[#allocation11 + $0x130] sm:$0xff]
    %v1998 = vld [vmem:[#allocation11 + $0x138] sm:$0xff]
    %v1999 = vld [vmem:[#allocation11 + $0x140] sm:$0xff]
    %v2000 = vld [vmem:[#allocation11 + $0x148] sm:$0xff]
    %v2001 = vld [vmem:[#allocation11 + $0x150] sm:$0xff]
    %v2002 = vld [vmem:[#allocation11 + $0x158] sm:$0xff]
    %v2003 = vld [vmem:[#allocation11 + $0x160] sm:$0xff]
    %v2004 = vld [vmem:[#allocation11 + $0x168] sm:$0xff]
    %v2005 = vld [vmem:[#allocation11 + $0x170] sm:$0xff]
    %v2006 = vld [vmem:[#allocation11 + $0x178] sm:$0xff]
    %v2007 = vld [vmem:[#allocation11 + $0x180] sm:$0xff]
    %v2008 = vld [vmem:[#allocation11 + $0x188] sm:$0xff]
    %v2009 = vld [vmem:[#allocation11 + $0x190] sm:$0xff]
    %v2010 = vld [vmem:[#allocation11 + $0x198] sm:$0xff]
    %v2011 = vld [vmem:[#allocation11 + $0x1a0] sm:$0xff]
    %v2012 = vld [vmem:[#allocation11 + $0x1a8] sm:$0xff]
    %v2013 = vld [vmem:[#allocation11 + $0x1b0] sm:$0xff]
    %v2014 = vld [vmem:[#allocation11 + $0x1b8] sm:$0xff]
    %v2015 = vld [vmem:[#allocation11 + $0x1c0] sm:$0xff]
    %v2016 = vld [vmem:[#allocation11 + $0x1c8] sm:$0xff]
    %v2017 = vld [vmem:[#allocation11 + $0x1d0] sm:$0xff]
    %v2018 = vld [vmem:[#allocation11 + $0x1d8] sm:$0xff]
    %v2019 = vld [vmem:[#allocation11 + $0x1e0] sm:$0xff]
    %v2020 = vld [vmem:[#allocation11 + $0x1e8] sm:$0xff]
    %v2021 = vld [vmem:[#allocation11 + $0x1f0] sm:$0xff]
    %v2022 = vld [vmem:[#allocation11 + $0x1f8] sm:$0xff]
    %v2023 = vld [vmem:[#allocation11 + $0x200] sm:$0xff]
    %v2024 = vld [vmem:[#allocation11 + $0x208] sm:$0xff]
    %v2025 = vld [vmem:[#allocation11 + $0x210] sm:$0xff]
    %v2026 = vld [vmem:[#allocation11 + $0x218] sm:$0xff]
    %v2027 = vld [vmem:[#allocation11 + $0x220] sm:$0xff]
    %v2028 = vld [vmem:[#allocation11 + $0x228] sm:$0xff]
    %v2029 = vld [vmem:[#allocation11 + $0x230] sm:$0xff]
    %v2030 = vld [vmem:[#allocation11 + $0x238] sm:$0xff]
    %v2031 = vld [vmem:[#allocation11 + $0x240] sm:$0xff]
    %v2032 = vld [vmem:[#allocation11 + $0x248] sm:$0xff]
    %v2033 = vld [vmem:[#allocation11 + $0x250] sm:$0xff]
    %v2034 = vld [vmem:[#allocation11 + $0x258] sm:$0xff]
    %v2035 = vld [vmem:[#allocation11 + $0x260] sm:$0xff]
    %v2036 = vld [vmem:[#allocation11 + $0x268] sm:$0xff]
    %v2037 = vld [vmem:[#allocation11 + $0x270] sm:$0xff]
    %v2038 = vld [vmem:[#allocation11 + $0x278] sm:$0xff]
    %v2039 = vld [vmem:[#allocation11 + $0x280] sm:$0xff]
    %v2040 = vld [vmem:[#allocation11 + $0x288] sm:$0xff]
    %v2041 = vld [vmem:[#allocation11 + $0x290] sm:$0xff]
    %v2042 = vld [vmem:[#allocation11 + $0x298] sm:$0xff]
    %v2043 = vld [vmem:[#allocation11 + $0x2a0] sm:$0xff]
    %v2044 = vld [vmem:[#allocation11 + $0x2a8] sm:$0xff]
    %v2045 = vld [vmem:[#allocation11 + $0x2b0] sm:$0xff]
    %v2046 = vld [vmem:[#allocation11 + $0x2b8] sm:$0xff]
    %v2047 = vld [vmem:[#allocation11 + $0x2c0] sm:$0xff]
    %v2048 = vld [vmem:[#allocation11 + $0x2c8] sm:$0xff]
    %v2049 = vld [vmem:[#allocation11 + $0x2d0] sm:$0xff]
    %v2050 = vld [vmem:[#allocation11 + $0x2d8] sm:$0xff]
    %v2051 = vld [vmem:[#allocation11 + $0x2e0] sm:$0xff]
    %v2052 = vld [vmem:[#allocation11 + $0x2e8] sm:$0xff]
    %v2053 = vld [vmem:[#allocation11 + $0x2f0] sm:$0xff]
    %v2054 = vld [vmem:[#allocation11 + $0x2f8] sm:$0xff]
    %v2055 = vld [vmem:[#allocation11 + $0x300] sm:$0xff]
    %v2056 = vld [vmem:[#allocation11 + $0x308] sm:$0xff]
    %v2057 = vld [vmem:[#allocation11 + $0x310] sm:$0xff]
    %v2058 = vld [vmem:[#allocation11 + $0x318] sm:$0xff]
    %v2059 = vld [vmem:[#allocation11 + $0x320] sm:$0xff]
    %v2060 = vld [vmem:[#allocation11 + $0x328] sm:$0xff]
    %v2061 = vld [vmem:[#allocation11 + $0x330] sm:$0xff]
    %v2062 = vld [vmem:[#allocation11 + $0x338] sm:$0xff]
    %v2063 = vld [vmem:[#allocation11 + $0x340] sm:$0xff]
    %v2064 = vld [vmem:[#allocation11 + $0x348] sm:$0xff]
    %v2065 = vld [vmem:[#allocation11 + $0x350] sm:$0xff]
    %v2066 = vld [vmem:[#allocation11 + $0x358] sm:$0xff]
    %v2067 = vld [vmem:[#allocation11 + $0x360] sm:$0xff]
    %v2068 = vld [vmem:[#allocation11 + $0x368] sm:$0xff]
    %v2069 = vld [vmem:[#allocation11 + $0x370] sm:$0xff]
    %v2070 = vld [vmem:[#allocation11 + $0x378] sm:$0xff]
    %v2071 = vld [vmem:[#allocation11 + $0x380] sm:$0xff]
    %v2072 = vld [vmem:[#allocation11 + $0x388] sm:$0xff]
    %v2073 = vld [vmem:[#allocation11 + $0x390] sm:$0xff]
    %v2074 = vld [vmem:[#allocation11 + $0x398] sm:$0xff]
    %v2075 = vld [vmem:[#allocation11 + $0x3a0] sm:$0xff]
    %v2076 = vld [vmem:[#allocation11 + $0x3a8] sm:$0xff]
    %v2077 = vld [vmem:[#allocation11 + $0x3b0] sm:$0xff]
    %v2078 = vld [vmem:[#allocation11 + $0x3b8] sm:$0xff]
    %v2079 = vld [vmem:[#allocation11 + $0x3c0] sm:$0xff]
    %v2080 = vld [vmem:[#allocation11 + $0x3c8] sm:$0xff]
    %v2081 = vld [vmem:[#allocation11 + $0x3d0] sm:$0xff]
    %v2082 = vld [vmem:[#allocation11 + $0x3d8] sm:$0xff]
    %v2083 = vld [vmem:[#allocation11 + $0x3e0] sm:$0xff]
    %v2084 = vld [vmem:[#allocation11 + $0x3e8] sm:$0xff]
    %v2085 = vld [vmem:[#allocation11 + $0x3f0] sm:$0xff]
    %v2086 = vld [vmem:[#allocation11 + $0x3f8] sm:$0xff]
    %2087 = vmatprep.subr.mxu0 %v1960
    %2088 = vmatpush1.msra.mxu0 %v1959
    %2089 = vmatprep.subr.mxu0 %v1968
    %2090 = vmatpush1.msra.mxu0 %v1967
    %2091 = vmatprep.subr.mxu0 %v1976
    %2092 = vmatpush1.msra.mxu0 %v1975
    %2093 = vmatprep.subr.mxu0 %v1984
    %2094 = vmatpush1.msra.mxu0 %v1983
    %2095 = vmatprep.subr.mxu0 %v1992
    %2096 = vmatpush1.msra.mxu0 %v1991
    %2097 = vmatprep.subr.mxu0 %v2000
    %2098 = vmatpush1.msra.mxu0 %v1999
    %2099 = vmatprep.subr.mxu0 %v2008
    %2100 = vmatpush1.msra.mxu0 %v2007
    %2101 = vmatprep.subr.mxu0 %v2016
    %2102 = vmatpush1.msra.mxu0 %v2015
    %2103 = vmatprep.subr.mxu0 %v2024
    %2104 = vmatpush1.msra.mxu0 %v2023
    %2105 = vmatprep.subr.mxu0 %v2032
    %2106 = vmatpush1.msra.mxu0 %v2031
    %2107 = vmatprep.subr.mxu0 %v2040
    %2108 = vmatpush1.msra.mxu0 %v2039
    %2109 = vmatprep.subr.mxu0 %v2048
    %2110 = vmatpush1.msra.mxu0 %v2047
    %2111 = vmatprep.subr.mxu0 %v2056
    %2112 = vmatpush1.msra.mxu0 %v2055
    %2113 = vmatprep.subr.mxu0 %v2064
    %2114 = vmatpush1.msra.mxu0 %v2063
    %2115 = vmatprep.subr.mxu0 %v2072
    %2116 = vmatpush1.msra.mxu0 %v2071
    %2117 = vmatprep.subr.mxu0 %v2080
    %2118 = vmatpush1.msra.mxu0 %v2079
    %2119 = vmatprep.subr.mxu0 0.0
    %2120 = vmatpush1.msra.mxu0 0.0
    %2121 = vmatprep.subr.mxu0 0.0
    %2122 = vmatpush1.msra.mxu0 0.0
    %2123 = vmatprep.subr.mxu0 0.0
    %2124 = vmatpush1.msra.mxu0 0.0
    %2125 = vmatprep.subr.mxu0 0.0
    %2126 = vmatpush1.msra.mxu0 0.0
    %2127 = vmatprep.subr.mxu0 0.0
    %2128 = vmatpush1.msra.mxu0 0.0
    %2129 = vmatprep.subr.mxu0 0.0
    %2130 = vmatpush1.msra.mxu0 0.0
    %2131 = vmatprep.subr.mxu0 0.0
    %2132 = vmatpush1.msra.mxu0 0.0
    %2133 = vmatprep.subr.mxu0 0.0
    %2134 = vmatpush1.msra.mxu0 0.0
    %2135 = vmatprep.subr.mxu0 0.0
    %2136 = vmatpush1.msra.mxu0 0.0
    %2137 = vmatprep.subr.mxu0 0.0
    %2138 = vmatpush1.msra.mxu0 0.0
    %2139 = vmatprep.subr.mxu0 0.0
    %2140 = vmatpush1.msra.mxu0 0.0
    %2141 = vmatprep.subr.mxu0 0.0
    %2142 = vmatpush1.msra.mxu0 0.0
    %2143 = vmatprep.subr.mxu0 0.0
    %2144 = vmatpush1.msra.mxu0 0.0
    %2145 = vmatprep.subr.mxu0 0.0
    %2146 = vmatpush1.msra.mxu0 0.0
    %2147 = vmatprep.subr.mxu0 0.0
    %2148 = vmatpush1.msra.mxu0 0.0
    %2149 = vmatprep.subr.mxu0 0.0
    %2150 = vmatpush1.msra.mxu0 0.0
    %2151 = vmatprep.mubr.f32.mxu0 0.0
    %2152 = vmatmul.mubr.f32.gmra.mrb[0].mxu0 %v1956
    %v2153 = vpop.f32.mrb[0].mxu0
    %v2154 = vadd.f32 0.0, %v2153
    %v2155 = vpop.f32.mrb[0].mxu0
    %v2156 = vadd.f32 0.0, %v2155
    %2157 = vdwg.mxu0
    %2158 = vmatprep.subr.mxu0 %v1962
    %2159 = vmatpush1.msra.mxu0 %v1961
    %2160 = vmatprep.subr.mxu0 %v1970
    %2161 = vmatpush1.msra.mxu0 %v1969
    %2162 = vmatprep.subr.mxu0 %v1978
    %2163 = vmatpush1.msra.mxu0 %v1977
    %2164 = vmatprep.subr.mxu0 %v1986
    %2165 = vmatpush1.msra.mxu0 %v1985
    %2166 = vmatprep.subr.mxu0 %v1994
    %2167 = vmatpush1.msra.mxu0 %v1993
    %2168 = vmatprep.subr.mxu0 %v2002
    %2169 = vmatpush1.msra.mxu0 %v2001
    %2170 = vmatprep.subr.mxu0 %v2010
    %2171 = vmatpush1.msra.mxu0 %v2009
    %2172 = vmatprep.subr.mxu0 %v2018
    %2173 = vmatpush1.msra.mxu0 %v2017
    %2174 = vmatprep.subr.mxu0 %v2026
    %2175 = vmatpush1.msra.mxu0 %v2025
    %2176 = vmatprep.subr.mxu0 %v2034
    %2177 = vmatpush1.msra.mxu0 %v2033
    %2178 = vmatprep.subr.mxu0 %v2042
    %2179 = vmatpush1.msra.mxu0 %v2041
    %2180 = vmatprep.subr.mxu0 %v2050
    %2181 = vmatpush1.msra.mxu0 %v2049
    %2182 = vmatprep.subr.mxu0 %v2058
    %2183 = vmatpush1.msra.mxu0 %v2057
    %2184 = vmatprep.subr.mxu0 %v2066
    %2185 = vmatpush1.msra.mxu0 %v2065
    %2186 = vmatprep.subr.mxu0 %v2074
    %2187 = vmatpush1.msra.mxu0 %v2073
    %2188 = vmatprep.subr.mxu0 %v2082
    %2189 = vmatpush1.msra.mxu0 %v2081
    %2190 = vmatprep.subr.mxu0 0.0
    %2191 = vmatpush1.msra.mxu0 0.0
    %2192 = vmatprep.subr.mxu0 0.0
    %2193 = vmatpush1.msra.mxu0 0.0
    %2194 = vmatprep.subr.mxu0 0.0
    %2195 = vmatpush1.msra.mxu0 0.0
    %2196 = vmatprep.subr.mxu0 0.0
    %2197 = vmatpush1.msra.mxu0 0.0
    %2198 = vmatprep.subr.mxu0 0.0
    %2199 = vmatpush1.msra.mxu0 0.0
    %2200 = vmatprep.subr.mxu0 0.0
    %2201 = vmatpush1.msra.mxu0 0.0
    %2202 = vmatprep.subr.mxu0 0.0
    %2203 = vmatpush1.msra.mxu0 0.0
    %2204 = vmatprep.subr.mxu0 0.0
    %2205 = vmatpush1.msra.mxu0 0.0
    %2206 = vmatprep.subr.mxu0 0.0
    %2207 = vmatpush1.msra.mxu0 0.0
    %2208 = vmatprep.subr.mxu0 0.0
    %2209 = vmatpush1.msra.mxu0 0.0
    %2210 = vmatprep.subr.mxu0 0.0
    %2211 = vmatpush1.msra.mxu0 0.0
    %2212 = vmatprep.subr.mxu0 0.0
    %2213 = vmatpush1.msra.mxu0 0.0
    %2214 = vmatprep.subr.mxu0 0.0
    %2215 = vmatpush1.msra.mxu0 0.0
    %2216 = vmatprep.subr.mxu0 0.0
    %2217 = vmatpush1.msra.mxu0 0.0
    %2218 = vmatprep.subr.mxu0 0.0
    %2219 = vmatpush1.msra.mxu0 0.0
    %2220 = vmatprep.subr.mxu0 0.0
    %2221 = vmatpush1.msra.mxu0 0.0
    %2222 = vmatprep.mubr.f32.mxu0 0.0
    %2223 = vmatmul.mubr.f32.gmra.mrb[0].mxu0 %v1956
    %v2224 = vpop.f32.mrb[0].mxu0
    %v2225 = vadd.f32 0.0, %v2224
    %v2226 = vpop.f32.mrb[0].mxu0
    %v2227 = vadd.f32 0.0, %v2226
    %2228 = vdwg.mxu0
    %2229 = vmatprep.subr.mxu0 %v1964
    %2230 = vmatpush1.msra.mxu0 %v1963
    %2231 = vmatprep.subr.mxu0 %v1972
    %2232 = vmatpush1.msra.mxu0 %v1971
    %2233 = vmatprep.subr.mxu0 %v1980
    %2234 = vmatpush1.msra.mxu0 %v1979
    %2235 = vmatprep.subr.mxu0 %v1988
    %2236 = vmatpush1.msra.mxu0 %v1987
    %2237 = vmatprep.subr.mxu0 %v1996
    %2238 = vmatpush1.msra.mxu0 %v1995
    %2239 = vmatprep.subr.mxu0 %v2004
    %2240 = vmatpush1.msra.mxu0 %v2003
    %2241 = vmatprep.subr.mxu0 %v2012
    %2242 = vmatpush1.msra.mxu0 %v2011
    %2243 = vmatprep.subr.mxu0 %v2020
    %2244 = vmatpush1.msra.mxu0 %v2019
    %2245 = vmatprep.subr.mxu0 %v2028
    %2246 = vmatpush1.msra.mxu0 %v2027
    %2247 = vmatprep.subr.mxu0 %v2036
    %2248 = vmatpush1.msra.mxu0 %v2035
    %2249 = vmatprep.subr.mxu0 %v2044
    %2250 = vmatpush1.msra.mxu0 %v2043
    %2251 = vmatprep.subr.mxu0 %v2052
    %2252 = vmatpush1.msra.mxu0 %v2051
    %2253 = vmatprep.subr.mxu0 %v2060
    %2254 = vmatpush1.msra.mxu0 %v2059
    %2255 = vmatprep.subr.mxu0 %v2068
    %2256 = vmatpush1.msra.mxu0 %v2067
    %2257 = vmatprep.subr.mxu0 %v2076
    %2258 = vmatpush1.msra.mxu0 %v2075
    %2259 = vmatprep.subr.mxu0 %v2084
    %2260 = vmatpush1.msra.mxu0 %v2083
    %2261 = vmatprep.subr.mxu0 0.0
    %2262 = vmatpush1.msra.mxu0 0.0
    %2263 = vmatprep.subr.mxu0 0.0
    %2264 = vmatpush1.msra.mxu0 0.0
    %2265 = vmatprep.subr.mxu0 0.0
    %2266 = vmatpush1.msra.mxu0 0.0
    %2267 = vmatprep.subr.mxu0 0.0
    %2268 = vmatpush1.msra.mxu0 0.0
    %2269 = vmatprep.subr.mxu0 0.0
    %2270 = vmatpush1.msra.mxu0 0.0
    %2271 = vmatprep.subr.mxu0 0.0
    %2272 = vmatpush1.msra.mxu0 0.0
    %2273 = vmatprep.subr.mxu0 0.0
    %2274 = vmatpush1.msra.mxu0 0.0
    %2275 = vmatprep.subr.mxu0 0.0
    %2276 = vmatpush1.msra.mxu0 0.0
    %2277 = vmatprep.subr.mxu0 0.0
    %2278 = vmatpush1.msra.mxu0 0.0
    %2279 = vmatprep.subr.mxu0 0.0
    %2280 = vmatpush1.msra.mxu0 0.0
    %2281 = vmatprep.subr.mxu0 0.0
    %2282 = vmatpush1.msra.mxu0 0.0
    %2283 = vmatprep.subr.mxu0 0.0
    %2284 = vmatpush1.msra.mxu0 0.0
    %2285 = vmatprep.subr.mxu0 0.0
    %2286 = vmatpush1.msra.mxu0 0.0
    %2287 = vmatprep.subr.mxu0 0.0
    %2288 = vmatpush1.msra.mxu0 0.0
    %2289 = vmatprep.subr.mxu0 0.0
    %2290 = vmatpush1.msra.mxu0 0.0
    %2291 = vmatprep.subr.mxu0 0.0
    %2292 = vmatpush1.msra.mxu0 0.0
    %2293 = vmatprep.mubr.f32.mxu0 0.0
    %2294 = vmatmul.mubr.f32.gmra.mrb[0].mxu0 %v1956
    %v2295 = vpop.f32.mrb[0].mxu0
    %v2296 = vadd.f32 0.0, %v2295
    %v2297 = vpop.f32.mrb[0].mxu0
    %v2298 = vadd.f32 0.0, %v2297
    %2299 = vdwg.mxu0
    %2300 = vmatprep.subr.mxu0 %v1966
    %2301 = vmatpush1.msra.mxu0 %v1965
    %2302 = vmatprep.subr.mxu0 %v1974
    %2303 = vmatpush1.msra.mxu0 %v1973
    %2304 = vmatprep.subr.mxu0 %v1982
    %2305 = vmatpush1.msra.mxu0 %v1981
    %2306 = vmatprep.subr.mxu0 %v1990
    %2307 = vmatpush1.msra.mxu0 %v1989
    %2308 = vmatprep.subr.mxu0 %v1998
    %2309 = vmatpush1.msra.mxu0 %v1997
    %2310 = vmatprep.subr.mxu0 %v2006
    %2311 = vmatpush1.msra.mxu0 %v2005
    %2312 = vmatprep.subr.mxu0 %v2014
    %2313 = vmatpush1.msra.mxu0 %v2013
    %2314 = vmatprep.subr.mxu0 %v2022
    %2315 = vmatpush1.msra.mxu0 %v2021
    %2316 = vmatprep.subr.mxu0 %v2030
    %2317 = vmatpush1.msra.mxu0 %v2029
    %2318 = vmatprep.subr.mxu0 %v2038
    %2319 = vmatpush1.msra.mxu0 %v2037
    %2320 = vmatprep.subr.mxu0 %v2046
    %2321 = vmatpush1.msra.mxu0 %v2045
    %2322 = vmatprep.subr.mxu0 %v2054
    %2323 = vmatpush1.msra.mxu0 %v2053
    %2324 = vmatprep.subr.mxu0 %v2062
    %2325 = vmatpush1.msra.mxu0 %v2061
    %2326 = vmatprep.subr.mxu0 %v2070
    %2327 = vmatpush1.msra.mxu0 %v2069
    %2328 = vmatprep.subr.mxu0 %v2078
    %2329 = vmatpush1.msra.mxu0 %v2077
    %2330 = vmatprep.subr.mxu0 %v2086
    %2331 = vmatpush1.msra.mxu0 %v2085
    %2332 = vmatprep.subr.mxu0 0.0
    %2333 = vmatpush1.msra.mxu0 0.0
    %2334 = vmatprep.subr.mxu0 0.0
    %2335 = vmatpush1.msra.mxu0 0.0
    %2336 = vmatprep.subr.mxu0 0.0
    %2337 = vmatpush1.msra.mxu0 0.0
    %2338 = vmatprep.subr.mxu0 0.0
    %2339 = vmatpush1.msra.mxu0 0.0
    %2340 = vmatprep.subr.mxu0 0.0
    %2341 = vmatpush1.msra.mxu0 0.0
    %2342 = vmatprep.subr.mxu0 0.0
    %2343 = vmatpush1.msra.mxu0 0.0
    %2344 = vmatprep.subr.mxu0 0.0
    %2345 = vmatpush1.msra.mxu0 0.0
    %2346 = vmatprep.subr.mxu0 0.0
    %2347 = vmatpush1.msra.mxu0 0.0
    %2348 = vmatprep.subr.mxu0 0.0
    %2349 = vmatpush1.msra.mxu0 0.0
    %2350 = vmatprep.subr.mxu0 0.0
    %2351 = vmatpush1.msra.mxu0 0.0
    %2352 = vmatprep.subr.mxu0 0.0
    %2353 = vmatpush1.msra.mxu0 0.0
    %2354 = vmatprep.subr.mxu0 0.0
    %2355 = vmatpush1.msra.mxu0 0.0
    %2356 = vmatprep.subr.mxu0 0.0
    %2357 = vmatpush1.msra.mxu0 0.0
    %2358 = vmatprep.subr.mxu0 0.0
    %2359 = vmatpush1.msra.mxu0 0.0
    %2360 = vmatprep.subr.mxu0 0.0
    %2361 = vmatpush1.msra.mxu0 0.0
    %2362 = vmatprep.subr.mxu0 0.0
    %2363 = vmatpush1.msra.mxu0 0.0
    %2364 = vmatprep.mubr.f32.mxu0 0.0
    %2365 = vmatmul.mubr.f32.gmra.mrb[0].mxu0 %v1956
    %v2366 = vpop.f32.mrb[0].mxu0
    %v2367 = vadd.f32 0.0, %v2366
    %v2368 = vpop.f32.mrb[0].mxu0
    %v2369 = vadd.f32 0.0, %v2368
    %2370 = vdwg.mxu0
    %v2371 = vsel %vm1266, %v2154, 0.0
    %v2372 = vrot.slane %v2371, 4
    %v2373 = vadd.f32 %v2371, %v2372
    %v2374 = vrot.slane %v2373, 2
    %v2375 = vadd.f32 %v2373, %v2374
    %v2376 = vrot.slane %v2375, 1
    %v2377 = vadd.f32 %v2375, %v2376
    %v2378 = vsel %vm1266, %v2156, 0.0
    %v2379 = vrot.slane %v2378, 4
    %v2380 = vadd.f32 %v2378, %v2379
    %v2381 = vrot.slane %v2380, 2
    %v2382 = vadd.f32 %v2380, %v2381
    %v2383 = vrot.slane %v2382, 1
    %v2384 = vadd.f32 %v2382, %v2383
    %v2385 = vsel %vm1266, %v2225, 0.0
    %v2386 = vrot.slane %v2385, 4
    %v2387 = vadd.f32 %v2385, %v2386
    %v2388 = vrot.slane %v2387, 2
    %v2389 = vadd.f32 %v2387, %v2388
    %v2390 = vrot.slane %v2389, 1
    %v2391 = vadd.f32 %v2389, %v2390
    %v2392 = vsel %vm1266, %v2227, 0.0
    %v2393 = vrot.slane %v2392, 4
    %v2394 = vadd.f32 %v2392, %v2393
    %v2395 = vrot.slane %v2394, 2
    %v2396 = vadd.f32 %v2394, %v2395
    %v2397 = vrot.slane %v2396, 1
    %v2398 = vadd.f32 %v2396, %v2397
    %v2399 = vsel %vm1266, %v2296, 0.0
    %v2400 = vrot.slane %v2399, 4
    %v2401 = vadd.f32 %v2399, %v2400
    %v2402 = vrot.slane %v2401, 2
    %v2403 = vadd.f32 %v2401, %v2402
    %v2404 = vrot.slane %v2403, 1
    %v2405 = vadd.f32 %v2403, %v2404
    %v2406 = vsel %vm1266, %v2298, 0.0
    %v2407 = vrot.slane %v2406, 4
    %v2408 = vadd.f32 %v2406, %v2407
    %v2409 = vrot.slane %v2408, 2
    %v2410 = vadd.f32 %v2408, %v2409
    %v2411 = vrot.slane %v2410, 1
    %v2412 = vadd.f32 %v2410, %v2411
    %v2413 = vsel %vm1266, %v2367, 0.0
    %v2414 = vrot.slane %v2413, 4
    %v2415 = vadd.f32 %v2413, %v2414
    %v2416 = vrot.slane %v2415, 2
    %v2417 = vadd.f32 %v2415, %v2416
    %v2418 = vrot.slane %v2417, 1
    %v2419 = vadd.f32 %v2417, %v2418
    %v2420 = vsel %vm1266, %v2369, 0.0
    %v2421 = vrot.slane %v2420, 4
    %v2422 = vadd.f32 %v2420, %v2421
    %v2423 = vrot.slane %v2422, 2
    %v2424 = vadd.f32 %v2422, %v2423
    %v2425 = vrot.slane %v2424, 1
    %v2426 = vadd.f32 %v2424, %v2425
    %v2427 = vmul.f32 %v2377, %v1323
    %v2428 = vmul.f32 %v2384, %v1323
    %v2429 = vmul.f32 %v2391, %v1323
    %v2430 = vmul.f32 %v2398, %v1323
    %v2431 = vmul.f32 %v2405, %v1323
    %v2432 = vmul.f32 %v2412, %v1323
    %v2433 = vmul.f32 %v2419, %v1323
    %v2434 = vmul.f32 %v2426, %v1323
    %v2435 = vsub.f32 %v2154, %v2427
    %v2436 = vsub.f32 %v2156, %v2428
    %v2437 = vsub.f32 %v2225, %v2429
    %v2438 = vsub.f32 %v2227, %v2430
    %v2439 = vsub.f32 %v2296, %v2431
    %v2440 = vsub.f32 %v2298, %v2432
    %v2441 = vsub.f32 %v2367, %v2433
    %v2442 = vsub.f32 %v2369, %v2434
    %v2443 = vmul.f32 %v2435, %v2435
    %v2444 = vmul.f32 %v2436, %v2436
    %v2445 = vmul.f32 %v2437, %v2437
    %v2446 = vmul.f32 %v2438, %v2438
    %v2447 = vmul.f32 %v2439, %v2439
    %v2448 = vmul.f32 %v2440, %v2440
    %v2449 = vmul.f32 %v2441, %v2441
    %v2450 = vmul.f32 %v2442, %v2442
    %v2451 = vsel %vm1266, %v2443, 0.0
    %v2452 = vrot.slane %v2451, 4
    %v2453 = vadd.f32 %v2451, %v2452
    %v2454 = vrot.slane %v2453, 2
    %v2455 = vadd.f32 %v2453, %v2454
    %v2456 = vrot.slane %v2455, 1
    %v2457 = vadd.f32 %v2455, %v2456
    %v2458 = vsel %vm1266, %v2444, 0.0
    %v2459 = vrot.slane %v2458, 4
    %v2460 = vadd.f32 %v2458, %v2459
    %v2461 = vrot.slane %v2460, 2
    %v2462 = vadd.f32 %v2460, %v2461
    %v2463 = vrot.slane %v2462, 1
    %v2464 = vadd.f32 %v2462, %v2463
    %v2465 = vsel %vm1266, %v2445, 0.0
    %v2466 = vrot.slane %v2465, 4
    %v2467 = vadd.f32 %v2465, %v2466
    %v2468 = vrot.slane %v2467, 2
    %v2469 = vadd.f32 %v2467, %v2468
    %v2470 = vrot.slane %v2469, 1
    %v2471 = vadd.f32 %v2469, %v2470
    %v2472 = vsel %vm1266, %v2446, 0.0
    %v2473 = vrot.slane %v2472, 4
    %v2474 = vadd.f32 %v2472, %v2473
    %v2475 = vrot.slane %v2474, 2
    %v2476 = vadd.f32 %v2474, %v2475
    %v2477 = vrot.slane %v2476, 1
    %v2478 = vadd.f32 %v2476, %v2477
    %v2479 = vsel %vm1266, %v2447, 0.0
    %v2480 = vrot.slane %v2479, 4
    %v2481 = vadd.f32 %v2479, %v2480
    %v2482 = vrot.slane %v2481, 2
    %v2483 = vadd.f32 %v2481, %v2482
    %v2484 = vrot.slane %v2483, 1
    %v2485 = vadd.f32 %v2483, %v2484
    %v2486 = vsel %vm1266, %v2448, 0.0
    %v2487 = vrot.slane %v2486, 4
    %v2488 = vadd.f32 %v2486, %v2487
    %v2489 = vrot.slane %v2488, 2
    %v2490 = vadd.f32 %v2488, %v2489
    %v2491 = vrot.slane %v2490, 1
    %v2492 = vadd.f32 %v2490, %v2491
    %v2493 = vsel %vm1266, %v2449, 0.0
    %v2494 = vrot.slane %v2493, 4
    %v2495 = vadd.f32 %v2493, %v2494
    %v2496 = vrot.slane %v2495, 2
    %v2497 = vadd.f32 %v2495, %v2496
    %v2498 = vrot.slane %v2497, 1
    %v2499 = vadd.f32 %v2497, %v2498
    %v2500 = vsel %vm1266, %v2450, 0.0
    %v2501 = vrot.slane %v2500, 4
    %v2502 = vadd.f32 %v2500, %v2501
    %v2503 = vrot.slane %v2502, 2
    %v2504 = vadd.f32 %v2502, %v2503
    %v2505 = vrot.slane %v2504, 1
    %v2506 = vadd.f32 %v2504, %v2505
    %v2507 = vmul.f32 %v2457, %v1323
    %v2508 = vmul.f32 %v2464, %v1323
    %v2509 = vmul.f32 %v2471, %v1323
    %v2510 = vmul.f32 %v2478, %v1323
    %v2511 = vmul.f32 %v2485, %v1323
    %v2512 = vmul.f32 %v2492, %v1323
    %v2513 = vmul.f32 %v2499, %v1323
    %v2514 = vmul.f32 %v2506, %v1323
    %v2515 = vadd.f32 %v2507, 1e-05
    %v2516 = vadd.f32 %v2508, 1e-05
    %v2517 = vadd.f32 %v2509, 1e-05
    %v2518 = vadd.f32 %v2510, 1e-05
    %v2519 = vadd.f32 %v2511, 1e-05
    %v2520 = vadd.f32 %v2512, 1e-05
    %v2521 = vadd.f32 %v2513, 1e-05
    %v2522 = vadd.f32 %v2514, 1e-05
    %v2523 = vrsqrt.pop %v2515
    %v2524 = vrsqrt.pop %v2516
    %v2525 = vrsqrt.pop %v2517
    %v2526 = vrsqrt.pop %v2518
    %v2527 = vrsqrt.pop %v2519
    %v2528 = vrsqrt.pop %v2520
    %v2529 = vrsqrt.pop %v2521
    %v2530 = vrsqrt.pop %v2522
    %v2531 = vmul.f32 %v2435, %v2523
    %v2532 = vmul.f32 %v2436, %v2524
    %v2533 = vmul.f32 %v2437, %v2525
    %v2534 = vmul.f32 %v2438, %v2526
    %v2535 = vmul.f32 %v2439, %v2527
    %v2536 = vmul.f32 %v2440, %v2528
    %v2537 = vmul.f32 %v2441, %v2529
    %v2538 = vmul.f32 %v2442, %v2530
    %v2539 = vld [vmem:[#allocation13] sm:$0xff]
    %v2541 = vlaneseq
    %v2542 = vshrl.u32 %v2541, 7
    %v2543 = vsub.s32 0, %v2542
    %v2544 = vrot.slane %v2539, %v2543
    %v2545 = vlaneseq
    %v2546 = vshrl.u32 %v2545, 7
    %v2547 = vsub.s32 1, %v2546
    %v2548 = vrot.slane %v2539, %v2547
    %v2549 = vlaneseq
    %v2550 = vshrl.u32 %v2549, 7
    %v2551 = vsub.s32 2, %v2550
    %v2552 = vrot.slane %v2539, %v2551
    %v2553 = vlaneseq
    %v2554 = vshrl.u32 %v2553, 7
    %v2555 = vsub.s32 3, %v2554
    %v2556 = vrot.slane %v2539, %v2555
    %v2557 = vlaneseq
    %v2558 = vshrl.u32 %v2557, 7
    %v2559 = vsub.s32 4, %v2558
    %v2560 = vrot.slane %v2539, %v2559
    %v2561 = vlaneseq
    %v2562 = vshrl.u32 %v2561, 7
    %v2563 = vsub.s32 5, %v2562
    %v2564 = vrot.slane %v2539, %v2563
    %v2565 = vlaneseq
    %v2566 = vshrl.u32 %v2565, 7
    %v2567 = vsub.s32 6, %v2566
    %v2568 = vrot.slane %v2539, %v2567
    %v2569 = vlaneseq
    %v2570 = vshrl.u32 %v2569, 7
    %v2571 = vsub.s32 7, %v2570
    %v2572 = vrot.slane %v2539, %v2571
    %v2581 = vmul.f32 %v2531, %v2544
    %v2582 = vmul.f32 %v2532, %v2548
    %v2583 = vmul.f32 %v2533, %v2552
    %v2584 = vmul.f32 %v2534, %v2556
    %v2585 = vmul.f32 %v2535, %v2560
    %v2586 = vmul.f32 %v2536, %v2564
    %v2587 = vmul.f32 %v2537, %v2568
    %v2588 = vmul.f32 %v2538, %v2572
    %v2589 = vld [vmem:[#allocation14] sm:$0xff]
    %v2591 = vlaneseq
    %v2592 = vshrl.u32 %v2591, 7
    %v2593 = vsub.s32 0, %v2592
    %v2594 = vrot.slane %v2589, %v2593
    %v2595 = vlaneseq
    %v2596 = vshrl.u32 %v2595, 7
    %v2597 = vsub.s32 1, %v2596
    %v2598 = vrot.slane %v2589, %v2597
    %v2599 = vlaneseq
    %v2600 = vshrl.u32 %v2599, 7
    %v2601 = vsub.s32 2, %v2600
    %v2602 = vrot.slane %v2589, %v2601
    %v2603 = vlaneseq
    %v2604 = vshrl.u32 %v2603, 7
    %v2605 = vsub.s32 3, %v2604
    %v2606 = vrot.slane %v2589, %v2605
    %v2607 = vlaneseq
    %v2608 = vshrl.u32 %v2607, 7
    %v2609 = vsub.s32 4, %v2608
    %v2610 = vrot.slane %v2589, %v2609
    %v2611 = vlaneseq
    %v2612 = vshrl.u32 %v2611, 7
    %v2613 = vsub.s32 5, %v2612
    %v2614 = vrot.slane %v2589, %v2613
    %v2615 = vlaneseq
    %v2616 = vshrl.u32 %v2615, 7
    %v2617 = vsub.s32 6, %v2616
    %v2618 = vrot.slane %v2589, %v2617
    %v2619 = vlaneseq
    %v2620 = vshrl.u32 %v2619, 7
    %v2621 = vsub.s32 7, %v2620
    %v2622 = vrot.slane %v2589, %v2621
    %v2631 = vadd.f32 %v2581, %v2594
    %v2632 = vadd.f32 %v2582, %v2598
    %v2633 = vadd.f32 %v2583, %v2602
    %v2634 = vadd.f32 %v2584, %v2606
    %v2635 = vadd.f32 %v2585, %v2610
    %v2636 = vadd.f32 %v2586, %v2614
    %v2637 = vadd.f32 %v2587, %v2618
    %v2638 = vadd.f32 %v2588, %v2622
    %v2639 = vmax.f32 %v2631, 0.0
    %v2640 = vmax.f32 %v2632, 0.0
    %v2641 = vmax.f32 %v2633, 0.0
    %v2642 = vmax.f32 %v2634, 0.0
    %v2643 = vmax.f32 %v2635, 0.0
    %v2644 = vmax.f32 %v2636, 0.0
    %v2645 = vmax.f32 %v2637, 0.0
    %v2646 = vmax.f32 %v2638, 0.0
    %v2647 = vld [vmem:[#allocation16] sm:$0xff]
    %v2648 = vld [vmem:[#allocation16 + $0x8] sm:$0xff]
    %v2649 = vld [vmem:[#allocation16 + $0x10] sm:$0xff]
    %v2650 = vld [vmem:[#allocation16 + $0x18] sm:$0xff]
    %v2651 = vld [vmem:[#allocation16 + $0x20] sm:$0xff]
    %v2652 = vld [vmem:[#allocation16 + $0x28] sm:$0xff]
    %v2653 = vld [vmem:[#allocation16 + $0x30] sm:$0xff]
    %v2654 = vld [vmem:[#allocation16 + $0x38] sm:$0xff]
    %v2655 = vld [vmem:[#allocation16 + $0x40] sm:$0xff]
    %v2656 = vld [vmem:[#allocation16 + $0x48] sm:$0xff]
    %v2657 = vld [vmem:[#allocation16 + $0x50] sm:$0xff]
    %v2658 = vld [vmem:[#allocation16 + $0x58] sm:$0xff]
    %v2659 = vld [vmem:[#allocation16 + $0x60] sm:$0xff]
    %v2660 = vld [vmem:[#allocation16 + $0x68] sm:$0xff]
    %v2661 = vld [vmem:[#allocation16 + $0x70] sm:$0xff]
    %v2662 = vld [vmem:[#allocation16 + $0x78] sm:$0xff]
    %v2663 = vld [vmem:[#allocation16 + $0x80] sm:$0xff]
    %v2664 = vld [vmem:[#allocation16 + $0x88] sm:$0xff]
    %v2665 = vld [vmem:[#allocation16 + $0x90] sm:$0xff]
    %v2666 = vld [vmem:[#allocation16 + $0x98] sm:$0xff]
    %v2667 = vld [vmem:[#allocation16 + $0xa0] sm:$0xff]
    %v2668 = vld [vmem:[#allocation16 + $0xa8] sm:$0xff]
    %v2669 = vld [vmem:[#allocation16 + $0xb0] sm:$0xff]
    %v2670 = vld [vmem:[#allocation16 + $0xb8] sm:$0xff]
    %v2671 = vld [vmem:[#allocation16 + $0xc0] sm:$0xff]
    %v2672 = vld [vmem:[#allocation16 + $0xc8] sm:$0xff]
    %v2673 = vld [vmem:[#allocation16 + $0xd0] sm:$0xff]
    %v2674 = vld [vmem:[#allocation16 + $0xd8] sm:$0xff]
    %v2675 = vld [vmem:[#allocation16 + $0xe0] sm:$0xff]
    %v2676 = vld [vmem:[#allocation16 + $0xe8] sm:$0xff]
    %v2677 = vld [vmem:[#allocation16 + $0xf0] sm:$0xff]
    %v2678 = vld [vmem:[#allocation16 + $0xf8] sm:$0xff]
    %v2679 = vld [vmem:[#allocation16 + $0x100] sm:$0xff]
    %v2680 = vld [vmem:[#allocation16 + $0x108] sm:$0xff]
    %v2681 = vld [vmem:[#allocation16 + $0x110] sm:$0xff]
    %v2682 = vld [vmem:[#allocation16 + $0x118] sm:$0xff]
    %v2683 = vld [vmem:[#allocation16 + $0x120] sm:$0xff]
    %v2684 = vld [vmem:[#allocation16 + $0x128] sm:$0xff]
    %v2685 = vld [vmem:[#allocation16 + $0x130] sm:$0xff]
    %v2686 = vld [vmem:[#allocation16 + $0x138] sm:$0xff]
    %v2687 = vld [vmem:[#allocation16 + $0x140] sm:$0xff]
    %v2688 = vld [vmem:[#allocation16 + $0x148] sm:$0xff]
    %v2689 = vld [vmem:[#allocation16 + $0x150] sm:$0xff]
    %v2690 = vld [vmem:[#allocation16 + $0x158] sm:$0xff]
    %v2691 = vld [vmem:[#allocation16 + $0x160] sm:$0xff]
    %v2692 = vld [vmem:[#allocation16 + $0x168] sm:$0xff]
    %v2693 = vld [vmem:[#allocation16 + $0x170] sm:$0xff]
    %v2694 = vld [vmem:[#allocation16 + $0x178] sm:$0xff]
    %v2695 = vld [vmem:[#allocation16 + $0x180] sm:$0xff]
    %v2696 = vld [vmem:[#allocation16 + $0x188] sm:$0xff]
    %v2697 = vld [vmem:[#allocation16 + $0x190] sm:$0xff]
    %v2698 = vld [vmem:[#allocation16 + $0x198] sm:$0xff]
    %v2699 = vld [vmem:[#allocation16 + $0x1a0] sm:$0xff]
    %v2700 = vld [vmem:[#allocation16 + $0x1a8] sm:$0xff]
    %v2701 = vld [vmem:[#allocation16 + $0x1b0] sm:$0xff]
    %v2702 = vld [vmem:[#allocation16 + $0x1b8] sm:$0xff]
    %v2703 = vld [vmem:[#allocation16 + $0x1c0] sm:$0xff]
    %v2704 = vld [vmem:[#allocation16 + $0x1c8] sm:$0xff]
    %v2705 = vld [vmem:[#allocation16 + $0x1d0] sm:$0xff]
    %v2706 = vld [vmem:[#allocation16 + $0x1d8] sm:$0xff]
    %v2707 = vld [vmem:[#allocation16 + $0x1e0] sm:$0xff]
    %v2708 = vld [vmem:[#allocation16 + $0x1e8] sm:$0xff]
    %v2709 = vld [vmem:[#allocation16 + $0x1f0] sm:$0xff]
    %v2710 = vld [vmem:[#allocation16 + $0x1f8] sm:$0xff]
    %v2711 = vld [vmem:[#allocation16 + $0x200] sm:$0xff]
    %v2712 = vld [vmem:[#allocation16 + $0x208] sm:$0xff]
    %v2713 = vld [vmem:[#allocation16 + $0x210] sm:$0xff]
    %v2714 = vld [vmem:[#allocation16 + $0x218] sm:$0xff]
    %v2715 = vld [vmem:[#allocation16 + $0x220] sm:$0xff]
    %v2716 = vld [vmem:[#allocation16 + $0x228] sm:$0xff]
    %v2717 = vld [vmem:[#allocation16 + $0x230] sm:$0xff]
    %v2718 = vld [vmem:[#allocation16 + $0x238] sm:$0xff]
    %v2719 = vld [vmem:[#allocation16 + $0x240] sm:$0xff]
    %v2720 = vld [vmem:[#allocation16 + $0x248] sm:$0xff]
    %v2721 = vld [vmem:[#allocation16 + $0x250] sm:$0xff]
    %v2722 = vld [vmem:[#allocation16 + $0x258] sm:$0xff]
    %v2723 = vld [vmem:[#allocation16 + $0x260] sm:$0xff]
    %v2724 = vld [vmem:[#allocation16 + $0x268] sm:$0xff]
    %v2725 = vld [vmem:[#allocation16 + $0x270] sm:$0xff]
    %v2726 = vld [vmem:[#allocation16 + $0x278] sm:$0xff]
    %v2727 = vld [vmem:[#allocation16 + $0x280] sm:$0xff]
    %v2728 = vld [vmem:[#allocation16 + $0x288] sm:$0xff]
    %v2729 = vld [vmem:[#allocation16 + $0x290] sm:$0xff]
    %v2730 = vld [vmem:[#allocation16 + $0x298] sm:$0xff]
    %v2731 = vld [vmem:[#allocation16 + $0x2a0] sm:$0xff]
    %v2732 = vld [vmem:[#allocation16 + $0x2a8] sm:$0xff]
    %v2733 = vld [vmem:[#allocation16 + $0x2b0] sm:$0xff]
    %v2734 = vld [vmem:[#allocation16 + $0x2b8] sm:$0xff]
    %v2735 = vld [vmem:[#allocation16 + $0x2c0] sm:$0xff]
    %v2736 = vld [vmem:[#allocation16 + $0x2c8] sm:$0xff]
    %v2737 = vld [vmem:[#allocation16 + $0x2d0] sm:$0xff]
    %v2738 = vld [vmem:[#allocation16 + $0x2d8] sm:$0xff]
    %v2739 = vld [vmem:[#allocation16 + $0x2e0] sm:$0xff]
    %v2740 = vld [vmem:[#allocation16 + $0x2e8] sm:$0xff]
    %v2741 = vld [vmem:[#allocation16 + $0x2f0] sm:$0xff]
    %v2742 = vld [vmem:[#allocation16 + $0x2f8] sm:$0xff]
    %v2743 = vld [vmem:[#allocation16 + $0x300] sm:$0xff]
    %v2744 = vld [vmem:[#allocation16 + $0x308] sm:$0xff]
    %v2745 = vld [vmem:[#allocation16 + $0x310] sm:$0xff]
    %v2746 = vld [vmem:[#allocation16 + $0x318] sm:$0xff]
    %v2747 = vld [vmem:[#allocation16 + $0x320] sm:$0xff]
    %v2748 = vld [vmem:[#allocation16 + $0x328] sm:$0xff]
    %v2749 = vld [vmem:[#allocation16 + $0x330] sm:$0xff]
    %v2750 = vld [vmem:[#allocation16 + $0x338] sm:$0xff]
    %v2751 = vld [vmem:[#allocation16 + $0x340] sm:$0xff]
    %v2752 = vld [vmem:[#allocation16 + $0x348] sm:$0xff]
    %v2753 = vld [vmem:[#allocation16 + $0x350] sm:$0xff]
    %v2754 = vld [vmem:[#allocation16 + $0x358] sm:$0xff]
    %v2755 = vld [vmem:[#allocation16 + $0x360] sm:$0xff]
    %v2756 = vld [vmem:[#allocation16 + $0x368] sm:$0xff]
    %v2757 = vld [vmem:[#allocation16 + $0x370] sm:$0xff]
    %v2758 = vld [vmem:[#allocation16 + $0x378] sm:$0xff]
    %v2759 = vld [vmem:[#allocation16 + $0x380] sm:$0xff]
    %v2760 = vld [vmem:[#allocation16 + $0x388] sm:$0xff]
    %v2761 = vld [vmem:[#allocation16 + $0x390] sm:$0xff]
    %v2762 = vld [vmem:[#allocation16 + $0x398] sm:$0xff]
    %v2763 = vld [vmem:[#allocation16 + $0x3a0] sm:$0xff]
    %v2764 = vld [vmem:[#allocation16 + $0x3a8] sm:$0xff]
    %v2765 = vld [vmem:[#allocation16 + $0x3b0] sm:$0xff]
    %v2766 = vld [vmem:[#allocation16 + $0x3b8] sm:$0xff]
    %v2767 = vld [vmem:[#allocation16 + $0x3c0] sm:$0xff]
    %v2768 = vld [vmem:[#allocation16 + $0x3c8] sm:$0xff]
    %v2769 = vld [vmem:[#allocation16 + $0x3d0] sm:$0xff]
    %v2770 = vld [vmem:[#allocation16 + $0x3d8] sm:$0xff]
    %v2771 = vld [vmem:[#allocation16 + $0x3e0] sm:$0xff]
    %v2772 = vld [vmem:[#allocation16 + $0x3e8] sm:$0xff]
    %v2773 = vld [vmem:[#allocation16 + $0x3f0] sm:$0xff]
    %v2774 = vld [vmem:[#allocation16 + $0x3f8] sm:$0xff]
    %v2775 = vld [vmem:[#allocation17] sm:$0x1]
    %v2777 = vlaneseq
    %v2778 = vshrl.u32 %v2777, 7
    %v2779 = vsub.s32 0, %v2778
    %v2780 = vrot.slane %v2775, %v2779
    %2782 = vmatprep.subr.mxu0 0.0
    %2783 = vmatpush1.msra.mxu0 %v2647
    %2784 = vmatprep.subr.mxu0 0.0
    %2785 = vmatpush1.msra.mxu0 %v2648
    %2786 = vmatprep.subr.mxu0 0.0
    %2787 = vmatpush1.msra.mxu0 %v2649
    %2788 = vmatprep.subr.mxu0 0.0
    %2789 = vmatpush1.msra.mxu0 %v2650
    %2790 = vmatprep.subr.mxu0 0.0
    %2791 = vmatpush1.msra.mxu0 %v2651
    %2792 = vmatprep.subr.mxu0 0.0
    %2793 = vmatpush1.msra.mxu0 %v2652
    %2794 = vmatprep.subr.mxu0 0.0
    %2795 = vmatpush1.msra.mxu0 %v2653
    %2796 = vmatprep.subr.mxu0 0.0
    %2797 = vmatpush1.msra.mxu0 %v2654
    %2798 = vmatprep.subr.mxu0 0.0
    %2799 = vmatpush1.msra.mxu0 %v2655
    %2800 = vmatprep.subr.mxu0 0.0
    %2801 = vmatpush1.msra.mxu0 %v2656
    %2802 = vmatprep.subr.mxu0 0.0
    %2803 = vmatpush1.msra.mxu0 %v2657
    %2804 = vmatprep.subr.mxu0 0.0
    %2805 = vmatpush1.msra.mxu0 %v2658
    %2806 = vmatprep.subr.mxu0 0.0
    %2807 = vmatpush1.msra.mxu0 %v2659
    %2808 = vmatprep.subr.mxu0 0.0
    %2809 = vmatpush1.msra.mxu0 %v2660
    %2810 = vmatprep.subr.mxu0 0.0
    %2811 = vmatpush1.msra.mxu0 %v2661
    %2812 = vmatprep.subr.mxu0 0.0
    %2813 = vmatpush1.msra.mxu0 %v2662
    %2814 = vmatprep.subr.mxu0 0.0
    %2815 = vmatpush1.msra.mxu0 %v2663
    %2816 = vmatprep.subr.mxu0 0.0
    %2817 = vmatpush1.msra.mxu0 %v2664
    %2818 = vmatprep.subr.mxu0 0.0
    %2819 = vmatpush1.msra.mxu0 %v2665
    %2820 = vmatprep.subr.mxu0 0.0
    %2821 = vmatpush1.msra.mxu0 %v2666
    %2822 = vmatprep.subr.mxu0 0.0
    %2823 = vmatpush1.msra.mxu0 %v2667
    %2824 = vmatprep.subr.mxu0 0.0
    %2825 = vmatpush1.msra.mxu0 %v2668
    %2826 = vmatprep.subr.mxu0 0.0
    %2827 = vmatpush1.msra.mxu0 %v2669
    %2828 = vmatprep.subr.mxu0 0.0
    %2829 = vmatpush1.msra.mxu0 %v2670
    %2830 = vmatprep.subr.mxu0 0.0
    %2831 = vmatpush1.msra.mxu0 %v2671
    %2832 = vmatprep.subr.mxu0 0.0
    %2833 = vmatpush1.msra.mxu0 %v2672
    %2834 = vmatprep.subr.mxu0 0.0
    %2835 = vmatpush1.msra.mxu0 %v2673
    %2836 = vmatprep.subr.mxu0 0.0
    %2837 = vmatpush1.msra.mxu0 %v2674
    %2838 = vmatprep.subr.mxu0 0.0
    %2839 = vmatpush1.msra.mxu0 %v2675
    %2840 = vmatprep.subr.mxu0 0.0
    %2841 = vmatpush1.msra.mxu0 %v2676
    %2842 = vmatprep.subr.mxu0 0.0
    %2843 = vmatpush1.msra.mxu0 %v2677
    %2844 = vmatprep.subr.mxu0 0.0
    %2845 = vmatpush1.msra.mxu0 %v2678
    %2846 = vmatprep.mubr.f32.mxu0 %v2640
    %2847 = vmatmul.mubr.f32.gmra.mrb[0].mxu0 %v2639
    %v2848 = vpop.f32.mrb[0].mxu0
    %v2849 = vadd.f32 %v2780, %v2848
    %v2850 = vpop.f32.mrb[0].mxu0
    %2851 = vdwg.mxu0
    %2852 = vmatprep.subr.mxu0 0.0
    %2853 = vmatpush1.msra.mxu0 %v2679
    %2854 = vmatprep.subr.mxu0 0.0
    %2855 = vmatpush1.msra.mxu0 %v2680
    %2856 = vmatprep.subr.mxu0 0.0
    %2857 = vmatpush1.msra.mxu0 %v2681
    %2858 = vmatprep.subr.mxu0 0.0
    %2859 = vmatpush1.msra.mxu0 %v2682
    %2860 = vmatprep.subr.mxu0 0.0
    %2861 = vmatpush1.msra.mxu0 %v2683
    %2862 = vmatprep.subr.mxu0 0.0
    %2863 = vmatpush1.msra.mxu0 %v2684
    %2864 = vmatprep.subr.mxu0 0.0
    %2865 = vmatpush1.msra.mxu0 %v2685
    %2866 = vmatprep.subr.mxu0 0.0
    %2867 = vmatpush1.msra.mxu0 %v2686
    %2868 = vmatprep.subr.mxu0 0.0
    %2869 = vmatpush1.msra.mxu0 %v2687
    %2870 = vmatprep.subr.mxu0 0.0
    %2871 = vmatpush1.msra.mxu0 %v2688
    %2872 = vmatprep.subr.mxu0 0.0
    %2873 = vmatpush1.msra.mxu0 %v2689
    %2874 = vmatprep.subr.mxu0 0.0
    %2875 = vmatpush1.msra.mxu0 %v2690
    %2876 = vmatprep.subr.mxu0 0.0
    %2877 = vmatpush1.msra.mxu0 %v2691
    %2878 = vmatprep.subr.mxu0 0.0
    %2879 = vmatpush1.msra.mxu0 %v2692
    %2880 = vmatprep.subr.mxu0 0.0
    %2881 = vmatpush1.msra.mxu0 %v2693
    %2882 = vmatprep.subr.mxu0 0.0
    %2883 = vmatpush1.msra.mxu0 %v2694
    %2884 = vmatprep.subr.mxu0 0.0
    %2885 = vmatpush1.msra.mxu0 %v2695
    %2886 = vmatprep.subr.mxu0 0.0
    %2887 = vmatpush1.msra.mxu0 %v2696
    %2888 = vmatprep.subr.mxu0 0.0
    %2889 = vmatpush1.msra.mxu0 %v2697
    %2890 = vmatprep.subr.mxu0 0.0
    %2891 = vmatpush1.msra.mxu0 %v2698
    %2892 = vmatprep.subr.mxu0 0.0
    %2893 = vmatpush1.msra.mxu0 %v2699
    %2894 = vmatprep.subr.mxu0 0.0
    %2895 = vmatpush1.msra.mxu0 %v2700
    %2896 = vmatprep.subr.mxu0 0.0
    %2897 = vmatpush1.msra.mxu0 %v2701
    %2898 = vmatprep.subr.mxu0 0.0
    %2899 = vmatpush1.msra.mxu0 %v2702
    %2900 = vmatprep.subr.mxu0 0.0
    %2901 = vmatpush1.msra.mxu0 %v2703
    %2902 = vmatprep.subr.mxu0 0.0
    %2903 = vmatpush1.msra.mxu0 %v2704
    %2904 = vmatprep.subr.mxu0 0.0
    %2905 = vmatpush1.msra.mxu0 %v2705
    %2906 = vmatprep.subr.mxu0 0.0
    %2907 = vmatpush1.msra.mxu0 %v2706
    %2908 = vmatprep.subr.mxu0 0.0
    %2909 = vmatpush1.msra.mxu0 %v2707
    %2910 = vmatprep.subr.mxu0 0.0
    %2911 = vmatpush1.msra.mxu0 %v2708
    %2912 = vmatprep.subr.mxu0 0.0
    %2913 = vmatpush1.msra.mxu0 %v2709
    %2914 = vmatprep.subr.mxu0 0.0
    %2915 = vmatpush1.msra.mxu0 %v2710
    %2916 = vmatprep.mubr.f32.mxu0 %v2642
    %2917 = vmatmul.mubr.f32.gmra.mrb[0].mxu0 %v2641
    %v2918 = vpop.f32.mrb[0].mxu0
    %v2919 = vadd.f32 %v2849, %v2918
    %v2920 = vpop.f32.mrb[0].mxu0
    %2921 = vdwg.mxu0
    %2922 = vmatprep.subr.mxu0 0.0
    %2923 = vmatpush1.msra.mxu0 %v2711
    %2924 = vmatprep.subr.mxu0 0.0
    %2925 = vmatpush1.msra.mxu0 %v2712
    %2926 = vmatprep.subr.mxu0 0.0
    %2927 = vmatpush1.msra.mxu0 %v2713
    %2928 = vmatprep.subr.mxu0 0.0
    %2929 = vmatpush1.msra.mxu0 %v2714
    %2930 = vmatprep.subr.mxu0 0.0
    %2931 = vmatpush1.msra.mxu0 %v2715
    %2932 = vmatprep.subr.mxu0 0.0
    %2933 = vmatpush1.msra.mxu0 %v2716
    %2934 = vmatprep.subr.mxu0 0.0
    %2935 = vmatpush1.msra.mxu0 %v2717
    %2936 = vmatprep.subr.mxu0 0.0
    %2937 = vmatpush1.msra.mxu0 %v2718
    %2938 = vmatprep.subr.mxu0 0.0
    %2939 = vmatpush1.msra.mxu0 %v2719
    %2940 = vmatprep.subr.mxu0 0.0
    %2941 = vmatpush1.msra.mxu0 %v2720
    %2942 = vmatprep.subr.mxu0 0.0
    %2943 = vmatpush1.msra.mxu0 %v2721
    %2944 = vmatprep.subr.mxu0 0.0
    %2945 = vmatpush1.msra.mxu0 %v2722
    %2946 = vmatprep.subr.mxu0 0.0
    %2947 = vmatpush1.msra.mxu0 %v2723
    %2948 = vmatprep.subr.mxu0 0.0
    %2949 = vmatpush1.msra.mxu0 %v2724
    %2950 = vmatprep.subr.mxu0 0.0
    %2951 = vmatpush1.msra.mxu0 %v2725
    %2952 = vmatprep.subr.mxu0 0.0
    %2953 = vmatpush1.msra.mxu0 %v2726
    %2954 = vmatprep.subr.mxu0 0.0
    %2955 = vmatpush1.msra.mxu0 %v2727
    %2956 = vmatprep.subr.mxu0 0.0
    %2957 = vmatpush1.msra.mxu0 %v2728
    %2958 = vmatprep.subr.mxu0 0.0
    %2959 = vmatpush1.msra.mxu0 %v2729
    %2960 = vmatprep.subr.mxu0 0.0
    %2961 = vmatpush1.msra.mxu0 %v2730
    %2962 = vmatprep.subr.mxu0 0.0
    %2963 = vmatpush1.msra.mxu0 %v2731
    %2964 = vmatprep.subr.mxu0 0.0
    %2965 = vmatpush1.msra.mxu0 %v2732
    %2966 = vmatprep.subr.mxu0 0.0
    %2967 = vmatpush1.msra.mxu0 %v2733
    %2968 = vmatprep.subr.mxu0 0.0
    %2969 = vmatpush1.msra.mxu0 %v2734
    %2970 = vmatprep.subr.mxu0 0.0
    %2971 = vmatpush1.msra.mxu0 %v2735
    %2972 = vmatprep.subr.mxu0 0.0
    %2973 = vmatpush1.msra.mxu0 %v2736
    %2974 = vmatprep.subr.mxu0 0.0
    %2975 = vmatpush1.msra.mxu0 %v2737
    %2976 = vmatprep.subr.mxu0 0.0
    %2977 = vmatpush1.msra.mxu0 %v2738
    %2978 = vmatprep.subr.mxu0 0.0
    %2979 = vmatpush1.msra.mxu0 %v2739
    %2980 = vmatprep.subr.mxu0 0.0
    %2981 = vmatpush1.msra.mxu0 %v2740
    %2982 = vmatprep.subr.mxu0 0.0
    %2983 = vmatpush1.msra.mxu0 %v2741
    %2984 = vmatprep.subr.mxu0 0.0
    %2985 = vmatpush1.msra.mxu0 %v2742
    %2986 = vmatprep.mubr.f32.mxu0 %v2644
    %2987 = vmatmul.mubr.f32.gmra.mrb[0].mxu0 %v2643
    %v2988 = vpop.f32.mrb[0].mxu0
    %v2989 = vadd.f32 %v2919, %v2988
    %v2990 = vpop.f32.mrb[0].mxu0
    %2991 = vdwg.mxu0
    %2992 = vmatprep.subr.mxu0 0.0
    %2993 = vmatpush1.msra.mxu0 %v2743
    %2994 = vmatprep.subr.mxu0 0.0
    %2995 = vmatpush1.msra.mxu0 %v2744
    %2996 = vmatprep.subr.mxu0 0.0
    %2997 = vmatpush1.msra.mxu0 %v2745
    %2998 = vmatprep.subr.mxu0 0.0
    %2999 = vmatpush1.msra.mxu0 %v2746
    %3000 = vmatprep.subr.mxu0 0.0
    %3001 = vmatpush1.msra.mxu0 %v2747
    %3002 = vmatprep.subr.mxu0 0.0
    %3003 = vmatpush1.msra.mxu0 %v2748
    %3004 = vmatprep.subr.mxu0 0.0
    %3005 = vmatpush1.msra.mxu0 %v2749
    %3006 = vmatprep.subr.mxu0 0.0
    %3007 = vmatpush1.msra.mxu0 %v2750
    %3008 = vmatprep.subr.mxu0 0.0
    %3009 = vmatpush1.msra.mxu0 %v2751
    %3010 = vmatprep.subr.mxu0 0.0
    %3011 = vmatpush1.msra.mxu0 %v2752
    %3012 = vmatprep.subr.mxu0 0.0
    %3013 = vmatpush1.msra.mxu0 %v2753
    %3014 = vmatprep.subr.mxu0 0.0
    %3015 = vmatpush1.msra.mxu0 %v2754
    %3016 = vmatprep.subr.mxu0 0.0
    %3017 = vmatpush1.msra.mxu0 %v2755
    %3018 = vmatprep.subr.mxu0 0.0
    %3019 = vmatpush1.msra.mxu0 %v2756
    %3020 = vmatprep.subr.mxu0 0.0
    %3021 = vmatpush1.msra.mxu0 %v2757
    %3022 = vmatprep.subr.mxu0 0.0
    %3023 = vmatpush1.msra.mxu0 %v2758
    %3024 = vmatprep.subr.mxu0 0.0
    %3025 = vmatpush1.msra.mxu0 %v2759
    %3026 = vmatprep.subr.mxu0 0.0
    %3027 = vmatpush1.msra.mxu0 %v2760
    %3028 = vmatprep.subr.mxu0 0.0
    %3029 = vmatpush1.msra.mxu0 %v2761
    %3030 = vmatprep.subr.mxu0 0.0
    %3031 = vmatpush1.msra.mxu0 %v2762
    %3032 = vmatprep.subr.mxu0 0.0
    %3033 = vmatpush1.msra.mxu0 %v2763
    %3034 = vmatprep.subr.mxu0 0.0
    %3035 = vmatpush1.msra.mxu0 %v2764
    %3036 = vmatprep.subr.mxu0 0.0
    %3037 = vmatpush1.msra.mxu0 %v2765
    %3038 = vmatprep.subr.mxu0 0.0
    %3039 = vmatpush1.msra.mxu0 %v2766
    %3040 = vmatprep.subr.mxu0 0.0
    %3041 = vmatpush1.msra.mxu0 %v2767
    %3042 = vmatprep.subr.mxu0 0.0
    %3043 = vmatpush1.msra.mxu0 %v2768
    %3044 = vmatprep.subr.mxu0 0.0
    %3045 = vmatpush1.msra.mxu0 %v2769
    %3046 = vmatprep.subr.mxu0 0.0
    %3047 = vmatpush1.msra.mxu0 %v2770
    %3048 = vmatprep.subr.mxu0 0.0
    %3049 = vmatpush1.msra.mxu0 %v2771
    %3050 = vmatprep.subr.mxu0 0.0
    %3051 = vmatpush1.msra.mxu0 %v2772
    %3052 = vmatprep.subr.mxu0 0.0
    %3053 = vmatpush1.msra.mxu0 %v2773
    %3054 = vmatprep.subr.mxu0 0.0
    %3055 = vmatpush1.msra.mxu0 %v2774
    %3056 = vmatprep.mubr.f32.mxu0 %v2646
    %3057 = vmatmul.mubr.f32.gmra.mrb[0].mxu0 %v2645
    %v3058 = vpop.f32.mrb[0].mxu0
    %v3059 = vadd.f32 %v2989, %v3058
    %v3060 = vpop.f32.mrb[0].mxu0
    %3061 = vdwg.mxu0
    %3062 = vst [vmem:[#allocation19] sm:$0x3] %v3059
    // Predicated region
    $region86: #{byol_forward.3} parent=1 // pred_check
      _
    $region87: #{byol_forward.3} parent=1 // pred_check_branch
      %3064 = sbr.rel (0) target = $region89
    $region88: #{byol_forward.3} parent=1 // pred_region
      %s3066 = ssub.s32 32, 32
      %3067 = vsyncadd [#allocation4], %s3066
      %s3069 = sshll.u32 [#allocation19], 4
      %s3070 = int_to_ptr.vmem [resolvable:$true] %s3069
      %3072 = dma.vmem_to_hbm [thread:$0]  %s3070, 32, %s11, [#allocation4]
    $region89: #{byol_forward.3} parent=1 // pred_fallthru
      _
    // Predicated region
    $region90: #{byol_forward.3} parent=1 // pred_check
      _
    $region91: #{byol_forward.3} parent=1 // pred_check_branch
      %3074 = sbr.rel (0) target = $region93
    $region92: #{byol_forward.3} parent=1 // pred_region
      %3075 = dma.done [#allocation4], 32
    $region93: #{byol_forward.3} parent=1 // pred_fallthru
      _
    %3076 = vsyncpa [#allocation3], 1
    %3077 = vsyncpa [#allocation6], 1
    %3078 = vsyncpa [#allocation9], 1
    %3079 = vsyncpa [#allocation12], 1
    %3080 = vsyncpa [#allocation15], 1
    %3081 = vsyncpa [#allocation18], 1
    %3082 = vsyncpa [#allocation4], 1

</llo_original>
